<compile_context>
chip_gen: v7x
topology: tpu7x:2x2x1
jax: 0.10.0
libtpu: 0.0.40
codegen_flags: <defaults>
</compile_context>

<pallas_src>
import jax
import jax.numpy as jnp
from jax.experimental import pallas as pl
from jax.experimental.pallas import tpu as pltpu

IN_DIM = 28 * 28      # 784
H1_DIM = 512
H2_DIM = 256
TM_MAX = 1024         # max batch rows per grid step
NEG_SLOPE = 0.2


def _round_up(n, m):
    return ((n + m - 1) // m) * m


def _choose_tile_m(batch):
    """Batch-tile rows per grid step.

    - always a multiple of 8 (f32 sublane tile)
    - small batches: one tile sized to the batch (overhead is negligible)
    - large batches: tiles of up to 1024 rows, with >= 2 grid steps so the
      'parallel' batch axis can be split across v7x's two TensorCores.
    """
    b8 = _round_up(batch, 8)
    if b8 <= 512:
        return b8
    if b8 <= 2 * TM_MAX:
        return _round_up(pl.cdiv(b8, 2), 128)   # exactly two lane-aligned tiles
    return TM_MAX


def _disc_kernel(x_ref, w1_ref, b1_ref, w2_ref, b2_ref, w3_ref, b3_ref, o_ref):
    # x arrives f32 straight from HBM; cast to bf16 on the VPU (hidden under MXU).
    x = x_ref[...].astype(jnp.bfloat16)                               # (TM, 784)

    # Linear(784 -> 512) + LeakyReLU(0.2); bf16 MXU matmul, f32 accumulate.
    h1 = jnp.dot(x, w1_ref[...], preferred_element_type=jnp.float32) + b1_ref[...]
    h1 = jnp.where(h1 > 0, h1, NEG_SLOPE * h1)                        # (TM, 512) f32

    # Linear(512 -> 256) + LeakyReLU(0.2)
    h2 = jnp.dot(h1.astype(jnp.bfloat16), w2_ref[...],
                 preferred_element_type=jnp.float32) + b2_ref[...]
    h2 = jnp.where(h2 > 0, h2, NEG_SLOPE * h2)                        # (TM, 256) f32

    # Linear(256 -> 1): contract over the feature axis of BOTH operands so the
    # result comes out lane-major as (8, TM); rows 1..7 of w3 are zero padding.
    logits8 = jax.lax.dot_general(
        w3_ref[...], h2.astype(jnp.bfloat16),
        dimension_numbers=(((1,), (1,)), ((), ())),
        preferred_element_type=jnp.float32)                           # (8, TM)
    logits = logits8[0:1, :] + b3_ref[...]                            # (1, TM)

    # Sigmoid via a single EUP tanh (numerically robust, no exp overflow).
    o_ref[...] = 0.5 * jnp.tanh(0.5 * logits) + 0.5                   # (1, TM)


def prepare_params(params):
    """One-time conversion of f32 params into kernel-ready operands.

    Hoisted out of the per-call path so the forward pass launches no cast
    kernels. Weights are stored (in_features, out_features)."""
    w1, b1, w2, b2, w3, b3 = params
    w3_pad = jnp.zeros((8, H2_DIM), jnp.float32).at[0].set(w3.reshape(H2_DIM))
    return (
        w1.astype(jnp.bfloat16),                     # (784, 512)
        b1.reshape(1, H1_DIM).astype(jnp.float32),   # (1, 512)
        w2.astype(jnp.bfloat16),                     # (512, 256)
        b2.reshape(1, H2_DIM).astype(jnp.float32),   # (1, 256)
        w3_pad.astype(jnp.bfloat16),                 # (8, 256), rows 1..7 zero
        b3.reshape(1, 1).astype(jnp.float32),        # (1, 1)
    )


def discriminator_forward(img, kparams):
    """img: (B, 1, 28, 28) float32 NCHW; kparams: output of prepare_params.
    Returns (B, 1) float32 probabilities."""
    w1, b1, w2, b2, w3, b3 = kparams
    B = img.shape[0]
    x = img.reshape(B, IN_DIM)                       # free reshape, stays f32

    tm = _choose_tile_m(B)
    n_blocks = pl.cdiv(B, tm)
    b_pad = n_blocks * tm

    flops = 2 * b_pad * (IN_DIM * H1_DIM + H1_DIM * H2_DIM + 8 * H2_DIM)
    bytes_accessed = (
        B * IN_DIM * 4                               # x read once as f32
        + w1.size * 2 + w2.size * 2 + w3.size * 2    # resident bf16 weights
        + (b1.size + b2.size + b3.size) * 4
        + b_pad * 4                                  # lane-dense f32 output
    )

    grid_spec = pltpu.PrefetchScalarGridSpec(
        num_scalar_prefetch=0,
        grid=(n_blocks,),
        in_specs=[
            pl.BlockSpec((tm, IN_DIM), lambda i: (i, 0)),      # x tile (f32)
            pl.BlockSpec((IN_DIM, H1_DIM), lambda i: (0, 0)),  # w1 (resident)
            pl.BlockSpec((1, H1_DIM), lambda i: (0, 0)),       # b1
            pl.BlockSpec((H1_DIM, H2_DIM), lambda i: (0, 0)),  # w2 (resident)
            pl.BlockSpec((1, H2_DIM), lambda i: (0, 0)),       # b2
            pl.BlockSpec((8, H2_DIM), lambda i: (0, 0)),       # w3 (row 0 real)
            pl.BlockSpec((1, 1), lambda i: (0, 0)),            # b3
        ],
        out_specs=pl.BlockSpec((1, tm), lambda i: (0, i)),     # lane-dense out
    )

    out_row = pl.pallas_call(
        _disc_kernel,
        out_shape=jax.ShapeDtypeStruct((1, b_pad), jnp.float32),
        grid_spec=grid_spec,
        compiler_params=pltpu.CompilerParams(
            dimension_semantics=("parallel",),
            vmem_limit_bytes=32 << 20,
        ),
        cost_estimate=pl.CostEstimate(
            flops=flops,
            transcendentals=b_pad,                   # one tanh per row
            bytes_accessed=bytes_accessed,
        ),
    )(x, w1, b1, w2, b2, w3, b3)

    return out_row[0, :B, None]                      # (B, 1)


def init_params(key):
    """Deterministic init matching torch.nn.Linear default (uniform ±1/sqrt(fan_in)).
    Weights stored transposed: (in_features, out_features)."""
    dims = [(IN_DIM, H1_DIM), (H1_DIM, H2_DIM), (H2_DIM, 1)]
    params = []
    for i, (fan_in, fan_out) in enumerate(dims):
        kw, kb = jax.random.split(jax.random.fold_in(key, i))
        bound = 1.0 / jnp.sqrt(jnp.float32(fan_in))
        w = jax.random.uniform(kw, (fan_in, fan_out), jnp.float32, -bound, bound)
        b = jax.random.uniform(kb, (1, fan_out), jnp.float32, -bound, bound)
        params.extend([w, b])
    return tuple(params)


def _reference_forward(img, params):
    """Pure-JAX reference using the same bf16-matmul / f32-accumulate recipe."""
    w1, b1, w2, b2, w3, b3 = params
    x = img.reshape(img.shape[0], -1).astype(jnp.bfloat16)
    h1 = jnp.dot(x, w1.astype(jnp.bfloat16),
                 preferred_element_type=jnp.float32) + b1
    h1 = jnp.where(h1 > 0, h1, NEG_SLOPE * h1)
    h2 = jnp.dot(h1.astype(jnp.bfloat16), w2.astype(jnp.bfloat16),
                 preferred_element_type=jnp.float32) + b2
    h2 = jnp.where(h2 > 0, h2, NEG_SLOPE * h2)
    h3 = jnp.dot(h2.astype(jnp.bfloat16), w3.astype(jnp.bfloat16),
                 preferred_element_type=jnp.float32) + b3
    return jax.nn.sigmoid(h3)


if __name__ == "__main__":
    key = jax.random.PRNGKey(0)
    k_img, k_par = jax.random.split(key)

    B = 128  # one lane-aligned batch tile; larger batches split across >=2 tiles
    img = jax.random.normal(k_img, (B, 1, 28, 28), dtype=jnp.float32)  # NCHW
    params = init_params(k_par)
    kparams = prepare_params(params)      # one-time cast/pack, outside forward

    fwd = jax.jit(discriminator_forward)
    out = jax.block_until_ready(fwd(img, kparams))

    ref = _reference_forward(img, params)
    assert out.shape == (B, 1), out.shape
    assert bool(jnp.all(jnp.isfinite(out))), "non-finite outputs"
    assert jnp.allclose(out, ref, atol=5e-3, rtol=5e-3), "mismatch vs reference"

    print("KERNEL_OK")
</pallas_src>

<mosaic_0001>
module attributes {stable_mosaic.version = 11 : i64} {
  func.func @_disc_kernel(%arg0: i32, %arg1: memref<128x784xf32, #tpu.memory_space<vmem>>, %arg2: memref<784x512xbf16, #tpu.memory_space<vmem>>, %arg3: memref<1x512xf32, #tpu.memory_space<vmem>>, %arg4: memref<512x256xbf16, #tpu.memory_space<vmem>>, %arg5: memref<1x256xf32, #tpu.memory_space<vmem>>, %arg6: memref<8x256xbf16, #tpu.memory_space<vmem>>, %arg7: memref<1x1xf32, #tpu.memory_space<vmem>>, %arg8: memref<1x128xf32, #tpu.memory_space<vmem>>) attributes {dimension_semantics = [#tpu.dimension_semantics<parallel>], iteration_bounds = array<i64: 1>, scalar_prefetch = 0 : i64, scratch_operands = 0 : i64, tpu.core_type = #tpu.core_type<tc>, window_params = [{transform_indices = @transform_0, window_bounds = array<i64: 128, 784>}, {pipeline_mode = #tpu.pipeline_mode<synchronous>, transform_indices = @transform_1, window_bounds = array<i64: 784, 512>}, {pipeline_mode = #tpu.pipeline_mode<synchronous>, transform_indices = @transform_2, window_bounds = array<i64: 1, 512>}, {pipeline_mode = #tpu.pipeline_mode<synchronous>, transform_indices = @transform_3, window_bounds = array<i64: 512, 256>}, {pipeline_mode = #tpu.pipeline_mode<synchronous>, transform_indices = @transform_4, window_bounds = array<i64: 1, 256>}, {pipeline_mode = #tpu.pipeline_mode<synchronous>, transform_indices = @transform_5, window_bounds = array<i64: 8, 256>}, {pipeline_mode = #tpu.pipeline_mode<synchronous>, transform_indices = @transform_6, window_bounds = array<i64: 1, 1>}, {transform_indices = @transform_7, window_bounds = array<i64: 1, 128>}]} {
    %c0 = arith.constant 0 : index
    %c0_0 = arith.constant 0 : index
    %0 = vector.load %arg1[%c0, %c0_0] : memref<128x784xf32, #tpu.memory_space<vmem>>, vector<128x784xf32>
    %1 = arith.truncf %0 : vector<128x784xf32> to vector<128x784xbf16>
    %c0_1 = arith.constant 0 : index
    %c0_2 = arith.constant 0 : index
    %2 = vector.load %arg2[%c0_1, %c0_2] : memref<784x512xbf16, #tpu.memory_space<vmem>>, vector<784x512xbf16>
    %cst = arith.constant dense<0.000000e+00> : vector<128x512xf32>
    %3 = tpu.matmul %1, %2, %cst {dimension_numbers = #tpu.dot_dimension_numbers<[1], [0], [0], [1], [0, 0, 1, 1], [], []>} : vector<128x784xbf16>, vector<784x512xbf16>, vector<128x512xf32> -> vector<128x512xf32>
    %c0_3 = arith.constant 0 : index
    %c0_4 = arith.constant 0 : index
    %4 = vector.load %arg3[%c0_3, %c0_4] : memref<1x512xf32, #tpu.memory_space<vmem>>, vector<1x512xf32>
    %5 = vector.broadcast %4 : vector<1x512xf32> to vector<128x512xf32>
    %6 = arith.addf %3, %5 : vector<128x512xf32>
    %cst_5 = arith.constant 0.000000e+00 : f32
    %7 = vector.broadcast %cst_5 : f32 to vector<128x512xf32>
    %8 = arith.cmpf ogt, %6, %7 : vector<128x512xf32>
    %cst_6 = arith.constant 2.000000e-01 : f32
    %9 = vector.broadcast %cst_6 : f32 to vector<128x512xf32>
    %10 = arith.mulf %9, %6 : vector<128x512xf32>
    %11 = arith.select %8, %6, %10 : vector<128x512xi1>, vector<128x512xf32>
    %12 = arith.truncf %11 : vector<128x512xf32> to vector<128x512xbf16>
    %c0_7 = arith.constant 0 : index
    %c0_8 = arith.constant 0 : index
    %13 = vector.load %arg4[%c0_7, %c0_8] : memref<512x256xbf16, #tpu.memory_space<vmem>>, vector<512x256xbf16>
    %cst_9 = arith.constant dense<0.000000e+00> : vector<128x256xf32>
    %14 = tpu.matmul %12, %13, %cst_9 {dimension_numbers = #tpu.dot_dimension_numbers<[1], [0], [0], [1], [0, 0, 1, 1], [], []>} : vector<128x512xbf16>, vector<512x256xbf16>, vector<128x256xf32> -> vector<128x256xf32>
    %c0_10 = arith.constant 0 : index
    %c0_11 = arith.constant 0 : index
    %15 = vector.load %arg5[%c0_10, %c0_11] : memref<1x256xf32, #tpu.memory_space<vmem>>, vector<1x256xf32>
    %16 = vector.broadcast %15 : vector<1x256xf32> to vector<128x256xf32>
    %17 = arith.addf %14, %16 : vector<128x256xf32>
    %cst_12 = arith.constant 0.000000e+00 : f32
    %18 = vector.broadcast %cst_12 : f32 to vector<128x256xf32>
    %19 = arith.cmpf ogt, %17, %18 : vector<128x256xf32>
    %cst_13 = arith.constant 2.000000e-01 : f32
    %20 = vector.broadcast %cst_13 : f32 to vector<128x256xf32>
    %21 = arith.mulf %20, %17 : vector<128x256xf32>
    %22 = arith.select %19, %17, %21 : vector<128x256xi1>, vector<128x256xf32>
    %c0_14 = arith.constant 0 : index
    %c0_15 = arith.constant 0 : index
    %23 = vector.load %arg6[%c0_14, %c0_15] : memref<8x256xbf16, #tpu.memory_space<vmem>>, vector<8x256xbf16>
    %24 = arith.truncf %22 : vector<128x256xf32> to vector<128x256xbf16>
    %cst_16 = arith.constant dense<0.000000e+00> : vector<8x128xf32>
    %25 = tpu.matmul %23, %24, %cst_16 {dimension_numbers = #tpu.dot_dimension_numbers<[1], [1], [0], [0], [0, 0, 1, 0], [], []>} : vector<8x256xbf16>, vector<128x256xbf16>, vector<8x128xf32> -> vector<8x128xf32>
    %26 = vector.extract_strided_slice %25 {offsets = [0, 0], sizes = [1, 128], strides = [1, 1]} : vector<8x128xf32> to vector<1x128xf32>
    %c0_17 = arith.constant 0 : index
    %c0_18 = arith.constant 0 : index
    %27 = vector.load %arg7[%c0_17, %c0_18] : memref<1x1xf32, #tpu.memory_space<vmem>>, vector<1x1xf32>
    %28 = vector.broadcast %27 : vector<1x1xf32> to vector<1x128xf32>
    %29 = arith.addf %26, %28 : vector<1x128xf32>
    %cst_19 = arith.constant 5.000000e-01 : f32
    %30 = vector.broadcast %cst_19 : f32 to vector<1x128xf32>
    %31 = arith.mulf %30, %29 : vector<1x128xf32>
    %32 = math.tanh %31 : vector<1x128xf32>
    %cst_20 = arith.constant 5.000000e-01 : f32
    %33 = vector.broadcast %cst_20 : f32 to vector<1x128xf32>
    %34 = arith.mulf %33, %32 : vector<1x128xf32>
    %cst_21 = arith.constant 5.000000e-01 : f32
    %35 = vector.broadcast %cst_21 : f32 to vector<1x128xf32>
    %36 = arith.addf %34, %35 : vector<1x128xf32>
    %c0_22 = arith.constant 0 : index
    %c0_23 = arith.constant 0 : index
    %37 = vector.load %arg8[%c0_22, %c0_23] : memref<1x128xf32, #tpu.memory_space<vmem>>, vector<1x128xf32>
    tpu.vector_store %arg8[%c0_22, %c0_23], %36 {strides = array<i32>} : memref<1x128xf32, #tpu.memory_space<vmem>>, vector<1x128xf32>,
    return
  }
  func.func @transform_0(%arg0: i32) -> (i32, i32) {
    %c0_i32 = arith.constant 0 : i32
    %c0_i32_0 = arith.constant 0 : i32
    return %arg0, %c0_i32 : i32, i32
  }
  func.func @transform_1(%arg0: i32) -> (i32, i32) {
    %c0_i32 = arith.constant 0 : i32
    %c0_i32_0 = arith.constant 0 : i32
    %c0_i32_1 = arith.constant 0 : i32
    return %c0_i32, %c0_i32_0 : i32, i32
  }
  func.func @transform_2(%arg0: i32) -> (i32, i32) {
    %c0_i32 = arith.constant 0 : i32
    %c0_i32_0 = arith.constant 0 : i32
    %c0_i32_1 = arith.constant 0 : i32
    return %c0_i32, %c0_i32_0 : i32, i32
  }
  func.func @transform_3(%arg0: i32) -> (i32, i32) {
    %c0_i32 = arith.constant 0 : i32
    %c0_i32_0 = arith.constant 0 : i32
    %c0_i32_1 = arith.constant 0 : i32
    return %c0_i32, %c0_i32_0 : i32, i32
  }
  func.func @transform_4(%arg0: i32) -> (i32, i32) {
    %c0_i32 = arith.constant 0 : i32
    %c0_i32_0 = arith.constant 0 : i32
    %c0_i32_1 = arith.constant 0 : i32
    return %c0_i32, %c0_i32_0 : i32, i32
  }
  func.func @transform_5(%arg0: i32) -> (i32, i32) {
    %c0_i32 = arith.constant 0 : i32
    %c0_i32_0 = arith.constant 0 : i32
    %c0_i32_1 = arith.constant 0 : i32
    return %c0_i32, %c0_i32_0 : i32, i32
  }
  func.func @transform_6(%arg0: i32) -> (i32, i32) {
    %c0_i32 = arith.constant 0 : i32
    %c0_i32_0 = arith.constant 0 : i32
    %c0_i32_1 = arith.constant 0 : i32
    return %c0_i32, %c0_i32_0 : i32, i32
  }
  func.func @transform_7(%arg0: i32) -> (i32, i32) {
    %c0_i32 = arith.constant 0 : i32
    %c0_i32_0 = arith.constant 0 : i32
    return %c0_i32, %arg0 : i32, i32
  }
}

</mosaic_0001>

<llo_original>
// kernel: discriminator_forward.1
$region0: #{discriminator_forward.1}
  #allocation0 [shape = 'u32[]', space=smem, size = 0x4, offset = 0x4, fixed_abs, tag = 'smem constant byte address 0x4 - core index']
  #allocation1 [shape = 'u32[144,128]{1,0:T(1,128)}', space=vmem, size = 0x12000, scoped, tag = 'internal scratch']
  #allocation2 [shape = 'f32[1,1]{1,0:T(1,128)S(1)}', space=vmem, size = 0x200, scoped, tag = 'scoped memory for discriminator_forward.1']
  %s0 = inlined_call_operand.vmem [shape: f32[128,784], index: 0, kind: input, shape index: {}]
  %s1 = inlined_call_operand.vmem [shape: bf16[784,512], index: 1, kind: input, shape index: {}]
  %s2 = inlined_call_operand.vmem [shape: f32[1,512], index: 2, kind: input, shape index: {}]
  %s3 = inlined_call_operand.hbm [shape: bf16[512,256], index: 3, kind: input, shape index: {}]
  %s4 = inlined_call_operand.vmem [shape: f32[1,256], index: 4, kind: input, shape index: {}]
  %s5 = inlined_call_operand.vmem [shape: bf16[8,256], index: 5, kind: input, shape index: {}]
  %s6 = inlined_call_operand.<no memory space> [shape: f32[1,1], index: 6, kind: input, shape index: {}]
  %s7 = inlined_call_operand.hbm [shape: f32[1,128], index: 7, kind: output, shape index: {}]
  %s8 = sld [smem:[#allocation0]]
  $region42: #{discriminator_forward.1} parent=0
    _
  %s10 = ssub.s32 1, %s8
  %s11 = scalar_select 0, %s10, %s8
  %v12 = vstv %s6
  %13 = vst [vmem:[#allocation2] sm:$0x1] %v12
  $region1: #{discriminator_forward.1} parent=0
    #allocation3 [shape = 'u8[262144]{0}', space=vmem, size = 0x40000, scoped, tag = 'input window, operand 3, single buffered']
    #allocation4 [shape = 's32[1]{0}', space=sflag, size = 0x4, scoped, tag = 'scoped memory for discriminator_forward.1']
    #allocation5 [shape = 's32[1]{0}', space=sflag, size = 0x4, scoped, tag = 'scoped memory for discriminator_forward.1']
    #allocation6 [shape = 'u8[512]{0}', space=vmem, size = 0x400, scoped, tag = 'output window, operand 0, single buffered']
    %14 = vsyncpa [#allocation4], 0
    %15 = vsyncpa [#allocation5], 0
    // Predicated region
    $region2: #{discriminator_forward.1} parent=1 // pred_check
      _
    $region3: #{discriminator_forward.1} parent=1 // pred_check_branch
      %17 = sbr.rel (0) target = $region5
    $region4: #{discriminator_forward.1} parent=1 // pred_region
      _
    $region5: #{discriminator_forward.1} parent=1 // pred_fallthru
      _
    // Predicated region
    $region6: #{discriminator_forward.1} parent=1 // pred_check
      _
    $region7: #{discriminator_forward.1} parent=1 // pred_check_branch
      %19 = sbr.rel (0) target = $region9
    $region8: #{discriminator_forward.1} parent=1 // pred_region
      _
    $region9: #{discriminator_forward.1} parent=1 // pred_fallthru
      _
    // Predicated region
    $region10: #{discriminator_forward.1} parent=1 // pred_check
      _
    $region11: #{discriminator_forward.1} parent=1 // pred_check_branch
      %21 = sbr.rel (0) target = $region13
    $region12: #{discriminator_forward.1} parent=1 // pred_region
      _
    $region13: #{discriminator_forward.1} parent=1 // pred_fallthru
      _
    // Predicated region
    $region14: #{discriminator_forward.1} parent=1 // pred_check
      _
    $region15: #{discriminator_forward.1} parent=1 // pred_check_branch
      %23 = sbr.rel (0) target = $region17
    $region16: #{discriminator_forward.1} parent=1 // pred_region
      %s25 = ssub.s32 8192, 8192
      %26 = vsyncadd [#allocation4], %s25
      %s27 = sshll.u32 [#allocation3], 4
      %s28 = int_to_ptr.vmem [resolvable:$true] %s27
      %33 = dma.hbm_to_vmem [thread:$0]  %s3, 8192, %s28, [#allocation4], 128, 128, 8
    $region17: #{discriminator_forward.1} parent=1 // pred_fallthru
      _
    // Predicated region
    $region18: #{discriminator_forward.1} parent=1 // pred_check
      _
    $region19: #{discriminator_forward.1} parent=1 // pred_check_branch
      %35 = sbr.rel (0) target = $region21
    $region20: #{discriminator_forward.1} parent=1 // pred_region
      _
    $region21: #{discriminator_forward.1} parent=1 // pred_fallthru
      _
    // Predicated region
    $region22: #{discriminator_forward.1} parent=1 // pred_check
      _
    $region23: #{discriminator_forward.1} parent=1 // pred_check_branch
      %37 = sbr.rel (0) target = $region25
    $region24: #{discriminator_forward.1} parent=1 // pred_region
      _
    $region25: #{discriminator_forward.1} parent=1 // pred_fallthru
      _
    // Predicated region
    $region26: #{discriminator_forward.1} parent=1 // pred_check
      _
    $region27: #{discriminator_forward.1} parent=1 // pred_check_branch
      %39 = sbr.rel (0) target = $region29
    $region28: #{discriminator_forward.1} parent=1 // pred_region
      _
    $region29: #{discriminator_forward.1} parent=1 // pred_fallthru
      _
    // Predicated region
    $region30: #{discriminator_forward.1} parent=1 // pred_check
      _
    $region31: #{discriminator_forward.1} parent=1 // pred_check_branch
      %41 = sbr.rel (0) target = $region33
    $region32: #{discriminator_forward.1} parent=1 // pred_region
      %42 = dma.done [#allocation4], 8192
    $region33: #{discriminator_forward.1} parent=1 // pred_fallthru
      _
    %v44 = vld [vmem:[%s0] sm:$0xff]
    %v45 = vld [vmem:[%s0 + $0x8] sm:$0xff]
    %v46 = vld [vmem:[%s0 + $0x10] sm:$0xff]
    %v47 = vld [vmem:[%s0 + $0x18] sm:$0xff]
    %v48 = vld [vmem:[%s0 + $0x20] sm:$0xff]
    %v49 = vld [vmem:[%s0 + $0x28] sm:$0xff]
    %v50 = vld [vmem:[%s0 + $0x30] sm:$0xff]
    %v51 = vld [vmem:[%s0 + $0x38] sm:$0xff]
    %v52 = vld [vmem:[%s0 + $0x40] sm:$0xff]
    %v53 = vld [vmem:[%s0 + $0x48] sm:$0xff]
    %v54 = vld [vmem:[%s0 + $0x50] sm:$0xff]
    %v55 = vld [vmem:[%s0 + $0x58] sm:$0xff]
    %v56 = vld [vmem:[%s0 + $0x60] sm:$0xff]
    %v57 = vld [vmem:[%s0 + $0x68] sm:$0xff]
    %v58 = vld [vmem:[%s0 + $0x70] sm:$0xff]
    %v59 = vld [vmem:[%s0 + $0x78] sm:$0xff]
    %v60 = vld [vmem:[%s0 + $0x80] sm:$0xff]
    %v61 = vld [vmem:[%s0 + $0x88] sm:$0xff]
    %v62 = vld [vmem:[%s0 + $0x90] sm:$0xff]
    %v63 = vld [vmem:[%s0 + $0x98] sm:$0xff]
    %v64 = vld [vmem:[%s0 + $0xa0] sm:$0xff]
    %v65 = vld [vmem:[%s0 + $0xa8] sm:$0xff]
    %v66 = vld [vmem:[%s0 + $0xb0] sm:$0xff]
    %v67 = vld [vmem:[%s0 + $0xb8] sm:$0xff]
    %v68 = vld [vmem:[%s0 + $0xc0] sm:$0xff]
    %v69 = vld [vmem:[%s0 + $0xc8] sm:$0xff]
    %v70 = vld [vmem:[%s0 + $0xd0] sm:$0xff]
    %v71 = vld [vmem:[%s0 + $0xd8] sm:$0xff]
    %v72 = vld [vmem:[%s0 + $0xe0] sm:$0xff]
    %v73 = vld [vmem:[%s0 + $0xe8] sm:$0xff]
    %v74 = vld [vmem:[%s0 + $0xf0] sm:$0xff]
    %v75 = vld [vmem:[%s0 + $0xf8] sm:$0xff]
    %v76 = vld [vmem:[%s0 + $0x100] sm:$0xff]
    %v77 = vld [vmem:[%s0 + $0x108] sm:$0xff]
    %v78 = vld [vmem:[%s0 + $0x110] sm:$0xff]
    %v79 = vld [vmem:[%s0 + $0x118] sm:$0xff]
    %v80 = vld [vmem:[%s0 + $0x120] sm:$0xff]
    %v81 = vld [vmem:[%s0 + $0x128] sm:$0xff]
    %v82 = vld [vmem:[%s0 + $0x130] sm:$0xff]
    %v83 = vld [vmem:[%s0 + $0x138] sm:$0xff]
    %v84 = vld [vmem:[%s0 + $0x140] sm:$0xff]
    %v85 = vld [vmem:[%s0 + $0x148] sm:$0xff]
    %v86 = vld [vmem:[%s0 + $0x150] sm:$0xff]
    %v87 = vld [vmem:[%s0 + $0x158] sm:$0xff]
    %v88 = vld [vmem:[%s0 + $0x160] sm:$0xff]
    %v89 = vld [vmem:[%s0 + $0x168] sm:$0xff]
    %v90 = vld [vmem:[%s0 + $0x170] sm:$0xff]
    %v91 = vld [vmem:[%s0 + $0x178] sm:$0xff]
    %v92 = vld [vmem:[%s0 + $0x180] sm:$0xff]
    %v93 = vld [vmem:[%s0 + $0x188] sm:$0xff]
    %v94 = vld [vmem:[%s0 + $0x190] sm:$0xff]
    %v95 = vld [vmem:[%s0 + $0x198] sm:$0xff]
    %v96 = vld [vmem:[%s0 + $0x1a0] sm:$0xff]
    %v97 = vld [vmem:[%s0 + $0x1a8] sm:$0xff]
    %v98 = vld [vmem:[%s0 + $0x1b0] sm:$0xff]
    %v99 = vld [vmem:[%s0 + $0x1b8] sm:$0xff]
    %v100 = vld [vmem:[%s0 + $0x1c0] sm:$0xff]
    %v101 = vld [vmem:[%s0 + $0x1c8] sm:$0xff]
    %v102 = vld [vmem:[%s0 + $0x1d0] sm:$0xff]
    %v103 = vld [vmem:[%s0 + $0x1d8] sm:$0xff]
    %v104 = vld [vmem:[%s0 + $0x1e0] sm:$0xff]
    %v105 = vld [vmem:[%s0 + $0x1e8] sm:$0xff]
    %v106 = vld [vmem:[%s0 + $0x1f0] sm:$0xff]
    %v107 = vld [vmem:[%s0 + $0x1f8] sm:$0xff]
    %v108 = vld [vmem:[%s0 + $0x200] sm:$0xff]
    %v109 = vld [vmem:[%s0 + $0x208] sm:$0xff]
    %v110 = vld [vmem:[%s0 + $0x210] sm:$0xff]
    %v111 = vld [vmem:[%s0 + $0x218] sm:$0xff]
    %v112 = vld [vmem:[%s0 + $0x220] sm:$0xff]
    %v113 = vld [vmem:[%s0 + $0x228] sm:$0xff]
    %v114 = vld [vmem:[%s0 + $0x230] sm:$0xff]
    %v115 = vld [vmem:[%s0 + $0x238] sm:$0xff]
    %v116 = vld [vmem:[%s0 + $0x240] sm:$0xff]
    %v117 = vld [vmem:[%s0 + $0x248] sm:$0xff]
    %v118 = vld [vmem:[%s0 + $0x250] sm:$0xff]
    %v119 = vld [vmem:[%s0 + $0x258] sm:$0xff]
    %v120 = vld [vmem:[%s0 + $0x260] sm:$0xff]
    %v121 = vld [vmem:[%s0 + $0x268] sm:$0xff]
    %v122 = vld [vmem:[%s0 + $0x270] sm:$0xff]
    %v123 = vld [vmem:[%s0 + $0x278] sm:$0xff]
    %v124 = vld [vmem:[%s0 + $0x280] sm:$0xff]
    %v125 = vld [vmem:[%s0 + $0x288] sm:$0xff]
    %v126 = vld [vmem:[%s0 + $0x290] sm:$0xff]
    %v127 = vld [vmem:[%s0 + $0x298] sm:$0xff]
    %v128 = vld [vmem:[%s0 + $0x2a0] sm:$0xff]
    %v129 = vld [vmem:[%s0 + $0x2a8] sm:$0xff]
    %v130 = vld [vmem:[%s0 + $0x2b0] sm:$0xff]
    %v131 = vld [vmem:[%s0 + $0x2b8] sm:$0xff]
    %v132 = vld [vmem:[%s0 + $0x2c0] sm:$0xff]
    %v133 = vld [vmem:[%s0 + $0x2c8] sm:$0xff]
    %v134 = vld [vmem:[%s0 + $0x2d0] sm:$0xff]
    %v135 = vld [vmem:[%s0 + $0x2d8] sm:$0xff]
    %v136 = vld [vmem:[%s0 + $0x2e0] sm:$0xff]
    %v137 = vld [vmem:[%s0 + $0x2e8] sm:$0xff]
    %v138 = vld [vmem:[%s0 + $0x2f0] sm:$0xff]
    %v139 = vld [vmem:[%s0 + $0x2f8] sm:$0xff]
    %v140 = vld [vmem:[%s0 + $0x300] sm:$0xff]
    %v141 = vld [vmem:[%s0 + $0x308] sm:$0xff]
    %v142 = vld [vmem:[%s0 + $0x310] sm:$0xff]
    %v143 = vld [vmem:[%s0 + $0x318] sm:$0xff]
    %v144 = vld [vmem:[%s0 + $0x320] sm:$0xff]
    %v145 = vld [vmem:[%s0 + $0x328] sm:$0xff]
    %v146 = vld [vmem:[%s0 + $0x330] sm:$0xff]
    %v147 = vld [vmem:[%s0 + $0x338] sm:$0xff]
    %v148 = vld [vmem:[%s0 + $0x340] sm:$0xff]
    %v149 = vld [vmem:[%s0 + $0x348] sm:$0xff]
    %v150 = vld [vmem:[%s0 + $0x350] sm:$0xff]
    %v151 = vld [vmem:[%s0 + $0x358] sm:$0xff]
    %v152 = vld [vmem:[%s0 + $0x360] sm:$0xff]
    %v153 = vld [vmem:[%s0 + $0x368] sm:$0xff]
    %v154 = vld [vmem:[%s0 + $0x370] sm:$0xff]
    %v155 = vld [vmem:[%s0 + $0x378] sm:$0xff]
    %v156 = vpack.c.bf16 %v51, %v44
    %v157 = vpack.c.bf16 %v52, %v45
    %v158 = vpack.c.bf16 %v53, %v46
    %v159 = vpack.c.bf16 %v54, %v47
    %v160 = vpack.c.bf16 %v55, %v48
    %v161 = vpack.c.bf16 %v56, %v49
    %v162 = vpack.c.bf16 %v57, %v50
    %v163 = vpack.c.bf16 %v65, %v58
    %v164 = vpack.c.bf16 %v66, %v59
    %v165 = vpack.c.bf16 %v67, %v60
    %v166 = vpack.c.bf16 %v68, %v61
    %v167 = vpack.c.bf16 %v69, %v62
    %v168 = vpack.c.bf16 %v70, %v63
    %v169 = vpack.c.bf16 %v71, %v64
    %v170 = vpack.c.bf16 %v79, %v72
    %v171 = vpack.c.bf16 %v80, %v73
    %v172 = vpack.c.bf16 %v81, %v74
    %v173 = vpack.c.bf16 %v82, %v75
    %v174 = vpack.c.bf16 %v83, %v76
    %v175 = vpack.c.bf16 %v84, %v77
    %v176 = vpack.c.bf16 %v85, %v78
    %v177 = vpack.c.bf16 %v93, %v86
    %v178 = vpack.c.bf16 %v94, %v87
    %v179 = vpack.c.bf16 %v95, %v88
    %v180 = vpack.c.bf16 %v96, %v89
    %v181 = vpack.c.bf16 %v97, %v90
    %v182 = vpack.c.bf16 %v98, %v91
    %v183 = vpack.c.bf16 %v99, %v92
    %v184 = vpack.c.bf16 %v107, %v100
    %v185 = vpack.c.bf16 %v108, %v101
    %v186 = vpack.c.bf16 %v109, %v102
    %v187 = vpack.c.bf16 %v110, %v103
    %v188 = vpack.c.bf16 %v111, %v104
    %v189 = vpack.c.bf16 %v112, %v105
    %v190 = vpack.c.bf16 %v113, %v106
    %v191 = vpack.c.bf16 %v121, %v114
    %v192 = vpack.c.bf16 %v122, %v115
    %v193 = vpack.c.bf16 %v123, %v116
    %v194 = vpack.c.bf16 %v124, %v117
    %v195 = vpack.c.bf16 %v125, %v118
    %v196 = vpack.c.bf16 %v126, %v119
    %v197 = vpack.c.bf16 %v127, %v120
    %v198 = vpack.c.bf16 %v135, %v128
    %v199 = vpack.c.bf16 %v136, %v129
    %v200 = vpack.c.bf16 %v137, %v130
    %v201 = vpack.c.bf16 %v138, %v131
    %v202 = vpack.c.bf16 %v139, %v132
    %v203 = vpack.c.bf16 %v140, %v133
    %v204 = vpack.c.bf16 %v141, %v134
    %v205 = vpack.c.bf16 %v149, %v142
    %v206 = vpack.c.bf16 %v150, %v143
    %v207 = vpack.c.bf16 %v151, %v144
    %v208 = vpack.c.bf16 %v152, %v145
    %v209 = vpack.c.bf16 %v153, %v146
    %v210 = vpack.c.bf16 %v154, %v147
    %v211 = vpack.c.bf16 %v155, %v148
    %v212 = vld [vmem:[%s1] sm:$0xff]
    %v213 = vld [vmem:[%s1 + $0x8] sm:$0xff]
    %v214 = vld [vmem:[%s1 + $0x10] sm:$0xff]
    %v215 = vld [vmem:[%s1 + $0x18] sm:$0xff]
    %v216 = vld [vmem:[%s1 + $0x20] sm:$0xff]
    %v217 = vld [vmem:[%s1 + $0x28] sm:$0xff]
    %v218 = vld [vmem:[%s1 + $0x30] sm:$0xff]
    %v219 = vld [vmem:[%s1 + $0x38] sm:$0xff]
    %v220 = vld [vmem:[%s1 + $0x40] sm:$0xff]
    %v221 = vld [vmem:[%s1 + $0x48] sm:$0xff]
    %v222 = vld [vmem:[%s1 + $0x50] sm:$0xff]
    %v223 = vld [vmem:[%s1 + $0x58] sm:$0xff]
    %v224 = vld [vmem:[%s1 + $0x60] sm:$0xff]
    %v225 = vld [vmem:[%s1 + $0x68] sm:$0xff]
    %v226 = vld [vmem:[%s1 + $0x70] sm:$0xff]
    %v227 = vld [vmem:[%s1 + $0x78] sm:$0xff]
    %v228 = vld [vmem:[%s1 + $0x80] sm:$0xff]
    %v229 = vld [vmem:[%s1 + $0x88] sm:$0xff]
    %v230 = vld [vmem:[%s1 + $0x90] sm:$0xff]
    %v231 = vld [vmem:[%s1 + $0x98] sm:$0xff]
    %v232 = vld [vmem:[%s1 + $0xa0] sm:$0xff]
    %v233 = vld [vmem:[%s1 + $0xa8] sm:$0xff]
    %v234 = vld [vmem:[%s1 + $0xb0] sm:$0xff]
    %v235 = vld [vmem:[%s1 + $0xb8] sm:$0xff]
    %v236 = vld [vmem:[%s1 + $0xc0] sm:$0xff]
    %v237 = vld [vmem:[%s1 + $0xc8] sm:$0xff]
    %v238 = vld [vmem:[%s1 + $0xd0] sm:$0xff]
    %v239 = vld [vmem:[%s1 + $0xd8] sm:$0xff]
    %v240 = vld [vmem:[%s1 + $0xe0] sm:$0xff]
    %v241 = vld [vmem:[%s1 + $0xe8] sm:$0xff]
    %v242 = vld [vmem:[%s1 + $0xf0] sm:$0xff]
    %v243 = vld [vmem:[%s1 + $0xf8] sm:$0xff]
    %v244 = vld [vmem:[%s1 + $0x100] sm:$0xff]
    %v245 = vld [vmem:[%s1 + $0x108] sm:$0xff]
    %v246 = vld [vmem:[%s1 + $0x110] sm:$0xff]
    %v247 = vld [vmem:[%s1 + $0x118] sm:$0xff]
    %v248 = vld [vmem:[%s1 + $0x120] sm:$0xff]
    %v249 = vld [vmem:[%s1 + $0x128] sm:$0xff]
    %v250 = vld [vmem:[%s1 + $0x130] sm:$0xff]
    %v251 = vld [vmem:[%s1 + $0x138] sm:$0xff]
    %v252 = vld [vmem:[%s1 + $0x140] sm:$0xff]
    %v253 = vld [vmem:[%s1 + $0x148] sm:$0xff]
    %v254 = vld [vmem:[%s1 + $0x150] sm:$0xff]
    %v255 = vld [vmem:[%s1 + $0x158] sm:$0xff]
    %v256 = vld [vmem:[%s1 + $0x160] sm:$0xff]
    %v257 = vld [vmem:[%s1 + $0x168] sm:$0xff]
    %v258 = vld [vmem:[%s1 + $0x170] sm:$0xff]
    %v259 = vld [vmem:[%s1 + $0x178] sm:$0xff]
    %v260 = vld [vmem:[%s1 + $0x180] sm:$0xff]
    %v261 = vld [vmem:[%s1 + $0x188] sm:$0xff]
    %v262 = vld [vmem:[%s1 + $0x190] sm:$0xff]
    %v263 = vld [vmem:[%s1 + $0x198] sm:$0xff]
    %v264 = vld [vmem:[%s1 + $0x1a0] sm:$0xff]
    %v265 = vld [vmem:[%s1 + $0x1a8] sm:$0xff]
    %v266 = vld [vmem:[%s1 + $0x1b0] sm:$0xff]
    %v267 = vld [vmem:[%s1 + $0x1b8] sm:$0xff]
    %v268 = vld [vmem:[%s1 + $0x1c0] sm:$0xff]
    %v269 = vld [vmem:[%s1 + $0x1c8] sm:$0xff]
    %v270 = vld [vmem:[%s1 + $0x1d0] sm:$0xff]
    %v271 = vld [vmem:[%s1 + $0x1d8] sm:$0xff]
    %v272 = vld [vmem:[%s1 + $0x1e0] sm:$0xff]
    %v273 = vld [vmem:[%s1 + $0x1e8] sm:$0xff]
    %v274 = vld [vmem:[%s1 + $0x1f0] sm:$0xff]
    %v275 = vld [vmem:[%s1 + $0x1f8] sm:$0xff]
    %v276 = vld [vmem:[%s1 + $0x200] sm:$0xff]
    %v277 = vld [vmem:[%s1 + $0x208] sm:$0xff]
    %v278 = vld [vmem:[%s1 + $0x210] sm:$0xff]
    %v279 = vld [vmem:[%s1 + $0x218] sm:$0xff]
    %v280 = vld [vmem:[%s1 + $0x220] sm:$0xff]
    %v281 = vld [vmem:[%s1 + $0x228] sm:$0xff]
    %v282 = vld [vmem:[%s1 + $0x230] sm:$0xff]
    %v283 = vld [vmem:[%s1 + $0x238] sm:$0xff]
    %v284 = vld [vmem:[%s1 + $0x240] sm:$0xff]
    %v285 = vld [vmem:[%s1 + $0x248] sm:$0xff]
    %v286 = vld [vmem:[%s1 + $0x250] sm:$0xff]
    %v287 = vld [vmem:[%s1 + $0x258] sm:$0xff]
    %v288 = vld [vmem:[%s1 + $0x260] sm:$0xff]
    %v289 = vld [vmem:[%s1 + $0x268] sm:$0xff]
    %v290 = vld [vmem:[%s1 + $0x270] sm:$0xff]
    %v291 = vld [vmem:[%s1 + $0x278] sm:$0xff]
    %v292 = vld [vmem:[%s1 + $0x280] sm:$0xff]
    %v293 = vld [vmem:[%s1 + $0x288] sm:$0xff]
    %v294 = vld [vmem:[%s1 + $0x290] sm:$0xff]
    %v295 = vld [vmem:[%s1 + $0x298] sm:$0xff]
    %v296 = vld [vmem:[%s1 + $0x2a0] sm:$0xff]
    %v297 = vld [vmem:[%s1 + $0x2a8] sm:$0xff]
    %v298 = vld [vmem:[%s1 + $0x2b0] sm:$0xff]
    %v299 = vld [vmem:[%s1 + $0x2b8] sm:$0xff]
    %v300 = vld [vmem:[%s1 + $0x2c0] sm:$0xff]
    %v301 = vld [vmem:[%s1 + $0x2c8] sm:$0xff]
    %v302 = vld [vmem:[%s1 + $0x2d0] sm:$0xff]
    %v303 = vld [vmem:[%s1 + $0x2d8] sm:$0xff]
    %v304 = vld [vmem:[%s1 + $0x2e0] sm:$0xff]
    %v305 = vld [vmem:[%s1 + $0x2e8] sm:$0xff]
    %v306 = vld [vmem:[%s1 + $0x2f0] sm:$0xff]
    %v307 = vld [vmem:[%s1 + $0x2f8] sm:$0xff]
    %v308 = vld [vmem:[%s1 + $0x300] sm:$0xff]
    %v309 = vld [vmem:[%s1 + $0x308] sm:$0xff]
    %v310 = vld [vmem:[%s1 + $0x310] sm:$0xff]
    %v311 = vld [vmem:[%s1 + $0x318] sm:$0xff]
    %v312 = vld [vmem:[%s1 + $0x320] sm:$0xff]
    %v313 = vld [vmem:[%s1 + $0x328] sm:$0xff]
    %v314 = vld [vmem:[%s1 + $0x330] sm:$0xff]
    %v315 = vld [vmem:[%s1 + $0x338] sm:$0xff]
    %v316 = vld [vmem:[%s1 + $0x340] sm:$0xff]
    %v317 = vld [vmem:[%s1 + $0x348] sm:$0xff]
    %v318 = vld [vmem:[%s1 + $0x350] sm:$0xff]
    %v319 = vld [vmem:[%s1 + $0x358] sm:$0xff]
    %v320 = vld [vmem:[%s1 + $0x360] sm:$0xff]
    %v321 = vld [vmem:[%s1 + $0x368] sm:$0xff]
    %v322 = vld [vmem:[%s1 + $0x370] sm:$0xff]
    %v323 = vld [vmem:[%s1 + $0x378] sm:$0xff]
    %v324 = vld [vmem:[%s1 + $0x380] sm:$0xff]
    %v325 = vld [vmem:[%s1 + $0x388] sm:$0xff]
    %v326 = vld [vmem:[%s1 + $0x390] sm:$0xff]
    %v327 = vld [vmem:[%s1 + $0x398] sm:$0xff]
    %v328 = vld [vmem:[%s1 + $0x3a0] sm:$0xff]
    %v329 = vld [vmem:[%s1 + $0x3a8] sm:$0xff]
    %v330 = vld [vmem:[%s1 + $0x3b0] sm:$0xff]
    %v331 = vld [vmem:[%s1 + $0x3b8] sm:$0xff]
    %v332 = vld [vmem:[%s1 + $0x3c0] sm:$0xff]
    %v333 = vld [vmem:[%s1 + $0x3c8] sm:$0xff]
    %v334 = vld [vmem:[%s1 + $0x3d0] sm:$0xff]
    %v335 = vld [vmem:[%s1 + $0x3d8] sm:$0xff]
    %v336 = vld [vmem:[%s1 + $0x3e0] sm:$0xff]
    %v337 = vld [vmem:[%s1 + $0x3e8] sm:$0xff]
    %v338 = vld [vmem:[%s1 + $0x3f0] sm:$0xff]
    %v339 = vld [vmem:[%s1 + $0x3f8] sm:$0xff]
    %v340 = vld [vmem:[%s1 + $0x400] sm:$0xff]
    %v341 = vld [vmem:[%s1 + $0x408] sm:$0xff]
    %v342 = vld [vmem:[%s1 + $0x410] sm:$0xff]
    %v343 = vld [vmem:[%s1 + $0x418] sm:$0xff]
    %v344 = vld [vmem:[%s1 + $0x420] sm:$0xff]
    %v345 = vld [vmem:[%s1 + $0x428] sm:$0xff]
    %v346 = vld [vmem:[%s1 + $0x430] sm:$0xff]
    %v347 = vld [vmem:[%s1 + $0x438] sm:$0xff]
    %v348 = vld [vmem:[%s1 + $0x440] sm:$0xff]
    %v349 = vld [vmem:[%s1 + $0x448] sm:$0xff]
    %v350 = vld [vmem:[%s1 + $0x450] sm:$0xff]
    %v351 = vld [vmem:[%s1 + $0x458] sm:$0xff]
    %v352 = vld [vmem:[%s1 + $0x460] sm:$0xff]
    %v353 = vld [vmem:[%s1 + $0x468] sm:$0xff]
    %v354 = vld [vmem:[%s1 + $0x470] sm:$0xff]
    %v355 = vld [vmem:[%s1 + $0x478] sm:$0xff]
    %v356 = vld [vmem:[%s1 + $0x480] sm:$0xff]
    %v357 = vld [vmem:[%s1 + $0x488] sm:$0xff]
    %v358 = vld [vmem:[%s1 + $0x490] sm:$0xff]
    %v359 = vld [vmem:[%s1 + $0x498] sm:$0xff]
    %v360 = vld [vmem:[%s1 + $0x4a0] sm:$0xff]
    %v361 = vld [vmem:[%s1 + $0x4a8] sm:$0xff]
    %v362 = vld [vmem:[%s1 + $0x4b0] sm:$0xff]
    %v363 = vld [vmem:[%s1 + $0x4b8] sm:$0xff]
    %v364 = vld [vmem:[%s1 + $0x4c0] sm:$0xff]
    %v365 = vld [vmem:[%s1 + $0x4c8] sm:$0xff]
    %v366 = vld [vmem:[%s1 + $0x4d0] sm:$0xff]
    %v367 = vld [vmem:[%s1 + $0x4d8] sm:$0xff]
    %v368 = vld [vmem:[%s1 + $0x4e0] sm:$0xff]
    %v369 = vld [vmem:[%s1 + $0x4e8] sm:$0xff]
    %v370 = vld [vmem:[%s1 + $0x4f0] sm:$0xff]
    %v371 = vld [vmem:[%s1 + $0x4f8] sm:$0xff]
    %v372 = vld [vmem:[%s1 + $0x500] sm:$0xff]
    %v373 = vld [vmem:[%s1 + $0x508] sm:$0xff]
    %v374 = vld [vmem:[%s1 + $0x510] sm:$0xff]
    %v375 = vld [vmem:[%s1 + $0x518] sm:$0xff]
    %v376 = vld [vmem:[%s1 + $0x520] sm:$0xff]
    %v377 = vld [vmem:[%s1 + $0x528] sm:$0xff]
    %v378 = vld [vmem:[%s1 + $0x530] sm:$0xff]
    %v379 = vld [vmem:[%s1 + $0x538] sm:$0xff]
    %v380 = vld [vmem:[%s1 + $0x540] sm:$0xff]
    %v381 = vld [vmem:[%s1 + $0x548] sm:$0xff]
    %v382 = vld [vmem:[%s1 + $0x550] sm:$0xff]
    %v383 = vld [vmem:[%s1 + $0x558] sm:$0xff]
    %v384 = vld [vmem:[%s1 + $0x560] sm:$0xff]
    %v385 = vld [vmem:[%s1 + $0x568] sm:$0xff]
    %v386 = vld [vmem:[%s1 + $0x570] sm:$0xff]
    %v387 = vld [vmem:[%s1 + $0x578] sm:$0xff]
    %v388 = vld [vmem:[%s1 + $0x580] sm:$0xff]
    %v389 = vld [vmem:[%s1 + $0x588] sm:$0xff]
    %v390 = vld [vmem:[%s1 + $0x590] sm:$0xff]
    %v391 = vld [vmem:[%s1 + $0x598] sm:$0xff]
    %v392 = vld [vmem:[%s1 + $0x5a0] sm:$0xff]
    %v393 = vld [vmem:[%s1 + $0x5a8] sm:$0xff]
    %v394 = vld [vmem:[%s1 + $0x5b0] sm:$0xff]
    %v395 = vld [vmem:[%s1 + $0x5b8] sm:$0xff]
    %v396 = vld [vmem:[%s1 + $0x5c0] sm:$0xff]
    %v397 = vld [vmem:[%s1 + $0x5c8] sm:$0xff]
    %v398 = vld [vmem:[%s1 + $0x5d0] sm:$0xff]
    %v399 = vld [vmem:[%s1 + $0x5d8] sm:$0xff]
    %v400 = vld [vmem:[%s1 + $0x5e0] sm:$0xff]
    %v401 = vld [vmem:[%s1 + $0x5e8] sm:$0xff]
    %v402 = vld [vmem:[%s1 + $0x5f0] sm:$0xff]
    %v403 = vld [vmem:[%s1 + $0x5f8] sm:$0xff]
    %v404 = vld [vmem:[%s1 + $0x600] sm:$0xff]
    %v405 = vld [vmem:[%s1 + $0x608] sm:$0xff]
    %v406 = vld [vmem:[%s1 + $0x610] sm:$0xff]
    %v407 = vld [vmem:[%s1 + $0x618] sm:$0xff]
    %v408 = vld [vmem:[%s2] sm:$0xf]
    %v410 = vlaneseq
    %v411 = vshrl.u32 %v410, 7
    %v412 = vsub.s32 0, %v411
    %v413 = vrot.slane %v408, %v412
    %v414 = vlaneseq
    %v415 = vshrl.u32 %v414, 7
    %v416 = vsub.s32 1, %v415
    %v417 = vrot.slane %v408, %v416
    %v418 = vlaneseq
    %v419 = vshrl.u32 %v418, 7
    %v420 = vsub.s32 2, %v419
    %v421 = vrot.slane %v408, %v420
    %v422 = vlaneseq
    %v423 = vshrl.u32 %v422, 7
    %v424 = vsub.s32 3, %v423
    %v425 = vrot.slane %v408, %v424
    %v626 = vunpack.c.l.b16 %v212
    %v627 = vunpack.c.h.b16 %v212
    %v628 = vunpack.c.l.b16 %v213
    %v629 = vunpack.c.h.b16 %v213
    %v630 = vunpack.c.l.b16 %v214
    %v631 = vunpack.c.h.b16 %v214
    %v632 = vunpack.c.l.b16 %v215
    %v633 = vunpack.c.h.b16 %v215
    %v634 = vunpack.c.l.b16 %v216
    %v635 = vunpack.c.h.b16 %v216
    %v636 = vunpack.c.l.b16 %v217
    %v637 = vunpack.c.h.b16 %v217
    %v638 = vunpack.c.l.b16 %v218
    %v639 = vunpack.c.h.b16 %v218
    %v640 = vunpack.c.l.b16 %v219
    %v641 = vunpack.c.h.b16 %v219
    %v642 = vunpack.c.l.b16 %v220
    %v643 = vunpack.c.h.b16 %v220
    %v644 = vunpack.c.l.b16 %v221
    %v645 = vunpack.c.h.b16 %v221
    %v646 = vunpack.c.l.b16 %v222
    %v647 = vunpack.c.h.b16 %v222
    %v648 = vunpack.c.l.b16 %v223
    %v649 = vunpack.c.h.b16 %v223
    %v650 = vunpack.c.l.b16 %v224
    %v651 = vunpack.c.h.b16 %v224
    %v652 = vunpack.c.l.b16 %v225
    %v653 = vunpack.c.h.b16 %v225
    %v654 = vunpack.c.l.b16 %v226
    %v655 = vunpack.c.h.b16 %v226
    %v656 = vunpack.c.l.b16 %v227
    %v657 = vunpack.c.h.b16 %v227
    %v658 = vunpack.c.l.b16 %v228
    %v659 = vunpack.c.h.b16 %v228
    %v660 = vunpack.c.l.b16 %v229
    %v661 = vunpack.c.h.b16 %v229
    %v662 = vunpack.c.l.b16 %v230
    %v663 = vunpack.c.h.b16 %v230
    %v664 = vunpack.c.l.b16 %v231
    %v665 = vunpack.c.h.b16 %v231
    %v666 = vunpack.c.l.b16 %v232
    %v667 = vunpack.c.h.b16 %v232
    %v668 = vunpack.c.l.b16 %v233
    %v669 = vunpack.c.h.b16 %v233
    %v670 = vunpack.c.l.b16 %v234
    %v671 = vunpack.c.h.b16 %v234
    %v672 = vunpack.c.l.b16 %v235
    %v673 = vunpack.c.h.b16 %v235
    %v674 = vunpack.c.l.b16 %v236
    %v675 = vunpack.c.h.b16 %v236
    %v676 = vunpack.c.l.b16 %v237
    %v677 = vunpack.c.h.b16 %v237
    %v678 = vunpack.c.l.b16 %v238
    %v679 = vunpack.c.h.b16 %v238
    %v680 = vunpack.c.l.b16 %v239
    %v681 = vunpack.c.h.b16 %v239
    %v682 = vunpack.c.l.b16 %v240
    %v683 = vunpack.c.h.b16 %v240
    %v684 = vunpack.c.l.b16 %v241
    %v685 = vunpack.c.h.b16 %v241
    %v686 = vunpack.c.l.b16 %v242
    %v687 = vunpack.c.h.b16 %v242
    %v688 = vunpack.c.l.b16 %v243
    %v689 = vunpack.c.h.b16 %v243
    %v690 = vunpack.c.l.b16 %v244
    %v691 = vunpack.c.h.b16 %v244
    %v692 = vunpack.c.l.b16 %v245
    %v693 = vunpack.c.h.b16 %v245
    %v694 = vunpack.c.l.b16 %v246
    %v695 = vunpack.c.h.b16 %v246
    %v696 = vunpack.c.l.b16 %v247
    %v697 = vunpack.c.h.b16 %v247
    %v698 = vunpack.c.l.b16 %v248
    %v699 = vunpack.c.h.b16 %v248
    %v700 = vunpack.c.l.b16 %v249
    %v701 = vunpack.c.h.b16 %v249
    %v702 = vunpack.c.l.b16 %v250
    %v703 = vunpack.c.h.b16 %v250
    %v704 = vunpack.c.l.b16 %v251
    %v705 = vunpack.c.h.b16 %v251
    %v706 = vunpack.c.l.b16 %v252
    %v707 = vunpack.c.h.b16 %v252
    %v708 = vunpack.c.l.b16 %v253
    %v709 = vunpack.c.h.b16 %v253
    %v710 = vunpack.c.l.b16 %v254
    %v711 = vunpack.c.h.b16 %v254
    %v712 = vunpack.c.l.b16 %v255
    %v713 = vunpack.c.h.b16 %v255
    %v714 = vunpack.c.l.b16 %v256
    %v715 = vunpack.c.h.b16 %v256
    %v716 = vunpack.c.l.b16 %v257
    %v717 = vunpack.c.h.b16 %v257
    %v718 = vunpack.c.l.b16 %v258
    %v719 = vunpack.c.h.b16 %v258
    %v720 = vunpack.c.l.b16 %v259
    %v721 = vunpack.c.h.b16 %v259
    %v722 = vunpack.c.l.b16 %v260
    %v723 = vunpack.c.h.b16 %v260
    %v724 = vunpack.c.l.b16 %v261
    %v725 = vunpack.c.h.b16 %v261
    %v726 = vunpack.c.l.b16 %v262
    %v727 = vunpack.c.h.b16 %v262
    %v728 = vunpack.c.l.b16 %v263
    %v729 = vunpack.c.h.b16 %v263
    %v730 = vunpack.c.l.b16 %v264
    %v731 = vunpack.c.h.b16 %v264
    %v732 = vunpack.c.l.b16 %v265
    %v733 = vunpack.c.h.b16 %v265
    %v734 = vunpack.c.l.b16 %v266
    %v735 = vunpack.c.h.b16 %v266
    %v736 = vunpack.c.l.b16 %v267
    %v737 = vunpack.c.h.b16 %v267
    %v738 = vunpack.c.l.b16 %v268
    %v739 = vunpack.c.h.b16 %v268
    %v740 = vunpack.c.l.b16 %v269
    %v741 = vunpack.c.h.b16 %v269
    %v742 = vunpack.c.l.b16 %v270
    %v743 = vunpack.c.h.b16 %v270
    %v744 = vunpack.c.l.b16 %v271
    %v745 = vunpack.c.h.b16 %v271
    %v746 = vunpack.c.l.b16 %v272
    %v747 = vunpack.c.h.b16 %v272
    %v748 = vunpack.c.l.b16 %v273
    %v749 = vunpack.c.h.b16 %v273
    %v750 = vunpack.c.l.b16 %v274
    %v751 = vunpack.c.h.b16 %v274
    %v752 = vunpack.c.l.b16 %v275
    %v753 = vunpack.c.h.b16 %v275
    %v754 = vunpack.c.l.b16 %v276
    %v755 = vunpack.c.h.b16 %v276
    %v756 = vunpack.c.l.b16 %v277
    %v757 = vunpack.c.h.b16 %v277
    %v758 = vunpack.c.l.b16 %v278
    %v759 = vunpack.c.h.b16 %v278
    %v760 = vunpack.c.l.b16 %v279
    %v761 = vunpack.c.h.b16 %v279
    %v762 = vunpack.c.l.b16 %v280
    %v763 = vunpack.c.h.b16 %v280
    %v764 = vunpack.c.l.b16 %v281
    %v765 = vunpack.c.h.b16 %v281
    %v766 = vunpack.c.l.b16 %v282
    %v767 = vunpack.c.h.b16 %v282
    %v768 = vunpack.c.l.b16 %v283
    %v769 = vunpack.c.h.b16 %v283
    %v770 = vunpack.c.l.b16 %v284
    %v771 = vunpack.c.h.b16 %v284
    %v772 = vunpack.c.l.b16 %v285
    %v773 = vunpack.c.h.b16 %v285
    %v774 = vunpack.c.l.b16 %v286
    %v775 = vunpack.c.h.b16 %v286
    %v776 = vunpack.c.l.b16 %v287
    %v777 = vunpack.c.h.b16 %v287
    %v778 = vunpack.c.l.b16 %v288
    %v779 = vunpack.c.h.b16 %v288
    %v780 = vunpack.c.l.b16 %v289
    %v781 = vunpack.c.h.b16 %v289
    %v782 = vunpack.c.l.b16 %v290
    %v783 = vunpack.c.h.b16 %v290
    %v784 = vunpack.c.l.b16 %v291
    %v785 = vunpack.c.h.b16 %v291
    %v786 = vunpack.c.l.b16 %v292
    %v787 = vunpack.c.h.b16 %v292
    %v788 = vunpack.c.l.b16 %v293
    %v789 = vunpack.c.h.b16 %v293
    %v790 = vunpack.c.l.b16 %v294
    %v791 = vunpack.c.h.b16 %v294
    %v792 = vunpack.c.l.b16 %v295
    %v793 = vunpack.c.h.b16 %v295
    %v794 = vunpack.c.l.b16 %v296
    %v795 = vunpack.c.h.b16 %v296
    %v796 = vunpack.c.l.b16 %v297
    %v797 = vunpack.c.h.b16 %v297
    %v798 = vunpack.c.l.b16 %v298
    %v799 = vunpack.c.h.b16 %v298
    %v800 = vunpack.c.l.b16 %v299
    %v801 = vunpack.c.h.b16 %v299
    %v802 = vunpack.c.l.b16 %v300
    %v803 = vunpack.c.h.b16 %v300
    %v804 = vunpack.c.l.b16 %v301
    %v805 = vunpack.c.h.b16 %v301
    %v806 = vunpack.c.l.b16 %v302
    %v807 = vunpack.c.h.b16 %v302
    %v808 = vunpack.c.l.b16 %v303
    %v809 = vunpack.c.h.b16 %v303
    %v810 = vunpack.c.l.b16 %v304
    %v811 = vunpack.c.h.b16 %v304
    %v812 = vunpack.c.l.b16 %v305
    %v813 = vunpack.c.h.b16 %v305
    %v814 = vunpack.c.l.b16 %v306
    %v815 = vunpack.c.h.b16 %v306
    %v816 = vunpack.c.l.b16 %v307
    %v817 = vunpack.c.h.b16 %v307
    %v818 = vunpack.c.l.b16 %v308
    %v819 = vunpack.c.h.b16 %v308
    %v820 = vunpack.c.l.b16 %v309
    %v821 = vunpack.c.h.b16 %v309
    %v822 = vunpack.c.l.b16 %v310
    %v823 = vunpack.c.h.b16 %v310
    %v824 = vunpack.c.l.b16 %v311
    %v825 = vunpack.c.h.b16 %v311
    %v826 = vunpack.c.l.b16 %v312
    %v827 = vunpack.c.h.b16 %v312
    %v828 = vunpack.c.l.b16 %v313
    %v829 = vunpack.c.h.b16 %v313
    %v830 = vunpack.c.l.b16 %v314
    %v831 = vunpack.c.h.b16 %v314
    %v832 = vunpack.c.l.b16 %v315
    %v833 = vunpack.c.h.b16 %v315
    %v834 = vunpack.c.l.b16 %v316
    %v835 = vunpack.c.h.b16 %v316
    %v836 = vunpack.c.l.b16 %v317
    %v837 = vunpack.c.h.b16 %v317
    %v838 = vunpack.c.l.b16 %v318
    %v839 = vunpack.c.h.b16 %v318
    %v840 = vunpack.c.l.b16 %v319
    %v841 = vunpack.c.h.b16 %v319
    %v842 = vunpack.c.l.b16 %v320
    %v843 = vunpack.c.h.b16 %v320
    %v844 = vunpack.c.l.b16 %v321
    %v845 = vunpack.c.h.b16 %v321
    %v846 = vunpack.c.l.b16 %v322
    %v847 = vunpack.c.h.b16 %v322
    %v848 = vunpack.c.l.b16 %v323
    %v849 = vunpack.c.h.b16 %v323
    %v850 = vunpack.c.l.b16 %v324
    %v851 = vunpack.c.h.b16 %v324
    %v852 = vunpack.c.l.b16 %v325
    %v853 = vunpack.c.h.b16 %v325
    %v854 = vunpack.c.l.b16 %v326
    %v855 = vunpack.c.h.b16 %v326
    %v856 = vunpack.c.l.b16 %v327
    %v857 = vunpack.c.h.b16 %v327
    %v858 = vunpack.c.l.b16 %v328
    %v859 = vunpack.c.h.b16 %v328
    %v860 = vunpack.c.l.b16 %v329
    %v861 = vunpack.c.h.b16 %v329
    %v862 = vunpack.c.l.b16 %v330
    %v863 = vunpack.c.h.b16 %v330
    %v864 = vunpack.c.l.b16 %v331
    %v865 = vunpack.c.h.b16 %v331
    %v866 = vunpack.c.l.b16 %v332
    %v867 = vunpack.c.h.b16 %v332
    %v868 = vunpack.c.l.b16 %v333
    %v869 = vunpack.c.h.b16 %v333
    %v870 = vunpack.c.l.b16 %v334
    %v871 = vunpack.c.h.b16 %v334
    %v872 = vunpack.c.l.b16 %v335
    %v873 = vunpack.c.h.b16 %v335
    %v874 = vunpack.c.l.b16 %v336
    %v875 = vunpack.c.h.b16 %v336
    %v876 = vunpack.c.l.b16 %v337
    %v877 = vunpack.c.h.b16 %v337
    %v878 = vunpack.c.l.b16 %v338
    %v879 = vunpack.c.h.b16 %v338
    %v880 = vunpack.c.l.b16 %v339
    %v881 = vunpack.c.h.b16 %v339
    %v882 = vunpack.c.l.b16 %v340
    %v883 = vunpack.c.h.b16 %v340
    %v884 = vunpack.c.l.b16 %v341
    %v885 = vunpack.c.h.b16 %v341
    %v886 = vunpack.c.l.b16 %v342
    %v887 = vunpack.c.h.b16 %v342
    %v888 = vunpack.c.l.b16 %v343
    %v889 = vunpack.c.h.b16 %v343
    %v890 = vunpack.c.l.b16 %v344
    %v891 = vunpack.c.h.b16 %v344
    %v892 = vunpack.c.l.b16 %v345
    %v893 = vunpack.c.h.b16 %v345
    %v894 = vunpack.c.l.b16 %v346
    %v895 = vunpack.c.h.b16 %v346
    %v896 = vunpack.c.l.b16 %v347
    %v897 = vunpack.c.h.b16 %v347
    %v898 = vunpack.c.l.b16 %v348
    %v899 = vunpack.c.h.b16 %v348
    %v900 = vunpack.c.l.b16 %v349
    %v901 = vunpack.c.h.b16 %v349
    %v902 = vunpack.c.l.b16 %v350
    %v903 = vunpack.c.h.b16 %v350
    %v904 = vunpack.c.l.b16 %v351
    %v905 = vunpack.c.h.b16 %v351
    %v906 = vunpack.c.l.b16 %v352
    %v907 = vunpack.c.h.b16 %v352
    %v908 = vunpack.c.l.b16 %v353
    %v909 = vunpack.c.h.b16 %v353
    %v910 = vunpack.c.l.b16 %v354
    %v911 = vunpack.c.h.b16 %v354
    %v912 = vunpack.c.l.b16 %v355
    %v913 = vunpack.c.h.b16 %v355
    %v914 = vunpack.c.l.b16 %v356
    %v915 = vunpack.c.h.b16 %v356
    %v916 = vunpack.c.l.b16 %v357
    %v917 = vunpack.c.h.b16 %v357
    %v918 = vunpack.c.l.b16 %v358
    %v919 = vunpack.c.h.b16 %v358
    %v920 = vunpack.c.l.b16 %v359
    %v921 = vunpack.c.h.b16 %v359
    %v922 = vunpack.c.l.b16 %v360
    %v923 = vunpack.c.h.b16 %v360
    %v924 = vunpack.c.l.b16 %v361
    %v925 = vunpack.c.h.b16 %v361
    %v926 = vunpack.c.l.b16 %v362
    %v927 = vunpack.c.h.b16 %v362
    %v928 = vunpack.c.l.b16 %v363
    %v929 = vunpack.c.h.b16 %v363
    %v930 = vunpack.c.l.b16 %v364
    %v931 = vunpack.c.h.b16 %v364
    %v932 = vunpack.c.l.b16 %v365
    %v933 = vunpack.c.h.b16 %v365
    %v934 = vunpack.c.l.b16 %v366
    %v935 = vunpack.c.h.b16 %v366
    %v936 = vunpack.c.l.b16 %v367
    %v937 = vunpack.c.h.b16 %v367
    %v938 = vunpack.c.l.b16 %v368
    %v939 = vunpack.c.h.b16 %v368
    %v940 = vunpack.c.l.b16 %v369
    %v941 = vunpack.c.h.b16 %v369
    %v942 = vunpack.c.l.b16 %v370
    %v943 = vunpack.c.h.b16 %v370
    %v944 = vunpack.c.l.b16 %v371
    %v945 = vunpack.c.h.b16 %v371
    %v946 = vunpack.c.l.b16 %v372
    %v947 = vunpack.c.h.b16 %v372
    %v948 = vunpack.c.l.b16 %v373
    %v949 = vunpack.c.h.b16 %v373
    %v950 = vunpack.c.l.b16 %v374
    %v951 = vunpack.c.h.b16 %v374
    %v952 = vunpack.c.l.b16 %v375
    %v953 = vunpack.c.h.b16 %v375
    %v954 = vunpack.c.l.b16 %v376
    %v955 = vunpack.c.h.b16 %v376
    %v956 = vunpack.c.l.b16 %v377
    %v957 = vunpack.c.h.b16 %v377
    %v958 = vunpack.c.l.b16 %v378
    %v959 = vunpack.c.h.b16 %v378
    %v960 = vunpack.c.l.b16 %v379
    %v961 = vunpack.c.h.b16 %v379
    %v962 = vunpack.c.l.b16 %v380
    %v963 = vunpack.c.h.b16 %v380
    %v964 = vunpack.c.l.b16 %v381
    %v965 = vunpack.c.h.b16 %v381
    %v966 = vunpack.c.l.b16 %v382
    %v967 = vunpack.c.h.b16 %v382
    %v968 = vunpack.c.l.b16 %v383
    %v969 = vunpack.c.h.b16 %v383
    %v970 = vunpack.c.l.b16 %v384
    %v971 = vunpack.c.h.b16 %v384
    %v972 = vunpack.c.l.b16 %v385
    %v973 = vunpack.c.h.b16 %v385
    %v974 = vunpack.c.l.b16 %v386
    %v975 = vunpack.c.h.b16 %v386
    %v976 = vunpack.c.l.b16 %v387
    %v977 = vunpack.c.h.b16 %v387
    %v978 = vunpack.c.l.b16 %v388
    %v979 = vunpack.c.h.b16 %v388
    %v980 = vunpack.c.l.b16 %v389
    %v981 = vunpack.c.h.b16 %v389
    %v982 = vunpack.c.l.b16 %v390
    %v983 = vunpack.c.h.b16 %v390
    %v984 = vunpack.c.l.b16 %v391
    %v985 = vunpack.c.h.b16 %v391
    %v986 = vunpack.c.l.b16 %v392
    %v987 = vunpack.c.h.b16 %v392
    %v988 = vunpack.c.l.b16 %v393
    %v989 = vunpack.c.h.b16 %v393
    %v990 = vunpack.c.l.b16 %v394
    %v991 = vunpack.c.h.b16 %v394
    %v992 = vunpack.c.l.b16 %v395
    %v993 = vunpack.c.h.b16 %v395
    %v994 = vunpack.c.l.b16 %v396
    %v995 = vunpack.c.h.b16 %v396
    %v996 = vunpack.c.l.b16 %v397
    %v997 = vunpack.c.h.b16 %v397
    %v998 = vunpack.c.l.b16 %v398
    %v999 = vunpack.c.h.b16 %v398
    %v1000 = vunpack.c.l.b16 %v399
    %v1001 = vunpack.c.h.b16 %v399
    %v1002 = vunpack.c.l.b16 %v400
    %v1003 = vunpack.c.h.b16 %v400
    %v1004 = vunpack.c.l.b16 %v401
    %v1005 = vunpack.c.h.b16 %v401
    %v1006 = vunpack.c.l.b16 %v402
    %v1007 = vunpack.c.h.b16 %v402
    %v1008 = vunpack.c.l.b16 %v403
    %v1009 = vunpack.c.h.b16 %v403
    %v1010 = vunpack.c.l.b16 %v404
    %v1011 = vunpack.c.h.b16 %v404
    %v1012 = vunpack.c.l.b16 %v405
    %v1013 = vunpack.c.h.b16 %v405
    %v1014 = vunpack.c.l.b16 %v406
    %v1015 = vunpack.c.h.b16 %v406
    %v1016 = vunpack.c.l.b16 %v407
    %v1017 = vunpack.c.h.b16 %v407
    %v1018 = vpack.c.b16 %v630, %v626
    %v1019 = vpack.c.b16 %v631, %v627
    %v1020 = vpack.c.b16 %v632, %v628
    %v1021 = vpack.c.b16 %v633, %v629
    %v1022 = vpack.c.b16 %v638, %v634
    %v1023 = vpack.c.b16 %v639, %v635
    %v1024 = vpack.c.b16 %v640, %v636
    %v1025 = vpack.c.b16 %v641, %v637
    %v1026 = vpack.c.b16 %v646, %v642
    %v1027 = vpack.c.b16 %v647, %v643
    %v1028 = vpack.c.b16 %v648, %v644
    %v1029 = vpack.c.b16 %v649, %v645
    %v1030 = vpack.c.b16 %v654, %v650
    %v1031 = vpack.c.b16 %v655, %v651
    %v1032 = vpack.c.b16 %v656, %v652
    %v1033 = vpack.c.b16 %v657, %v653
    %v1034 = vpack.c.b16 %v662, %v658
    %v1035 = vpack.c.b16 %v663, %v659
    %v1036 = vpack.c.b16 %v664, %v660
    %v1037 = vpack.c.b16 %v665, %v661
    %v1038 = vpack.c.b16 %v670, %v666
    %v1039 = vpack.c.b16 %v671, %v667
    %v1040 = vpack.c.b16 %v672, %v668
    %v1041 = vpack.c.b16 %v673, %v669
    %v1042 = vpack.c.b16 %v678, %v674
    %v1043 = vpack.c.b16 %v679, %v675
    %v1044 = vpack.c.b16 %v680, %v676
    %v1045 = vpack.c.b16 %v681, %v677
    %v1046 = vpack.c.b16 %v686, %v682
    %v1047 = vpack.c.b16 %v687, %v683
    %v1048 = vpack.c.b16 %v688, %v684
    %v1049 = vpack.c.b16 %v689, %v685
    %v1050 = vpack.c.b16 %v694, %v690
    %v1051 = vpack.c.b16 %v695, %v691
    %v1052 = vpack.c.b16 %v696, %v692
    %v1053 = vpack.c.b16 %v697, %v693
    %v1054 = vpack.c.b16 %v702, %v698
    %v1055 = vpack.c.b16 %v703, %v699
    %v1056 = vpack.c.b16 %v704, %v700
    %v1057 = vpack.c.b16 %v705, %v701
    %v1058 = vpack.c.b16 %v710, %v706
    %v1059 = vpack.c.b16 %v711, %v707
    %v1060 = vpack.c.b16 %v712, %v708
    %v1061 = vpack.c.b16 %v713, %v709
    %v1062 = vpack.c.b16 %v718, %v714
    %v1063 = vpack.c.b16 %v719, %v715
    %v1064 = vpack.c.b16 %v720, %v716
    %v1065 = vpack.c.b16 %v721, %v717
    %v1066 = vpack.c.b16 %v726, %v722
    %v1067 = vpack.c.b16 %v727, %v723
    %v1068 = vpack.c.b16 %v728, %v724
    %v1069 = vpack.c.b16 %v729, %v725
    %v1070 = vpack.c.b16 %v734, %v730
    %v1071 = vpack.c.b16 %v735, %v731
    %v1072 = vpack.c.b16 %v736, %v732
    %v1073 = vpack.c.b16 %v737, %v733
    %v1074 = vpack.c.b16 %v742, %v738
    %v1075 = vpack.c.b16 %v743, %v739
    %v1076 = vpack.c.b16 %v744, %v740
    %v1077 = vpack.c.b16 %v745, %v741
    %v1078 = vpack.c.b16 %v750, %v746
    %v1079 = vpack.c.b16 %v751, %v747
    %v1080 = vpack.c.b16 %v752, %v748
    %v1081 = vpack.c.b16 %v753, %v749
    %v1082 = vpack.c.b16 %v758, %v754
    %v1083 = vpack.c.b16 %v759, %v755
    %v1084 = vpack.c.b16 %v760, %v756
    %v1085 = vpack.c.b16 %v761, %v757
    %v1086 = vpack.c.b16 %v766, %v762
    %v1087 = vpack.c.b16 %v767, %v763
    %v1088 = vpack.c.b16 %v768, %v764
    %v1089 = vpack.c.b16 %v769, %v765
    %v1090 = vpack.c.b16 %v774, %v770
    %v1091 = vpack.c.b16 %v775, %v771
    %v1092 = vpack.c.b16 %v776, %v772
    %v1093 = vpack.c.b16 %v777, %v773
    %v1094 = vpack.c.b16 %v782, %v778
    %v1095 = vpack.c.b16 %v783, %v779
    %v1096 = vpack.c.b16 %v784, %v780
    %v1097 = vpack.c.b16 %v785, %v781
    %v1098 = vpack.c.b16 %v790, %v786
    %v1099 = vpack.c.b16 %v791, %v787
    %v1100 = vpack.c.b16 %v792, %v788
    %v1101 = vpack.c.b16 %v793, %v789
    %v1102 = vpack.c.b16 %v798, %v794
    %v1103 = vpack.c.b16 %v799, %v795
    %v1104 = vpack.c.b16 %v800, %v796
    %v1105 = vpack.c.b16 %v801, %v797
    %v1106 = vpack.c.b16 %v806, %v802
    %v1107 = vpack.c.b16 %v807, %v803
    %v1108 = vpack.c.b16 %v808, %v804
    %v1109 = vpack.c.b16 %v809, %v805
    %v1110 = vpack.c.b16 %v814, %v810
    %v1111 = vpack.c.b16 %v815, %v811
    %v1112 = vpack.c.b16 %v816, %v812
    %v1113 = vpack.c.b16 %v817, %v813
    %v1114 = vpack.c.b16 %v822, %v818
    %v1115 = vpack.c.b16 %v823, %v819
    %v1116 = vpack.c.b16 %v824, %v820
    %v1117 = vpack.c.b16 %v825, %v821
    %v1118 = vpack.c.b16 %v830, %v826
    %v1119 = vpack.c.b16 %v831, %v827
    %v1120 = vpack.c.b16 %v832, %v828
    %v1121 = vpack.c.b16 %v833, %v829
    %v1122 = vpack.c.b16 %v838, %v834
    %v1123 = vpack.c.b16 %v839, %v835
    %v1124 = vpack.c.b16 %v840, %v836
    %v1125 = vpack.c.b16 %v841, %v837
    %v1126 = vpack.c.b16 %v846, %v842
    %v1127 = vpack.c.b16 %v847, %v843
    %v1128 = vpack.c.b16 %v848, %v844
    %v1129 = vpack.c.b16 %v849, %v845
    %v1130 = vpack.c.b16 %v854, %v850
    %v1131 = vpack.c.b16 %v855, %v851
    %v1132 = vpack.c.b16 %v856, %v852
    %v1133 = vpack.c.b16 %v857, %v853
    %v1134 = vpack.c.b16 %v862, %v858
    %v1135 = vpack.c.b16 %v863, %v859
    %v1136 = vpack.c.b16 %v864, %v860
    %v1137 = vpack.c.b16 %v865, %v861
    %v1138 = vpack.c.b16 %v870, %v866
    %v1139 = vpack.c.b16 %v871, %v867
    %v1140 = vpack.c.b16 %v872, %v868
    %v1141 = vpack.c.b16 %v873, %v869
    %v1142 = vpack.c.b16 %v878, %v874
    %v1143 = vpack.c.b16 %v879, %v875
    %v1144 = vpack.c.b16 %v880, %v876
    %v1145 = vpack.c.b16 %v881, %v877
    %v1146 = vpack.c.b16 %v886, %v882
    %v1147 = vpack.c.b16 %v887, %v883
    %v1148 = vpack.c.b16 %v888, %v884
    %v1149 = vpack.c.b16 %v889, %v885
    %v1150 = vpack.c.b16 %v894, %v890
    %v1151 = vpack.c.b16 %v895, %v891
    %v1152 = vpack.c.b16 %v896, %v892
    %v1153 = vpack.c.b16 %v897, %v893
    %v1154 = vpack.c.b16 %v902, %v898
    %v1155 = vpack.c.b16 %v903, %v899
    %v1156 = vpack.c.b16 %v904, %v900
    %v1157 = vpack.c.b16 %v905, %v901
    %v1158 = vpack.c.b16 %v910, %v906
    %v1159 = vpack.c.b16 %v911, %v907
    %v1160 = vpack.c.b16 %v912, %v908
    %v1161 = vpack.c.b16 %v913, %v909
    %v1162 = vpack.c.b16 %v918, %v914
    %v1163 = vpack.c.b16 %v919, %v915
    %v1164 = vpack.c.b16 %v920, %v916
    %v1165 = vpack.c.b16 %v921, %v917
    %v1166 = vpack.c.b16 %v926, %v922
    %v1167 = vpack.c.b16 %v927, %v923
    %v1168 = vpack.c.b16 %v928, %v924
    %v1169 = vpack.c.b16 %v929, %v925
    %v1170 = vpack.c.b16 %v934, %v930
    %v1171 = vpack.c.b16 %v935, %v931
    %v1172 = vpack.c.b16 %v936, %v932
    %v1173 = vpack.c.b16 %v937, %v933
    %v1174 = vpack.c.b16 %v942, %v938
    %v1175 = vpack.c.b16 %v943, %v939
    %v1176 = vpack.c.b16 %v944, %v940
    %v1177 = vpack.c.b16 %v945, %v941
    %v1178 = vpack.c.b16 %v950, %v946
    %v1179 = vpack.c.b16 %v951, %v947
    %v1180 = vpack.c.b16 %v952, %v948
    %v1181 = vpack.c.b16 %v953, %v949
    %v1182 = vpack.c.b16 %v958, %v954
    %v1183 = vpack.c.b16 %v959, %v955
    %v1184 = vpack.c.b16 %v960, %v956
    %v1185 = vpack.c.b16 %v961, %v957
    %v1186 = vpack.c.b16 %v966, %v962
    %v1187 = vpack.c.b16 %v967, %v963
    %v1188 = vpack.c.b16 %v968, %v964
    %v1189 = vpack.c.b16 %v969, %v965
    %v1190 = vpack.c.b16 %v974, %v970
    %v1191 = vpack.c.b16 %v975, %v971
    %v1192 = vpack.c.b16 %v976, %v972
    %v1193 = vpack.c.b16 %v977, %v973
    %v1194 = vpack.c.b16 %v982, %v978
    %v1195 = vpack.c.b16 %v983, %v979
    %v1196 = vpack.c.b16 %v984, %v980
    %v1197 = vpack.c.b16 %v985, %v981
    %v1198 = vpack.c.b16 %v990, %v986
    %v1199 = vpack.c.b16 %v991, %v987
    %v1200 = vpack.c.b16 %v992, %v988
    %v1201 = vpack.c.b16 %v993, %v989
    %v1202 = vpack.c.b16 %v998, %v994
    %v1203 = vpack.c.b16 %v999, %v995
    %v1204 = vpack.c.b16 %v1000, %v996
    %v1205 = vpack.c.b16 %v1001, %v997
    %v1206 = vpack.c.b16 %v1006, %v1002
    %v1207 = vpack.c.b16 %v1007, %v1003
    %v1208 = vpack.c.b16 %v1008, %v1004
    %v1209 = vpack.c.b16 %v1009, %v1005
    %v1210 = vpack.c.b16 %v1014, %v1010
    %v1211 = vpack.c.b16 %v1015, %v1011
    %v1212 = vpack.c.b16 %v1016, %v1012
    %v1213 = vpack.c.b16 %v1017, %v1013
    %vm1410 = vcmask 130048
    %v1412 = vsel %vm1410, %v162, 0
    %v1415 = vsel %vm1410, %v169, 0
    %v1418 = vsel %vm1410, %v176, 0
    %v1421 = vsel %vm1410, %v183, 0
    %v1424 = vsel %vm1410, %v190, 0
    %v1427 = vsel %vm1410, %v197, 0
    %v1430 = vsel %vm1410, %v204, 0
    %v1433 = vsel %vm1410, %v211, 0
    %1435 = vmatprep.subr.bf16.mxu0 %v1019
    %1436 = vmatpush1.bf16.msra.mxu0 %v1018
    %1437 = vmatprep.subr.bf16.mxu0 %v1023
    %1438 = vmatpush1.bf16.msra.mxu0 %v1022
    %1439 = vmatprep.subr.bf16.mxu0 %v1027
    %1440 = vmatpush1.bf16.msra.mxu0 %v1026
    %1441 = vmatprep.subr.bf16.mxu0 %v1031
    %1442 = vmatpush1.bf16.msra.mxu0 %v1030
    %1443 = vmatprep.subr.bf16.mxu0 %v1035
    %1444 = vmatpush1.bf16.msra.mxu0 %v1034
    %1445 = vmatprep.subr.bf16.mxu0 %v1039
    %1446 = vmatpush1.bf16.msra.mxu0 %v1038
    %1447 = vmatprep.subr.bf16.mxu0 %v1043
    %1448 = vmatpush1.bf16.msra.mxu0 %v1042
    %1449 = vmatprep.subr.bf16.mxu0 %v1047
    %1450 = vmatpush1.bf16.msra.mxu0 %v1046
    %1451 = vmatprep.subr.bf16.mxu0 %v1051
    %1452 = vmatpush1.bf16.msra.mxu0 %v1050
    %1453 = vmatprep.subr.bf16.mxu0 %v1055
    %1454 = vmatpush1.bf16.msra.mxu0 %v1054
    %1455 = vmatprep.subr.bf16.mxu0 %v1059
    %1456 = vmatpush1.bf16.msra.mxu0 %v1058
    %1457 = vmatprep.subr.bf16.mxu0 %v1063
    %1458 = vmatpush1.bf16.msra.mxu0 %v1062
    %1459 = vmatprep.subr.bf16.mxu0 %v1067
    %1460 = vmatpush1.bf16.msra.mxu0 %v1066
    %1461 = vmatprep.subr.bf16.mxu0 %v1071
    %1462 = vmatpush1.bf16.msra.mxu0 %v1070
    %1463 = vmatprep.subr.bf16.mxu0 %v1075
    %1464 = vmatpush1.bf16.msra.mxu0 %v1074
    %1465 = vmatprep.subr.bf16.mxu0 %v1079
    %1466 = vmatpush1.bf16.msra.mxu0 %v1078
    %1467 = vmatprep.mubr.bf16.mxu0 %v157
    %1468 = vmatmul.mubr.bf16.gmra.mrb[0].mxu0 %v156
    %v1469 = vpop.f32.mrb[0].mxu0
    %v1470 = vadd.f32 %v413, %v1469
    %v1471 = vpop.f32.mrb[0].mxu0
    %v1472 = vadd.f32 %v417, %v1471
    %v1473 = vpop.f32.mrb[0].mxu0
    %v1474 = vadd.f32 %v413, %v1473
    %v1475 = vpop.f32.mrb[0].mxu0
    %v1476 = vadd.f32 %v417, %v1475
    %1477 = vmatprep.mubr.bf16.mxu0 %v164
    %1478 = vmatmul.mubr.bf16.gmra.mrb[0].mxu0 %v163
    %v1479 = vpop.f32.mrb[0].mxu0
    %v1480 = vadd.f32 %v413, %v1479
    %v1481 = vpop.f32.mrb[0].mxu0
    %v1482 = vadd.f32 %v417, %v1481
    %v1483 = vpop.f32.mrb[0].mxu0
    %v1484 = vadd.f32 %v413, %v1483
    %v1485 = vpop.f32.mrb[0].mxu0
    %v1486 = vadd.f32 %v417, %v1485
    %1487 = vmatprep.mubr.bf16.mxu0 %v171
    %1488 = vmatmul.mubr.bf16.gmra.mrb[0].mxu0 %v170
    %v1489 = vpop.f32.mrb[0].mxu0
    %v1490 = vadd.f32 %v413, %v1489
    %v1491 = vpop.f32.mrb[0].mxu0
    %v1492 = vadd.f32 %v417, %v1491
    %v1493 = vpop.f32.mrb[0].mxu0
    %v1494 = vadd.f32 %v413, %v1493
    %v1495 = vpop.f32.mrb[0].mxu0
    %v1496 = vadd.f32 %v417, %v1495
    %1497 = vmatprep.mubr.bf16.mxu0 %v178
    %1498 = vmatmul.mubr.bf16.gmra.mrb[0].mxu0 %v177
    %v1499 = vpop.f32.mrb[0].mxu0
    %v1500 = vadd.f32 %v413, %v1499
    %v1501 = vpop.f32.mrb[0].mxu0
    %v1502 = vadd.f32 %v417, %v1501
    %v1503 = vpop.f32.mrb[0].mxu0
    %v1504 = vadd.f32 %v413, %v1503
    %v1505 = vpop.f32.mrb[0].mxu0
    %v1506 = vadd.f32 %v417, %v1505
    %1507 = vmatprep.mubr.bf16.mxu0 %v185
    %1508 = vmatmul.mubr.bf16.gmra.mrb[0].mxu0 %v184
    %v1509 = vpop.f32.mrb[0].mxu0
    %v1510 = vadd.f32 %v413, %v1509
    %v1511 = vpop.f32.mrb[0].mxu0
    %v1512 = vadd.f32 %v417, %v1511
    %v1513 = vpop.f32.mrb[0].mxu0
    %v1514 = vadd.f32 %v413, %v1513
    %v1515 = vpop.f32.mrb[0].mxu0
    %v1516 = vadd.f32 %v417, %v1515
    %1517 = vmatprep.mubr.bf16.mxu0 %v192
    %1518 = vmatmul.mubr.bf16.gmra.mrb[0].mxu0 %v191
    %v1519 = vpop.f32.mrb[0].mxu0
    %v1520 = vadd.f32 %v413, %v1519
    %v1521 = vpop.f32.mrb[0].mxu0
    %v1522 = vadd.f32 %v417, %v1521
    %v1523 = vpop.f32.mrb[0].mxu0
    %v1524 = vadd.f32 %v413, %v1523
    %v1525 = vpop.f32.mrb[0].mxu0
    %v1526 = vadd.f32 %v417, %v1525
    %1527 = vmatprep.mubr.bf16.mxu0 %v199
    %1528 = vmatmul.mubr.bf16.gmra.mrb[0].mxu0 %v198
    %v1529 = vpop.f32.mrb[0].mxu0
    %v1530 = vadd.f32 %v413, %v1529
    %v1531 = vpop.f32.mrb[0].mxu0
    %v1532 = vadd.f32 %v417, %v1531
    %v1533 = vpop.f32.mrb[0].mxu0
    %v1534 = vadd.f32 %v413, %v1533
    %v1535 = vpop.f32.mrb[0].mxu0
    %v1536 = vadd.f32 %v417, %v1535
    %1537 = vmatprep.mubr.bf16.mxu0 %v206
    %1538 = vmatmul.mubr.bf16.gmra.mrb[0].mxu0 %v205
    %v1539 = vpop.f32.mrb[0].mxu0
    %v1540 = vadd.f32 %v413, %v1539
    %v1541 = vpop.f32.mrb[0].mxu0
    %v1542 = vadd.f32 %v417, %v1541
    %v1543 = vpop.f32.mrb[0].mxu0
    %v1544 = vadd.f32 %v413, %v1543
    %v1545 = vpop.f32.mrb[0].mxu0
    %v1546 = vadd.f32 %v417, %v1545
    %1547 = vdwg.mxu0
    %1548 = vmatprep.subr.bf16.mxu0 %v1083
    %1549 = vmatpush1.bf16.msra.mxu0 %v1082
    %1550 = vmatprep.subr.bf16.mxu0 %v1087
    %1551 = vmatpush1.bf16.msra.mxu0 %v1086
    %1552 = vmatprep.subr.bf16.mxu0 %v1091
    %1553 = vmatpush1.bf16.msra.mxu0 %v1090
    %1554 = vmatprep.subr.bf16.mxu0 %v1095
    %1555 = vmatpush1.bf16.msra.mxu0 %v1094
    %1556 = vmatprep.subr.bf16.mxu0 %v1099
    %1557 = vmatpush1.bf16.msra.mxu0 %v1098
    %1558 = vmatprep.subr.bf16.mxu0 %v1103
    %1559 = vmatpush1.bf16.msra.mxu0 %v1102
    %1560 = vmatprep.subr.bf16.mxu0 %v1107
    %1561 = vmatpush1.bf16.msra.mxu0 %v1106
    %1562 = vmatprep.subr.bf16.mxu0 %v1111
    %1563 = vmatpush1.bf16.msra.mxu0 %v1110
    %1564 = vmatprep.subr.bf16.mxu0 %v1115
    %1565 = vmatpush1.bf16.msra.mxu0 %v1114
    %1566 = vmatprep.subr.bf16.mxu0 %v1119
    %1567 = vmatpush1.bf16.msra.mxu0 %v1118
    %1568 = vmatprep.subr.bf16.mxu0 %v1123
    %1569 = vmatpush1.bf16.msra.mxu0 %v1122
    %1570 = vmatprep.subr.bf16.mxu0 %v1127
    %1571 = vmatpush1.bf16.msra.mxu0 %v1126
    %1572 = vmatprep.subr.bf16.mxu0 %v1131
    %1573 = vmatpush1.bf16.msra.mxu0 %v1130
    %1574 = vmatprep.subr.bf16.mxu0 %v1135
    %1575 = vmatpush1.bf16.msra.mxu0 %v1134
    %1576 = vmatprep.subr.bf16.mxu0 %v1139
    %1577 = vmatpush1.bf16.msra.mxu0 %v1138
    %1578 = vmatprep.subr.bf16.mxu0 %v1143
    %1579 = vmatpush1.bf16.msra.mxu0 %v1142
    %1580 = vmatprep.mubr.bf16.mxu0 %v159
    %1581 = vmatmul.mubr.bf16.gmra.mrb[0].mxu0 %v158
    %v1582 = vpop.f32.mrb[0].mxu0
    %v1583 = vadd.f32 %v1470, %v1582
    %v1584 = vpop.f32.mrb[0].mxu0
    %v1585 = vadd.f32 %v1472, %v1584
    %v1586 = vpop.f32.mrb[0].mxu0
    %v1587 = vadd.f32 %v1474, %v1586
    %v1588 = vpop.f32.mrb[0].mxu0
    %v1589 = vadd.f32 %v1476, %v1588
    %1590 = vmatprep.mubr.bf16.mxu0 %v166
    %1591 = vmatmul.mubr.bf16.gmra.mrb[0].mxu0 %v165
    %v1592 = vpop.f32.mrb[0].mxu0
    %v1593 = vadd.f32 %v1480, %v1592
    %v1594 = vpop.f32.mrb[0].mxu0
    %v1595 = vadd.f32 %v1482, %v1594
    %v1596 = vpop.f32.mrb[0].mxu0
    %v1597 = vadd.f32 %v1484, %v1596
    %v1598 = vpop.f32.mrb[0].mxu0
    %v1599 = vadd.f32 %v1486, %v1598
    %1600 = vmatprep.mubr.bf16.mxu0 %v173
    %1601 = vmatmul.mubr.bf16.gmra.mrb[0].mxu0 %v172
    %v1602 = vpop.f32.mrb[0].mxu0
    %v1603 = vadd.f32 %v1490, %v1602
    %v1604 = vpop.f32.mrb[0].mxu0
    %v1605 = vadd.f32 %v1492, %v1604
    %v1606 = vpop.f32.mrb[0].mxu0
    %v1607 = vadd.f32 %v1494, %v1606
    %v1608 = vpop.f32.mrb[0].mxu0
    %v1609 = vadd.f32 %v1496, %v1608
    %1610 = vmatprep.mubr.bf16.mxu0 %v180
    %1611 = vmatmul.mubr.bf16.gmra.mrb[0].mxu0 %v179
    %v1612 = vpop.f32.mrb[0].mxu0
    %v1613 = vadd.f32 %v1500, %v1612
    %v1614 = vpop.f32.mrb[0].mxu0
    %v1615 = vadd.f32 %v1502, %v1614
    %v1616 = vpop.f32.mrb[0].mxu0
    %v1617 = vadd.f32 %v1504, %v1616
    %v1618 = vpop.f32.mrb[0].mxu0
    %v1619 = vadd.f32 %v1506, %v1618
    %1620 = vmatprep.mubr.bf16.mxu0 %v187
    %1621 = vmatmul.mubr.bf16.gmra.mrb[0].mxu0 %v186
    %v1622 = vpop.f32.mrb[0].mxu0
    %v1623 = vadd.f32 %v1510, %v1622
    %v1624 = vpop.f32.mrb[0].mxu0
    %v1625 = vadd.f32 %v1512, %v1624
    %v1626 = vpop.f32.mrb[0].mxu0
    %v1627 = vadd.f32 %v1514, %v1626
    %v1628 = vpop.f32.mrb[0].mxu0
    %v1629 = vadd.f32 %v1516, %v1628
    %1630 = vmatprep.mubr.bf16.mxu0 %v194
    %1631 = vmatmul.mubr.bf16.gmra.mrb[0].mxu0 %v193
    %v1632 = vpop.f32.mrb[0].mxu0
    %v1633 = vadd.f32 %v1520, %v1632
    %v1634 = vpop.f32.mrb[0].mxu0
    %v1635 = vadd.f32 %v1522, %v1634
    %v1636 = vpop.f32.mrb[0].mxu0
    %v1637 = vadd.f32 %v1524, %v1636
    %v1638 = vpop.f32.mrb[0].mxu0
    %v1639 = vadd.f32 %v1526, %v1638
    %1640 = vmatprep.mubr.bf16.mxu0 %v201
    %1641 = vmatmul.mubr.bf16.gmra.mrb[0].mxu0 %v200
    %v1642 = vpop.f32.mrb[0].mxu0
    %v1643 = vadd.f32 %v1530, %v1642
    %v1644 = vpop.f32.mrb[0].mxu0
    %v1645 = vadd.f32 %v1532, %v1644
    %v1646 = vpop.f32.mrb[0].mxu0
    %v1647 = vadd.f32 %v1534, %v1646
    %v1648 = vpop.f32.mrb[0].mxu0
    %v1649 = vadd.f32 %v1536, %v1648
    %1650 = vmatprep.mubr.bf16.mxu0 %v208
    %1651 = vmatmul.mubr.bf16.gmra.mrb[0].mxu0 %v207
    %v1652 = vpop.f32.mrb[0].mxu0
    %v1653 = vadd.f32 %v1540, %v1652
    %v1654 = vpop.f32.mrb[0].mxu0
    %v1655 = vadd.f32 %v1542, %v1654
    %v1656 = vpop.f32.mrb[0].mxu0
    %v1657 = vadd.f32 %v1544, %v1656
    %v1658 = vpop.f32.mrb[0].mxu0
    %v1659 = vadd.f32 %v1546, %v1658
    %1660 = vdwg.mxu0
    %1661 = vmatprep.subr.bf16.mxu0 %v1147
    %1662 = vmatpush1.bf16.msra.mxu0 %v1146
    %1663 = vmatprep.subr.bf16.mxu0 %v1151
    %1664 = vmatpush1.bf16.msra.mxu0 %v1150
    %1665 = vmatprep.subr.bf16.mxu0 %v1155
    %1666 = vmatpush1.bf16.msra.mxu0 %v1154
    %1667 = vmatprep.subr.bf16.mxu0 %v1159
    %1668 = vmatpush1.bf16.msra.mxu0 %v1158
    %1669 = vmatprep.subr.bf16.mxu0 %v1163
    %1670 = vmatpush1.bf16.msra.mxu0 %v1162
    %1671 = vmatprep.subr.bf16.mxu0 %v1167
    %1672 = vmatpush1.bf16.msra.mxu0 %v1166
    %1673 = vmatprep.subr.bf16.mxu0 %v1171
    %1674 = vmatpush1.bf16.msra.mxu0 %v1170
    %1675 = vmatprep.subr.bf16.mxu0 %v1175
    %1676 = vmatpush1.bf16.msra.mxu0 %v1174
    %1677 = vmatprep.subr.bf16.mxu0 %v1179
    %1678 = vmatpush1.bf16.msra.mxu0 %v1178
    %1679 = vmatprep.subr.bf16.mxu0 %v1183
    %1680 = vmatpush1.bf16.msra.mxu0 %v1182
    %1681 = vmatprep.subr.bf16.mxu0 %v1187
    %1682 = vmatpush1.bf16.msra.mxu0 %v1186
    %1683 = vmatprep.subr.bf16.mxu0 %v1191
    %1684 = vmatpush1.bf16.msra.mxu0 %v1190
    %1685 = vmatprep.subr.bf16.mxu0 %v1195
    %1686 = vmatpush1.bf16.msra.mxu0 %v1194
    %1687 = vmatprep.subr.bf16.mxu0 %v1199
    %1688 = vmatpush1.bf16.msra.mxu0 %v1198
    %1689 = vmatprep.subr.bf16.mxu0 %v1203
    %1690 = vmatpush1.bf16.msra.mxu0 %v1202
    %1691 = vmatprep.subr.bf16.mxu0 %v1207
    %1692 = vmatpush1.bf16.msra.mxu0 %v1206
    %1693 = vmatprep.mubr.bf16.mxu0 %v161
    %1694 = vmatmul.mubr.bf16.gmra.mrb[0].mxu0 %v160
    %v1695 = vpop.f32.mrb[0].mxu0
    %v1696 = vadd.f32 %v1583, %v1695
    %v1697 = vpop.f32.mrb[0].mxu0
    %v1698 = vadd.f32 %v1585, %v1697
    %v1699 = vpop.f32.mrb[0].mxu0
    %v1700 = vadd.f32 %v1587, %v1699
    %v1701 = vpop.f32.mrb[0].mxu0
    %v1702 = vadd.f32 %v1589, %v1701
    %1703 = vmatprep.mubr.bf16.mxu0 %v168
    %1704 = vmatmul.mubr.bf16.gmra.mrb[0].mxu0 %v167
    %v1705 = vpop.f32.mrb[0].mxu0
    %v1706 = vadd.f32 %v1593, %v1705
    %v1707 = vpop.f32.mrb[0].mxu0
    %v1708 = vadd.f32 %v1595, %v1707
    %v1709 = vpop.f32.mrb[0].mxu0
    %v1710 = vadd.f32 %v1597, %v1709
    %v1711 = vpop.f32.mrb[0].mxu0
    %v1712 = vadd.f32 %v1599, %v1711
    %1713 = vmatprep.mubr.bf16.mxu0 %v175
    %1714 = vmatmul.mubr.bf16.gmra.mrb[0].mxu0 %v174
    %v1715 = vpop.f32.mrb[0].mxu0
    %v1716 = vadd.f32 %v1603, %v1715
    %v1717 = vpop.f32.mrb[0].mxu0
    %v1718 = vadd.f32 %v1605, %v1717
    %v1719 = vpop.f32.mrb[0].mxu0
    %v1720 = vadd.f32 %v1607, %v1719
    %v1721 = vpop.f32.mrb[0].mxu0
    %v1722 = vadd.f32 %v1609, %v1721
    %1723 = vmatprep.mubr.bf16.mxu0 %v182
    %1724 = vmatmul.mubr.bf16.gmra.mrb[0].mxu0 %v181
    %v1725 = vpop.f32.mrb[0].mxu0
    %v1726 = vadd.f32 %v1613, %v1725
    %v1727 = vpop.f32.mrb[0].mxu0
    %v1728 = vadd.f32 %v1615, %v1727
    %v1729 = vpop.f32.mrb[0].mxu0
    %v1730 = vadd.f32 %v1617, %v1729
    %v1731 = vpop.f32.mrb[0].mxu0
    %v1732 = vadd.f32 %v1619, %v1731
    %1733 = vmatprep.mubr.bf16.mxu0 %v189
    %1734 = vmatmul.mubr.bf16.gmra.mrb[0].mxu0 %v188
    %v1735 = vpop.f32.mrb[0].mxu0
    %v1736 = vadd.f32 %v1623, %v1735
    %v1737 = vpop.f32.mrb[0].mxu0
    %v1738 = vadd.f32 %v1625, %v1737
    %v1739 = vpop.f32.mrb[0].mxu0
    %v1740 = vadd.f32 %v1627, %v1739
    %v1741 = vpop.f32.mrb[0].mxu0
    %v1742 = vadd.f32 %v1629, %v1741
    %1743 = vmatprep.mubr.bf16.mxu0 %v196
    %1744 = vmatmul.mubr.bf16.gmra.mrb[0].mxu0 %v195
    %v1745 = vpop.f32.mrb[0].mxu0
    %v1746 = vadd.f32 %v1633, %v1745
    %v1747 = vpop.f32.mrb[0].mxu0
    %v1748 = vadd.f32 %v1635, %v1747
    %v1749 = vpop.f32.mrb[0].mxu0
    %v1750 = vadd.f32 %v1637, %v1749
    %v1751 = vpop.f32.mrb[0].mxu0
    %v1752 = vadd.f32 %v1639, %v1751
    %1753 = vmatprep.mubr.bf16.mxu0 %v203
    %1754 = vmatmul.mubr.bf16.gmra.mrb[0].mxu0 %v202
    %v1755 = vpop.f32.mrb[0].mxu0
    %v1756 = vadd.f32 %v1643, %v1755
    %v1757 = vpop.f32.mrb[0].mxu0
    %v1758 = vadd.f32 %v1645, %v1757
    %v1759 = vpop.f32.mrb[0].mxu0
    %v1760 = vadd.f32 %v1647, %v1759
    %v1761 = vpop.f32.mrb[0].mxu0
    %v1762 = vadd.f32 %v1649, %v1761
    %1763 = vmatprep.mubr.bf16.mxu0 %v210
    %1764 = vmatmul.mubr.bf16.gmra.mrb[0].mxu0 %v209
    %v1765 = vpop.f32.mrb[0].mxu0
    %v1766 = vadd.f32 %v1653, %v1765
    %v1767 = vpop.f32.mrb[0].mxu0
    %v1768 = vadd.f32 %v1655, %v1767
    %v1769 = vpop.f32.mrb[0].mxu0
    %v1770 = vadd.f32 %v1657, %v1769
    %v1771 = vpop.f32.mrb[0].mxu0
    %v1772 = vadd.f32 %v1659, %v1771
    %1773 = vdwg.mxu0
    %1774 = vmatprep.subr.bf16.mxu0 %v1211
    %1775 = vmatpush1.bf16.msra.mxu0 %v1210
    %1776 = vmatprep.subr.bf16.mxu0 0
    %1777 = vmatpush1.bf16.msra.mxu0 0
    %1778 = vmatprep.subr.bf16.mxu0 0
    %1779 = vmatpush1.bf16.msra.mxu0 0
    %1780 = vmatprep.subr.bf16.mxu0 0
    %1781 = vmatpush1.bf16.msra.mxu0 0
    %1782 = vmatprep.subr.bf16.mxu0 0
    %1783 = vmatpush1.bf16.msra.mxu0 0
    %1784 = vmatprep.subr.bf16.mxu0 0
    %1785 = vmatpush1.bf16.msra.mxu0 0
    %1786 = vmatprep.subr.bf16.mxu0 0
    %1787 = vmatpush1.bf16.msra.mxu0 0
    %1788 = vmatprep.subr.bf16.mxu0 0
    %1789 = vmatpush1.bf16.msra.mxu0 0
    %1790 = vmatprep.subr.bf16.mxu0 0
    %1791 = vmatpush1.bf16.msra.mxu0 0
    %1792 = vmatprep.subr.bf16.mxu0 0
    %1793 = vmatpush1.bf16.msra.mxu0 0
    %1794 = vmatprep.subr.bf16.mxu0 0
    %1795 = vmatpush1.bf16.msra.mxu0 0
    %1796 = vmatprep.subr.bf16.mxu0 0
    %1797 = vmatpush1.bf16.msra.mxu0 0
    %1798 = vmatprep.subr.bf16.mxu0 0
    %1799 = vmatpush1.bf16.msra.mxu0 0
    %1800 = vmatprep.subr.bf16.mxu0 0
    %1801 = vmatpush1.bf16.msra.mxu0 0
    %1802 = vmatprep.subr.bf16.mxu0 0
    %1803 = vmatpush1.bf16.msra.mxu0 0
    %1804 = vmatprep.subr.bf16.mxu0 0
    %1805 = vmatpush1.bf16.msra.mxu0 0
    %1806 = vmatprep.mubr.bf16.mxu0 0
    %1807 = vmatmul.mubr.bf16.gmra.mrb[0].mxu0 %v1412
    %v1808 = vpop.f32.mrb[0].mxu0
    %v1809 = vadd.f32 %v1696, %v1808
    %v1810 = vpop.f32.mrb[0].mxu0
    %v1811 = vadd.f32 %v1698, %v1810
    %v1812 = vpop.f32.mrb[0].mxu0
    %v1813 = vadd.f32 %v1700, %v1812
    %v1814 = vpop.f32.mrb[0].mxu0
    %v1815 = vadd.f32 %v1702, %v1814
    %1816 = vmatprep.mubr.bf16.mxu0 0
    %1817 = vmatmul.mubr.bf16.gmra.mrb[0].mxu0 %v1415
    %v1818 = vpop.f32.mrb[0].mxu0
    %v1819 = vadd.f32 %v1706, %v1818
    %v1820 = vpop.f32.mrb[0].mxu0
    %v1821 = vadd.f32 %v1708, %v1820
    %v1822 = vpop.f32.mrb[0].mxu0
    %v1823 = vadd.f32 %v1710, %v1822
    %v1824 = vpop.f32.mrb[0].mxu0
    %v1825 = vadd.f32 %v1712, %v1824
    %1826 = vmatprep.mubr.bf16.mxu0 0
    %1827 = vmatmul.mubr.bf16.gmra.mrb[0].mxu0 %v1418
    %v1828 = vpop.f32.mrb[0].mxu0
    %v1829 = vadd.f32 %v1716, %v1828
    %v1830 = vpop.f32.mrb[0].mxu0
    %v1831 = vadd.f32 %v1718, %v1830
    %v1832 = vpop.f32.mrb[0].mxu0
    %v1833 = vadd.f32 %v1720, %v1832
    %v1834 = vpop.f32.mrb[0].mxu0
    %v1835 = vadd.f32 %v1722, %v1834
    %1836 = vmatprep.mubr.bf16.mxu0 0
    %1837 = vmatmul.mubr.bf16.gmra.mrb[0].mxu0 %v1421
    %v1838 = vpop.f32.mrb[0].mxu0
    %v1839 = vadd.f32 %v1726, %v1838
    %v1840 = vpop.f32.mrb[0].mxu0
    %v1841 = vadd.f32 %v1728, %v1840
    %v1842 = vpop.f32.mrb[0].mxu0
    %v1843 = vadd.f32 %v1730, %v1842
    %v1844 = vpop.f32.mrb[0].mxu0
    %v1845 = vadd.f32 %v1732, %v1844
    %1846 = vmatprep.mubr.bf16.mxu0 0
    %1847 = vmatmul.mubr.bf16.gmra.mrb[0].mxu0 %v1424
    %v1848 = vpop.f32.mrb[0].mxu0
    %v1849 = vadd.f32 %v1736, %v1848
    %v1850 = vpop.f32.mrb[0].mxu0
    %v1851 = vadd.f32 %v1738, %v1850
    %v1852 = vpop.f32.mrb[0].mxu0
    %v1853 = vadd.f32 %v1740, %v1852
    %v1854 = vpop.f32.mrb[0].mxu0
    %v1855 = vadd.f32 %v1742, %v1854
    %1856 = vmatprep.mubr.bf16.mxu0 0
    %1857 = vmatmul.mubr.bf16.gmra.mrb[0].mxu0 %v1427
    %v1858 = vpop.f32.mrb[0].mxu0
    %v1859 = vadd.f32 %v1746, %v1858
    %v1860 = vpop.f32.mrb[0].mxu0
    %v1861 = vadd.f32 %v1748, %v1860
    %v1862 = vpop.f32.mrb[0].mxu0
    %v1863 = vadd.f32 %v1750, %v1862
    %v1864 = vpop.f32.mrb[0].mxu0
    %v1865 = vadd.f32 %v1752, %v1864
    %1866 = vmatprep.mubr.bf16.mxu0 0
    %1867 = vmatmul.mubr.bf16.gmra.mrb[0].mxu0 %v1430
    %v1868 = vpop.f32.mrb[0].mxu0
    %v1869 = vadd.f32 %v1756, %v1868
    %v1870 = vpop.f32.mrb[0].mxu0
    %v1871 = vadd.f32 %v1758, %v1870
    %v1872 = vpop.f32.mrb[0].mxu0
    %v1873 = vadd.f32 %v1760, %v1872
    %v1874 = vpop.f32.mrb[0].mxu0
    %v1875 = vadd.f32 %v1762, %v1874
    %1876 = vmatprep.mubr.bf16.mxu0 0
    %1877 = vmatmul.mubr.bf16.gmra.mrb[0].mxu0 %v1433
    %v1878 = vpop.f32.mrb[0].mxu0
    %v1879 = vadd.f32 %v1766, %v1878
    %v1880 = vpop.f32.mrb[0].mxu0
    %v1881 = vadd.f32 %v1768, %v1880
    %v1882 = vpop.f32.mrb[0].mxu0
    %v1883 = vadd.f32 %v1770, %v1882
    %v1884 = vpop.f32.mrb[0].mxu0
    %v1885 = vadd.f32 %v1772, %v1884
    %1886 = vdwg.mxu0
    %1887 = vmatprep.subr.bf16.mxu0 %v1021
    %1888 = vmatpush1.bf16.msra.mxu0 %v1020
    %1889 = vmatprep.subr.bf16.mxu0 %v1025
    %1890 = vmatpush1.bf16.msra.mxu0 %v1024
    %1891 = vmatprep.subr.bf16.mxu0 %v1029
    %1892 = vmatpush1.bf16.msra.mxu0 %v1028
    %1893 = vmatprep.subr.bf16.mxu0 %v1033
    %1894 = vmatpush1.bf16.msra.mxu0 %v1032
    %1895 = vmatprep.subr.bf16.mxu0 %v1037
    %1896 = vmatpush1.bf16.msra.mxu0 %v1036
    %1897 = vmatprep.subr.bf16.mxu0 %v1041
    %1898 = vmatpush1.bf16.msra.mxu0 %v1040
    %1899 = vmatprep.subr.bf16.mxu0 %v1045
    %1900 = vmatpush1.bf16.msra.mxu0 %v1044
    %1901 = vmatprep.subr.bf16.mxu0 %v1049
    %1902 = vmatpush1.bf16.msra.mxu0 %v1048
    %1903 = vmatprep.subr.bf16.mxu0 %v1053
    %1904 = vmatpush1.bf16.msra.mxu0 %v1052
    %1905 = vmatprep.subr.bf16.mxu0 %v1057
    %1906 = vmatpush1.bf16.msra.mxu0 %v1056
    %1907 = vmatprep.subr.bf16.mxu0 %v1061
    %1908 = vmatpush1.bf16.msra.mxu0 %v1060
    %1909 = vmatprep.subr.bf16.mxu0 %v1065
    %1910 = vmatpush1.bf16.msra.mxu0 %v1064
    %1911 = vmatprep.subr.bf16.mxu0 %v1069
    %1912 = vmatpush1.bf16.msra.mxu0 %v1068
    %1913 = vmatprep.subr.bf16.mxu0 %v1073
    %1914 = vmatpush1.bf16.msra.mxu0 %v1072
    %1915 = vmatprep.subr.bf16.mxu0 %v1077
    %1916 = vmatpush1.bf16.msra.mxu0 %v1076
    %1917 = vmatprep.subr.bf16.mxu0 %v1081
    %1918 = vmatpush1.bf16.msra.mxu0 %v1080
    %1919 = vmatprep.mubr.bf16.mxu0 %v157
    %1920 = vmatmul.mubr.bf16.gmra.mrb[0].mxu0 %v156
    %v1921 = vpop.f32.mrb[0].mxu0
    %v1922 = vadd.f32 %v421, %v1921
    %v1923 = vpop.f32.mrb[0].mxu0
    %v1924 = vadd.f32 %v425, %v1923
    %v1925 = vpop.f32.mrb[0].mxu0
    %v1926 = vadd.f32 %v421, %v1925
    %v1927 = vpop.f32.mrb[0].mxu0
    %v1928 = vadd.f32 %v425, %v1927
    %1929 = vmatprep.mubr.bf16.mxu0 %v164
    %1930 = vmatmul.mubr.bf16.gmra.mrb[0].mxu0 %v163
    %v1931 = vpop.f32.mrb[0].mxu0
    %v1932 = vadd.f32 %v421, %v1931
    %v1933 = vpop.f32.mrb[0].mxu0
    %v1934 = vadd.f32 %v425, %v1933
    %v1935 = vpop.f32.mrb[0].mxu0
    %v1936 = vadd.f32 %v421, %v1935
    %v1937 = vpop.f32.mrb[0].mxu0
    %v1938 = vadd.f32 %v425, %v1937
    %1939 = vmatprep.mubr.bf16.mxu0 %v171
    %1940 = vmatmul.mubr.bf16.gmra.mrb[0].mxu0 %v170
    %v1941 = vpop.f32.mrb[0].mxu0
    %v1942 = vadd.f32 %v421, %v1941
    %v1943 = vpop.f32.mrb[0].mxu0
    %v1944 = vadd.f32 %v425, %v1943
    %v1945 = vpop.f32.mrb[0].mxu0
    %v1946 = vadd.f32 %v421, %v1945
    %v1947 = vpop.f32.mrb[0].mxu0
    %v1948 = vadd.f32 %v425, %v1947
    %1949 = vmatprep.mubr.bf16.mxu0 %v178
    %1950 = vmatmul.mubr.bf16.gmra.mrb[0].mxu0 %v177
    %v1951 = vpop.f32.mrb[0].mxu0
    %v1952 = vadd.f32 %v421, %v1951
    %v1953 = vpop.f32.mrb[0].mxu0
    %v1954 = vadd.f32 %v425, %v1953
    %v1955 = vpop.f32.mrb[0].mxu0
    %v1956 = vadd.f32 %v421, %v1955
    %v1957 = vpop.f32.mrb[0].mxu0
    %v1958 = vadd.f32 %v425, %v1957
    %1959 = vmatprep.mubr.bf16.mxu0 %v185
    %1960 = vmatmul.mubr.bf16.gmra.mrb[0].mxu0 %v184
    %v1961 = vpop.f32.mrb[0].mxu0
    %v1962 = vadd.f32 %v421, %v1961
    %v1963 = vpop.f32.mrb[0].mxu0
    %v1964 = vadd.f32 %v425, %v1963
    %v1965 = vpop.f32.mrb[0].mxu0
    %v1966 = vadd.f32 %v421, %v1965
    %v1967 = vpop.f32.mrb[0].mxu0
    %v1968 = vadd.f32 %v425, %v1967
    %1969 = vmatprep.mubr.bf16.mxu0 %v192
    %1970 = vmatmul.mubr.bf16.gmra.mrb[0].mxu0 %v191
    %v1971 = vpop.f32.mrb[0].mxu0
    %v1972 = vadd.f32 %v421, %v1971
    %v1973 = vpop.f32.mrb[0].mxu0
    %v1974 = vadd.f32 %v425, %v1973
    %v1975 = vpop.f32.mrb[0].mxu0
    %v1976 = vadd.f32 %v421, %v1975
    %v1977 = vpop.f32.mrb[0].mxu0
    %v1978 = vadd.f32 %v425, %v1977
    %1979 = vmatprep.mubr.bf16.mxu0 %v199
    %1980 = vmatmul.mubr.bf16.gmra.mrb[0].mxu0 %v198
    %v1981 = vpop.f32.mrb[0].mxu0
    %v1982 = vadd.f32 %v421, %v1981
    %v1983 = vpop.f32.mrb[0].mxu0
    %v1984 = vadd.f32 %v425, %v1983
    %v1985 = vpop.f32.mrb[0].mxu0
    %v1986 = vadd.f32 %v421, %v1985
    %v1987 = vpop.f32.mrb[0].mxu0
    %v1988 = vadd.f32 %v425, %v1987
    %1989 = vmatprep.mubr.bf16.mxu0 %v206
    %1990 = vmatmul.mubr.bf16.gmra.mrb[0].mxu0 %v205
    %v1991 = vpop.f32.mrb[0].mxu0
    %v1992 = vadd.f32 %v421, %v1991
    %v1993 = vpop.f32.mrb[0].mxu0
    %v1994 = vadd.f32 %v425, %v1993
    %v1995 = vpop.f32.mrb[0].mxu0
    %v1996 = vadd.f32 %v421, %v1995
    %v1997 = vpop.f32.mrb[0].mxu0
    %v1998 = vadd.f32 %v425, %v1997
    %1999 = vdwg.mxu0
    %2000 = vmatprep.subr.bf16.mxu0 %v1085
    %2001 = vmatpush1.bf16.msra.mxu0 %v1084
    %2002 = vmatprep.subr.bf16.mxu0 %v1089
    %2003 = vmatpush1.bf16.msra.mxu0 %v1088
    %2004 = vmatprep.subr.bf16.mxu0 %v1093
    %2005 = vmatpush1.bf16.msra.mxu0 %v1092
    %2006 = vmatprep.subr.bf16.mxu0 %v1097
    %2007 = vmatpush1.bf16.msra.mxu0 %v1096
    %2008 = vmatprep.subr.bf16.mxu0 %v1101
    %2009 = vmatpush1.bf16.msra.mxu0 %v1100
    %2010 = vmatprep.subr.bf16.mxu0 %v1105
    %2011 = vmatpush1.bf16.msra.mxu0 %v1104
    %2012 = vmatprep.subr.bf16.mxu0 %v1109
    %2013 = vmatpush1.bf16.msra.mxu0 %v1108
    %2014 = vmatprep.subr.bf16.mxu0 %v1113
    %2015 = vmatpush1.bf16.msra.mxu0 %v1112
    %2016 = vmatprep.subr.bf16.mxu0 %v1117
    %2017 = vmatpush1.bf16.msra.mxu0 %v1116
    %2018 = vmatprep.subr.bf16.mxu0 %v1121
    %2019 = vmatpush1.bf16.msra.mxu0 %v1120
    %2020 = vmatprep.subr.bf16.mxu0 %v1125
    %2021 = vmatpush1.bf16.msra.mxu0 %v1124
    %2022 = vmatprep.subr.bf16.mxu0 %v1129
    %2023 = vmatpush1.bf16.msra.mxu0 %v1128
    %2024 = vmatprep.subr.bf16.mxu0 %v1133
    %2025 = vmatpush1.bf16.msra.mxu0 %v1132
    %2026 = vmatprep.subr.bf16.mxu0 %v1137
    %2027 = vmatpush1.bf16.msra.mxu0 %v1136
    %2028 = vmatprep.subr.bf16.mxu0 %v1141
    %2029 = vmatpush1.bf16.msra.mxu0 %v1140
    %2030 = vmatprep.subr.bf16.mxu0 %v1145
    %2031 = vmatpush1.bf16.msra.mxu0 %v1144
    %2032 = vmatprep.mubr.bf16.mxu0 %v159
    %2033 = vmatmul.mubr.bf16.gmra.mrb[0].mxu0 %v158
    %v2034 = vpop.f32.mrb[0].mxu0
    %v2035 = vadd.f32 %v1922, %v2034
    %v2036 = vpop.f32.mrb[0].mxu0
    %v2037 = vadd.f32 %v1924, %v2036
    %v2038 = vpop.f32.mrb[0].mxu0
    %v2039 = vadd.f32 %v1926, %v2038
    %v2040 = vpop.f32.mrb[0].mxu0
    %v2041 = vadd.f32 %v1928, %v2040
    %2042 = vmatprep.mubr.bf16.mxu0 %v166
    %2043 = vmatmul.mubr.bf16.gmra.mrb[0].mxu0 %v165
    %v2044 = vpop.f32.mrb[0].mxu0
    %v2045 = vadd.f32 %v1932, %v2044
    %v2046 = vpop.f32.mrb[0].mxu0
    %v2047 = vadd.f32 %v1934, %v2046
    %v2048 = vpop.f32.mrb[0].mxu0
    %v2049 = vadd.f32 %v1936, %v2048
    %v2050 = vpop.f32.mrb[0].mxu0
    %v2051 = vadd.f32 %v1938, %v2050
    %2052 = vmatprep.mubr.bf16.mxu0 %v173
    %2053 = vmatmul.mubr.bf16.gmra.mrb[0].mxu0 %v172
    %v2054 = vpop.f32.mrb[0].mxu0
    %v2055 = vadd.f32 %v1942, %v2054
    %v2056 = vpop.f32.mrb[0].mxu0
    %v2057 = vadd.f32 %v1944, %v2056
    %v2058 = vpop.f32.mrb[0].mxu0
    %v2059 = vadd.f32 %v1946, %v2058
    %v2060 = vpop.f32.mrb[0].mxu0
    %v2061 = vadd.f32 %v1948, %v2060
    %2062 = vmatprep.mubr.bf16.mxu0 %v180
    %2063 = vmatmul.mubr.bf16.gmra.mrb[0].mxu0 %v179
    %v2064 = vpop.f32.mrb[0].mxu0
    %v2065 = vadd.f32 %v1952, %v2064
    %v2066 = vpop.f32.mrb[0].mxu0
    %v2067 = vadd.f32 %v1954, %v2066
    %v2068 = vpop.f32.mrb[0].mxu0
    %v2069 = vadd.f32 %v1956, %v2068
    %v2070 = vpop.f32.mrb[0].mxu0
    %v2071 = vadd.f32 %v1958, %v2070
    %2072 = vmatprep.mubr.bf16.mxu0 %v187
    %2073 = vmatmul.mubr.bf16.gmra.mrb[0].mxu0 %v186
    %v2074 = vpop.f32.mrb[0].mxu0
    %v2075 = vadd.f32 %v1962, %v2074
    %v2076 = vpop.f32.mrb[0].mxu0
    %v2077 = vadd.f32 %v1964, %v2076
    %v2078 = vpop.f32.mrb[0].mxu0
    %v2079 = vadd.f32 %v1966, %v2078
    %v2080 = vpop.f32.mrb[0].mxu0
    %v2081 = vadd.f32 %v1968, %v2080
    %2082 = vmatprep.mubr.bf16.mxu0 %v194
    %2083 = vmatmul.mubr.bf16.gmra.mrb[0].mxu0 %v193
    %v2084 = vpop.f32.mrb[0].mxu0
    %v2085 = vadd.f32 %v1972, %v2084
    %v2086 = vpop.f32.mrb[0].mxu0
    %v2087 = vadd.f32 %v1974, %v2086
    %v2088 = vpop.f32.mrb[0].mxu0
    %v2089 = vadd.f32 %v1976, %v2088
    %v2090 = vpop.f32.mrb[0].mxu0
    %v2091 = vadd.f32 %v1978, %v2090
    %2092 = vmatprep.mubr.bf16.mxu0 %v201
    %2093 = vmatmul.mubr.bf16.gmra.mrb[0].mxu0 %v200
    %v2094 = vpop.f32.mrb[0].mxu0
    %v2095 = vadd.f32 %v1982, %v2094
    %v2096 = vpop.f32.mrb[0].mxu0
    %v2097 = vadd.f32 %v1984, %v2096
    %v2098 = vpop.f32.mrb[0].mxu0
    %v2099 = vadd.f32 %v1986, %v2098
    %v2100 = vpop.f32.mrb[0].mxu0
    %v2101 = vadd.f32 %v1988, %v2100
    %2102 = vmatprep.mubr.bf16.mxu0 %v208
    %2103 = vmatmul.mubr.bf16.gmra.mrb[0].mxu0 %v207
    %v2104 = vpop.f32.mrb[0].mxu0
    %v2105 = vadd.f32 %v1992, %v2104
    %v2106 = vpop.f32.mrb[0].mxu0
    %v2107 = vadd.f32 %v1994, %v2106
    %v2108 = vpop.f32.mrb[0].mxu0
    %v2109 = vadd.f32 %v1996, %v2108
    %v2110 = vpop.f32.mrb[0].mxu0
    %v2111 = vadd.f32 %v1998, %v2110
    %2112 = vdwg.mxu0
    %2113 = vmatprep.subr.bf16.mxu0 %v1149
    %2114 = vmatpush1.bf16.msra.mxu0 %v1148
    %2115 = vmatprep.subr.bf16.mxu0 %v1153
    %2116 = vmatpush1.bf16.msra.mxu0 %v1152
    %2117 = vmatprep.subr.bf16.mxu0 %v1157
    %2118 = vmatpush1.bf16.msra.mxu0 %v1156
    %2119 = vmatprep.subr.bf16.mxu0 %v1161
    %2120 = vmatpush1.bf16.msra.mxu0 %v1160
    %2121 = vmatprep.subr.bf16.mxu0 %v1165
    %2122 = vmatpush1.bf16.msra.mxu0 %v1164
    %2123 = vmatprep.subr.bf16.mxu0 %v1169
    %2124 = vmatpush1.bf16.msra.mxu0 %v1168
    %2125 = vmatprep.subr.bf16.mxu0 %v1173
    %2126 = vmatpush1.bf16.msra.mxu0 %v1172
    %2127 = vmatprep.subr.bf16.mxu0 %v1177
    %2128 = vmatpush1.bf16.msra.mxu0 %v1176
    %2129 = vmatprep.subr.bf16.mxu0 %v1181
    %2130 = vmatpush1.bf16.msra.mxu0 %v1180
    %2131 = vmatprep.subr.bf16.mxu0 %v1185
    %2132 = vmatpush1.bf16.msra.mxu0 %v1184
    %2133 = vmatprep.subr.bf16.mxu0 %v1189
    %2134 = vmatpush1.bf16.msra.mxu0 %v1188
    %2135 = vmatprep.subr.bf16.mxu0 %v1193
    %2136 = vmatpush1.bf16.msra.mxu0 %v1192
    %2137 = vmatprep.subr.bf16.mxu0 %v1197
    %2138 = vmatpush1.bf16.msra.mxu0 %v1196
    %2139 = vmatprep.subr.bf16.mxu0 %v1201
    %2140 = vmatpush1.bf16.msra.mxu0 %v1200
    %2141 = vmatprep.subr.bf16.mxu0 %v1205
    %2142 = vmatpush1.bf16.msra.mxu0 %v1204
    %2143 = vmatprep.subr.bf16.mxu0 %v1209
    %2144 = vmatpush1.bf16.msra.mxu0 %v1208
    %2145 = vmatprep.mubr.bf16.mxu0 %v161
    %2146 = vmatmul.mubr.bf16.gmra.mrb[0].mxu0 %v160
    %v2147 = vpop.f32.mrb[0].mxu0
    %v2148 = vadd.f32 %v2035, %v2147
    %v2149 = vpop.f32.mrb[0].mxu0
    %v2150 = vadd.f32 %v2037, %v2149
    %v2151 = vpop.f32.mrb[0].mxu0
    %v2152 = vadd.f32 %v2039, %v2151
    %v2153 = vpop.f32.mrb[0].mxu0
    %v2154 = vadd.f32 %v2041, %v2153
    %2155 = vmatprep.mubr.bf16.mxu0 %v168
    %2156 = vmatmul.mubr.bf16.gmra.mrb[0].mxu0 %v167
    %v2157 = vpop.f32.mrb[0].mxu0
    %v2158 = vadd.f32 %v2045, %v2157
    %v2159 = vpop.f32.mrb[0].mxu0
    %v2160 = vadd.f32 %v2047, %v2159
    %v2161 = vpop.f32.mrb[0].mxu0
    %v2162 = vadd.f32 %v2049, %v2161
    %v2163 = vpop.f32.mrb[0].mxu0
    %v2164 = vadd.f32 %v2051, %v2163
    %2165 = vmatprep.mubr.bf16.mxu0 %v175
    %2166 = vmatmul.mubr.bf16.gmra.mrb[0].mxu0 %v174
    %v2167 = vpop.f32.mrb[0].mxu0
    %v2168 = vadd.f32 %v2055, %v2167
    %v2169 = vpop.f32.mrb[0].mxu0
    %v2170 = vadd.f32 %v2057, %v2169
    %v2171 = vpop.f32.mrb[0].mxu0
    %v2172 = vadd.f32 %v2059, %v2171
    %v2173 = vpop.f32.mrb[0].mxu0
    %v2174 = vadd.f32 %v2061, %v2173
    %2175 = vmatprep.mubr.bf16.mxu0 %v182
    %2176 = vmatmul.mubr.bf16.gmra.mrb[0].mxu0 %v181
    %v2177 = vpop.f32.mrb[0].mxu0
    %v2178 = vadd.f32 %v2065, %v2177
    %v2179 = vpop.f32.mrb[0].mxu0
    %v2180 = vadd.f32 %v2067, %v2179
    %v2181 = vpop.f32.mrb[0].mxu0
    %v2182 = vadd.f32 %v2069, %v2181
    %v2183 = vpop.f32.mrb[0].mxu0
    %v2184 = vadd.f32 %v2071, %v2183
    %2185 = vmatprep.mubr.bf16.mxu0 %v189
    %2186 = vmatmul.mubr.bf16.gmra.mrb[0].mxu0 %v188
    %v2187 = vpop.f32.mrb[0].mxu0
    %v2188 = vadd.f32 %v2075, %v2187
    %v2189 = vpop.f32.mrb[0].mxu0
    %v2190 = vadd.f32 %v2077, %v2189
    %v2191 = vpop.f32.mrb[0].mxu0
    %v2192 = vadd.f32 %v2079, %v2191
    %v2193 = vpop.f32.mrb[0].mxu0
    %v2194 = vadd.f32 %v2081, %v2193
    %2195 = vmatprep.mubr.bf16.mxu0 %v196
    %2196 = vmatmul.mubr.bf16.gmra.mrb[0].mxu0 %v195
    %v2197 = vpop.f32.mrb[0].mxu0
    %v2198 = vadd.f32 %v2085, %v2197
    %v2199 = vpop.f32.mrb[0].mxu0
    %v2200 = vadd.f32 %v2087, %v2199
    %v2201 = vpop.f32.mrb[0].mxu0
    %v2202 = vadd.f32 %v2089, %v2201
    %v2203 = vpop.f32.mrb[0].mxu0
    %v2204 = vadd.f32 %v2091, %v2203
    %2205 = vmatprep.mubr.bf16.mxu0 %v203
    %2206 = vmatmul.mubr.bf16.gmra.mrb[0].mxu0 %v202
    %v2207 = vpop.f32.mrb[0].mxu0
    %v2208 = vadd.f32 %v2095, %v2207
    %v2209 = vpop.f32.mrb[0].mxu0
    %v2210 = vadd.f32 %v2097, %v2209
    %v2211 = vpop.f32.mrb[0].mxu0
    %v2212 = vadd.f32 %v2099, %v2211
    %v2213 = vpop.f32.mrb[0].mxu0
    %v2214 = vadd.f32 %v2101, %v2213
    %2215 = vmatprep.mubr.bf16.mxu0 %v210
    %2216 = vmatmul.mubr.bf16.gmra.mrb[0].mxu0 %v209
    %v2217 = vpop.f32.mrb[0].mxu0
    %v2218 = vadd.f32 %v2105, %v2217
    %v2219 = vpop.f32.mrb[0].mxu0
    %v2220 = vadd.f32 %v2107, %v2219
    %v2221 = vpop.f32.mrb[0].mxu0
    %v2222 = vadd.f32 %v2109, %v2221
    %v2223 = vpop.f32.mrb[0].mxu0
    %v2224 = vadd.f32 %v2111, %v2223
    %2225 = vdwg.mxu0
    %2226 = vmatprep.subr.bf16.mxu0 %v1213
    %2227 = vmatpush1.bf16.msra.mxu0 %v1212
    %2228 = vmatprep.subr.bf16.mxu0 0
    %2229 = vmatpush1.bf16.msra.mxu0 0
    %2230 = vmatprep.subr.bf16.mxu0 0
    %2231 = vmatpush1.bf16.msra.mxu0 0
    %2232 = vmatprep.subr.bf16.mxu0 0
    %2233 = vmatpush1.bf16.msra.mxu0 0
    %2234 = vmatprep.subr.bf16.mxu0 0
    %2235 = vmatpush1.bf16.msra.mxu0 0
    %2236 = vmatprep.subr.bf16.mxu0 0
    %2237 = vmatpush1.bf16.msra.mxu0 0
    %2238 = vmatprep.subr.bf16.mxu0 0
    %2239 = vmatpush1.bf16.msra.mxu0 0
    %2240 = vmatprep.subr.bf16.mxu0 0
    %2241 = vmatpush1.bf16.msra.mxu0 0
    %2242 = vmatprep.subr.bf16.mxu0 0
    %2243 = vmatpush1.bf16.msra.mxu0 0
    %2244 = vmatprep.subr.bf16.mxu0 0
    %2245 = vmatpush1.bf16.msra.mxu0 0
    %2246 = vmatprep.subr.bf16.mxu0 0
    %2247 = vmatpush1.bf16.msra.mxu0 0
    %2248 = vmatprep.subr.bf16.mxu0 0
    %2249 = vmatpush1.bf16.msra.mxu0 0
    %2250 = vmatprep.subr.bf16.mxu0 0
    %2251 = vmatpush1.bf16.msra.mxu0 0
    %2252 = vmatprep.subr.bf16.mxu0 0
    %2253 = vmatpush1.bf16.msra.mxu0 0
    %2254 = vmatprep.subr.bf16.mxu0 0
    %2255 = vmatpush1.bf16.msra.mxu0 0
    %2256 = vmatprep.subr.bf16.mxu0 0
    %2257 = vmatpush1.bf16.msra.mxu0 0
    %2258 = vmatprep.mubr.bf16.mxu0 0
    %2259 = vmatmul.mubr.bf16.gmra.mrb[0].mxu0 %v1412
    %v2260 = vpop.f32.mrb[0].mxu0
    %v2261 = vadd.f32 %v2148, %v2260
    %v2262 = vpop.f32.mrb[0].mxu0
    %v2263 = vadd.f32 %v2150, %v2262
    %v2264 = vpop.f32.mrb[0].mxu0
    %v2265 = vadd.f32 %v2152, %v2264
    %v2266 = vpop.f32.mrb[0].mxu0
    %v2267 = vadd.f32 %v2154, %v2266
    %2268 = vmatprep.mubr.bf16.mxu0 0
    %2269 = vmatmul.mubr.bf16.gmra.mrb[0].mxu0 %v1415
    %v2270 = vpop.f32.mrb[0].mxu0
    %v2271 = vadd.f32 %v2158, %v2270
    %v2272 = vpop.f32.mrb[0].mxu0
    %v2273 = vadd.f32 %v2160, %v2272
    %v2274 = vpop.f32.mrb[0].mxu0
    %v2275 = vadd.f32 %v2162, %v2274
    %v2276 = vpop.f32.mrb[0].mxu0
    %v2277 = vadd.f32 %v2164, %v2276
    %2278 = vmatprep.mubr.bf16.mxu0 0
    %2279 = vmatmul.mubr.bf16.gmra.mrb[0].mxu0 %v1418
    %v2280 = vpop.f32.mrb[0].mxu0
    %v2281 = vadd.f32 %v2168, %v2280
    %v2282 = vpop.f32.mrb[0].mxu0
    %v2283 = vadd.f32 %v2170, %v2282
    %v2284 = vpop.f32.mrb[0].mxu0
    %v2285 = vadd.f32 %v2172, %v2284
    %v2286 = vpop.f32.mrb[0].mxu0
    %v2287 = vadd.f32 %v2174, %v2286
    %2288 = vmatprep.mubr.bf16.mxu0 0
    %2289 = vmatmul.mubr.bf16.gmra.mrb[0].mxu0 %v1421
    %v2290 = vpop.f32.mrb[0].mxu0
    %v2291 = vadd.f32 %v2178, %v2290
    %v2292 = vpop.f32.mrb[0].mxu0
    %v2293 = vadd.f32 %v2180, %v2292
    %v2294 = vpop.f32.mrb[0].mxu0
    %v2295 = vadd.f32 %v2182, %v2294
    %v2296 = vpop.f32.mrb[0].mxu0
    %v2297 = vadd.f32 %v2184, %v2296
    %2298 = vmatprep.mubr.bf16.mxu0 0
    %2299 = vmatmul.mubr.bf16.gmra.mrb[0].mxu0 %v1424
    %v2300 = vpop.f32.mrb[0].mxu0
    %v2301 = vadd.f32 %v2188, %v2300
    %v2302 = vpop.f32.mrb[0].mxu0
    %v2303 = vadd.f32 %v2190, %v2302
    %v2304 = vpop.f32.mrb[0].mxu0
    %v2305 = vadd.f32 %v2192, %v2304
    %v2306 = vpop.f32.mrb[0].mxu0
    %v2307 = vadd.f32 %v2194, %v2306
    %2308 = vmatprep.mubr.bf16.mxu0 0
    %2309 = vmatmul.mubr.bf16.gmra.mrb[0].mxu0 %v1427
    %v2310 = vpop.f32.mrb[0].mxu0
    %v2311 = vadd.f32 %v2198, %v2310
    %v2312 = vpop.f32.mrb[0].mxu0
    %v2313 = vadd.f32 %v2200, %v2312
    %v2314 = vpop.f32.mrb[0].mxu0
    %v2315 = vadd.f32 %v2202, %v2314
    %v2316 = vpop.f32.mrb[0].mxu0
    %v2317 = vadd.f32 %v2204, %v2316
    %2318 = vmatprep.mubr.bf16.mxu0 0
    %2319 = vmatmul.mubr.bf16.gmra.mrb[0].mxu0 %v1430
    %v2320 = vpop.f32.mrb[0].mxu0
    %v2321 = vadd.f32 %v2208, %v2320
    %v2322 = vpop.f32.mrb[0].mxu0
    %v2323 = vadd.f32 %v2210, %v2322
    %v2324 = vpop.f32.mrb[0].mxu0
    %v2325 = vadd.f32 %v2212, %v2324
    %v2326 = vpop.f32.mrb[0].mxu0
    %v2327 = vadd.f32 %v2214, %v2326
    %2328 = vmatprep.mubr.bf16.mxu0 0
    %2329 = vmatmul.mubr.bf16.gmra.mrb[0].mxu0 %v1433
    %v2330 = vpop.f32.mrb[0].mxu0
    %v2331 = vadd.f32 %v2218, %v2330
    %v2332 = vpop.f32.mrb[0].mxu0
    %v2333 = vadd.f32 %v2220, %v2332
    %v2334 = vpop.f32.mrb[0].mxu0
    %v2335 = vadd.f32 %v2222, %v2334
    %v2336 = vpop.f32.mrb[0].mxu0
    %v2337 = vadd.f32 %v2224, %v2336
    %2338 = vdwg.mxu0
    %vm2339 = vcmp.gt.f32.partialorder %v1809, 0.0
    %vm2340 = vcmp.gt.f32.partialorder %v1811, 0.0
    %vm2341 = vcmp.gt.f32.partialorder %v2261, 0.0
    %vm2342 = vcmp.gt.f32.partialorder %v2263, 0.0
    %vm2343 = vcmp.gt.f32.partialorder %v1813, 0.0
    %vm2344 = vcmp.gt.f32.partialorder %v1815, 0.0
    %vm2345 = vcmp.gt.f32.partialorder %v2265, 0.0
    %vm2346 = vcmp.gt.f32.partialorder %v2267, 0.0
    %vm2347 = vcmp.gt.f32.partialorder %v1819, 0.0
    %vm2348 = vcmp.gt.f32.partialorder %v1821, 0.0
    %vm2349 = vcmp.gt.f32.partialorder %v2271, 0.0
    %vm2350 = vcmp.gt.f32.partialorder %v2273, 0.0
    %vm2351 = vcmp.gt.f32.partialorder %v1823, 0.0
    %vm2352 = vcmp.gt.f32.partialorder %v1825, 0.0
    %vm2353 = vcmp.gt.f32.partialorder %v2275, 0.0
    %vm2354 = vcmp.gt.f32.partialorder %v2277, 0.0
    %vm2355 = vcmp.gt.f32.partialorder %v1829, 0.0
    %vm2356 = vcmp.gt.f32.partialorder %v1831, 0.0
    %vm2357 = vcmp.gt.f32.partialorder %v2281, 0.0
    %vm2358 = vcmp.gt.f32.partialorder %v2283, 0.0
    %vm2359 = vcmp.gt.f32.partialorder %v1833, 0.0
    %vm2360 = vcmp.gt.f32.partialorder %v1835, 0.0
    %vm2361 = vcmp.gt.f32.partialorder %v2285, 0.0
    %vm2362 = vcmp.gt.f32.partialorder %v2287, 0.0
    %vm2363 = vcmp.gt.f32.partialorder %v1839, 0.0
    %vm2364 = vcmp.gt.f32.partialorder %v1841, 0.0
    %vm2365 = vcmp.gt.f32.partialorder %v2291, 0.0
    %vm2366 = vcmp.gt.f32.partialorder %v2293, 0.0
    %vm2367 = vcmp.gt.f32.partialorder %v1843, 0.0
    %vm2368 = vcmp.gt.f32.partialorder %v1845, 0.0
    %vm2369 = vcmp.gt.f32.partialorder %v2295, 0.0
    %vm2370 = vcmp.gt.f32.partialorder %v2297, 0.0
    %vm2371 = vcmp.gt.f32.partialorder %v1849, 0.0
    %vm2372 = vcmp.gt.f32.partialorder %v1851, 0.0
    %vm2373 = vcmp.gt.f32.partialorder %v2301, 0.0
    %vm2374 = vcmp.gt.f32.partialorder %v2303, 0.0
    %vm2375 = vcmp.gt.f32.partialorder %v1853, 0.0
    %vm2376 = vcmp.gt.f32.partialorder %v1855, 0.0
    %vm2377 = vcmp.gt.f32.partialorder %v2305, 0.0
    %vm2378 = vcmp.gt.f32.partialorder %v2307, 0.0
    %vm2379 = vcmp.gt.f32.partialorder %v1859, 0.0
    %vm2380 = vcmp.gt.f32.partialorder %v1861, 0.0
    %vm2381 = vcmp.gt.f32.partialorder %v2311, 0.0
    %vm2382 = vcmp.gt.f32.partialorder %v2313, 0.0
    %vm2383 = vcmp.gt.f32.partialorder %v1863, 0.0
    %vm2384 = vcmp.gt.f32.partialorder %v1865, 0.0
    %vm2385 = vcmp.gt.f32.partialorder %v2315, 0.0
    %vm2386 = vcmp.gt.f32.partialorder %v2317, 0.0
    %vm2387 = vcmp.gt.f32.partialorder %v1869, 0.0
    %vm2388 = vcmp.gt.f32.partialorder %v1871, 0.0
    %vm2389 = vcmp.gt.f32.partialorder %v2321, 0.0
    %vm2390 = vcmp.gt.f32.partialorder %v2323, 0.0
    %vm2391 = vcmp.gt.f32.partialorder %v1873, 0.0
    %vm2392 = vcmp.gt.f32.partialorder %v1875, 0.0
    %vm2393 = vcmp.gt.f32.partialorder %v2325, 0.0
    %vm2394 = vcmp.gt.f32.partialorder %v2327, 0.0
    %vm2395 = vcmp.gt.f32.partialorder %v1879, 0.0
    %vm2396 = vcmp.gt.f32.partialorder %v1881, 0.0
    %vm2397 = vcmp.gt.f32.partialorder %v2331, 0.0
    %vm2398 = vcmp.gt.f32.partialorder %v2333, 0.0
    %vm2399 = vcmp.gt.f32.partialorder %v1883, 0.0
    %vm2400 = vcmp.gt.f32.partialorder %v1885, 0.0
    %vm2401 = vcmp.gt.f32.partialorder %v2335, 0.0
    %vm2402 = vcmp.gt.f32.partialorder %v2337, 0.0
    %v2403 = vmul.f32 %v1809, 0.2
    %v2404 = vmul.f32 %v1811, 0.2
    %v2405 = vmul.f32 %v2261, 0.2
    %v2406 = vmul.f32 %v2263, 0.2
    %v2407 = vmul.f32 %v1813, 0.2
    %v2408 = vmul.f32 %v1815, 0.2
    %v2409 = vmul.f32 %v2265, 0.2
    %v2410 = vmul.f32 %v2267, 0.2
    %v2411 = vmul.f32 %v1819, 0.2
    %v2412 = vmul.f32 %v1821, 0.2
    %v2413 = vmul.f32 %v2271, 0.2
    %v2414 = vmul.f32 %v2273, 0.2
    %v2415 = vmul.f32 %v1823, 0.2
    %v2416 = vmul.f32 %v1825, 0.2
    %v2417 = vmul.f32 %v2275, 0.2
    %v2418 = vmul.f32 %v2277, 0.2
    %v2419 = vmul.f32 %v1829, 0.2
    %v2420 = vmul.f32 %v1831, 0.2
    %v2421 = vmul.f32 %v2281, 0.2
    %v2422 = vmul.f32 %v2283, 0.2
    %v2423 = vmul.f32 %v1833, 0.2
    %v2424 = vmul.f32 %v1835, 0.2
    %v2425 = vmul.f32 %v2285, 0.2
    %v2426 = vmul.f32 %v2287, 0.2
    %v2427 = vmul.f32 %v1839, 0.2
    %v2428 = vmul.f32 %v1841, 0.2
    %v2429 = vmul.f32 %v2291, 0.2
    %v2430 = vmul.f32 %v2293, 0.2
    %v2431 = vmul.f32 %v1843, 0.2
    %v2432 = vmul.f32 %v1845, 0.2
    %v2433 = vmul.f32 %v2295, 0.2
    %v2434 = vmul.f32 %v2297, 0.2
    %v2435 = vmul.f32 %v1849, 0.2
    %v2436 = vmul.f32 %v1851, 0.2
    %v2437 = vmul.f32 %v2301, 0.2
    %v2438 = vmul.f32 %v2303, 0.2
    %v2439 = vmul.f32 %v1853, 0.2
    %v2440 = vmul.f32 %v1855, 0.2
    %v2441 = vmul.f32 %v2305, 0.2
    %v2442 = vmul.f32 %v2307, 0.2
    %v2443 = vmul.f32 %v1859, 0.2
    %v2444 = vmul.f32 %v1861, 0.2
    %v2445 = vmul.f32 %v2311, 0.2
    %v2446 = vmul.f32 %v2313, 0.2
    %v2447 = vmul.f32 %v1863, 0.2
    %v2448 = vmul.f32 %v1865, 0.2
    %v2449 = vmul.f32 %v2315, 0.2
    %v2450 = vmul.f32 %v2317, 0.2
    %v2451 = vmul.f32 %v1869, 0.2
    %v2452 = vmul.f32 %v1871, 0.2
    %v2453 = vmul.f32 %v2321, 0.2
    %v2454 = vmul.f32 %v2323, 0.2
    %v2455 = vmul.f32 %v1873, 0.2
    %v2456 = vmul.f32 %v1875, 0.2
    %v2457 = vmul.f32 %v2325, 0.2
    %v2458 = vmul.f32 %v2327, 0.2
    %v2459 = vmul.f32 %v1879, 0.2
    %v2460 = vmul.f32 %v1881, 0.2
    %v2461 = vmul.f32 %v2331, 0.2
    %v2462 = vmul.f32 %v2333, 0.2
    %v2463 = vmul.f32 %v1883, 0.2
    %v2464 = vmul.f32 %v1885, 0.2
    %v2465 = vmul.f32 %v2335, 0.2
    %v2466 = vmul.f32 %v2337, 0.2
    %v2467 = vsel %vm2339, %v1809, %v2403
    %v2468 = vsel %vm2340, %v1811, %v2404
    %v2469 = vsel %vm2341, %v2261, %v2405
    %v2470 = vsel %vm2342, %v2263, %v2406
    %v2471 = vsel %vm2343, %v1813, %v2407
    %v2472 = vsel %vm2344, %v1815, %v2408
    %v2473 = vsel %vm2345, %v2265, %v2409
    %v2474 = vsel %vm2346, %v2267, %v2410
    %v2475 = vsel %vm2347, %v1819, %v2411
    %v2476 = vsel %vm2348, %v1821, %v2412
    %v2477 = vsel %vm2349, %v2271, %v2413
    %v2478 = vsel %vm2350, %v2273, %v2414
    %v2479 = vsel %vm2351, %v1823, %v2415
    %v2480 = vsel %vm2352, %v1825, %v2416
    %v2481 = vsel %vm2353, %v2275, %v2417
    %v2482 = vsel %vm2354, %v2277, %v2418
    %v2483 = vsel %vm2355, %v1829, %v2419
    %v2484 = vsel %vm2356, %v1831, %v2420
    %v2485 = vsel %vm2357, %v2281, %v2421
    %v2486 = vsel %vm2358, %v2283, %v2422
    %v2487 = vsel %vm2359, %v1833, %v2423
    %v2488 = vsel %vm2360, %v1835, %v2424
    %v2489 = vsel %vm2361, %v2285, %v2425
    %v2490 = vsel %vm2362, %v2287, %v2426
    %v2491 = vsel %vm2363, %v1839, %v2427
    %v2492 = vsel %vm2364, %v1841, %v2428
    %v2493 = vsel %vm2365, %v2291, %v2429
    %v2494 = vsel %vm2366, %v2293, %v2430
    %v2495 = vsel %vm2367, %v1843, %v2431
    %v2496 = vsel %vm2368, %v1845, %v2432
    %v2497 = vsel %vm2369, %v2295, %v2433
    %v2498 = vsel %vm2370, %v2297, %v2434
    %v2499 = vsel %vm2371, %v1849, %v2435
    %v2500 = vsel %vm2372, %v1851, %v2436
    %v2501 = vsel %vm2373, %v2301, %v2437
    %v2502 = vsel %vm2374, %v2303, %v2438
    %v2503 = vsel %vm2375, %v1853, %v2439
    %v2504 = vsel %vm2376, %v1855, %v2440
    %v2505 = vsel %vm2377, %v2305, %v2441
    %v2506 = vsel %vm2378, %v2307, %v2442
    %v2507 = vsel %vm2379, %v1859, %v2443
    %v2508 = vsel %vm2380, %v1861, %v2444
    %v2509 = vsel %vm2381, %v2311, %v2445
    %v2510 = vsel %vm2382, %v2313, %v2446
    %v2511 = vsel %vm2383, %v1863, %v2447
    %v2512 = vsel %vm2384, %v1865, %v2448
    %v2513 = vsel %vm2385, %v2315, %v2449
    %v2514 = vsel %vm2386, %v2317, %v2450
    %v2515 = vsel %vm2387, %v1869, %v2451
    %v2516 = vsel %vm2388, %v1871, %v2452
    %v2517 = vsel %vm2389, %v2321, %v2453
    %v2518 = vsel %vm2390, %v2323, %v2454
    %v2519 = vsel %vm2391, %v1873, %v2455
    %v2520 = vsel %vm2392, %v1875, %v2456
    %v2521 = vsel %vm2393, %v2325, %v2457
    %v2522 = vsel %vm2394, %v2327, %v2458
    %v2523 = vsel %vm2395, %v1879, %v2459
    %v2524 = vsel %vm2396, %v1881, %v2460
    %v2525 = vsel %vm2397, %v2331, %v2461
    %v2526 = vsel %vm2398, %v2333, %v2462
    %v2527 = vsel %vm2399, %v1883, %v2463
    %v2528 = vsel %vm2400, %v1885, %v2464
    %v2529 = vsel %vm2401, %v2335, %v2465
    %v2530 = vsel %vm2402, %v2337, %v2466
    %v2531 = vpack.c.bf16 %v2471, %v2467
    %v2532 = vpack.c.bf16 %v2472, %v2468
    %v2533 = vpack.c.bf16 %v2473, %v2469
    %v2534 = vpack.c.bf16 %v2474, %v2470
    %v2535 = vpack.c.bf16 %v2479, %v2475
    %v2536 = vpack.c.bf16 %v2480, %v2476
    %v2537 = vpack.c.bf16 %v2481, %v2477
    %v2538 = vpack.c.bf16 %v2482, %v2478
    %v2539 = vpack.c.bf16 %v2487, %v2483
    %v2540 = vpack.c.bf16 %v2488, %v2484
    %v2541 = vpack.c.bf16 %v2489, %v2485
    %v2542 = vpack.c.bf16 %v2490, %v2486
    %v2543 = vpack.c.bf16 %v2495, %v2491
    %v2544 = vpack.c.bf16 %v2496, %v2492
    %v2545 = vpack.c.bf16 %v2497, %v2493
    %v2546 = vpack.c.bf16 %v2498, %v2494
    %v2547 = vpack.c.bf16 %v2503, %v2499
    %v2548 = vpack.c.bf16 %v2504, %v2500
    %v2549 = vpack.c.bf16 %v2505, %v2501
    %v2550 = vpack.c.bf16 %v2506, %v2502
    %v2551 = vpack.c.bf16 %v2511, %v2507
    %v2552 = vpack.c.bf16 %v2512, %v2508
    %v2553 = vpack.c.bf16 %v2513, %v2509
    %v2554 = vpack.c.bf16 %v2514, %v2510
    %v2555 = vpack.c.bf16 %v2519, %v2515
    %v2556 = vpack.c.bf16 %v2520, %v2516
    %v2557 = vpack.c.bf16 %v2521, %v2517
    %v2558 = vpack.c.bf16 %v2522, %v2518
    %v2559 = vpack.c.bf16 %v2527, %v2523
    %v2560 = vpack.c.bf16 %v2528, %v2524
    %v2561 = vpack.c.bf16 %v2529, %v2525
    %v2562 = vpack.c.bf16 %v2530, %v2526
    %v2563 = vld [vmem:[#allocation3] sm:$0xff]
    %v2564 = vld [vmem:[#allocation3 + $0x8] sm:$0xff]
    %v2565 = vld [vmem:[#allocation3 + $0x10] sm:$0xff]
    %v2566 = vld [vmem:[#allocation3 + $0x18] sm:$0xff]
    %v2567 = vld [vmem:[#allocation3 + $0x20] sm:$0xff]
    %v2568 = vld [vmem:[#allocation3 + $0x28] sm:$0xff]
    %v2569 = vld [vmem:[#allocation3 + $0x30] sm:$0xff]
    %v2570 = vld [vmem:[#allocation3 + $0x38] sm:$0xff]
    %v2571 = vld [vmem:[#allocation3 + $0x40] sm:$0xff]
    %v2572 = vld [vmem:[#allocation3 + $0x48] sm:$0xff]
    %v2573 = vld [vmem:[#allocation3 + $0x50] sm:$0xff]
    %v2574 = vld [vmem:[#allocation3 + $0x58] sm:$0xff]
    %v2575 = vld [vmem:[#allocation3 + $0x60] sm:$0xff]
    %v2576 = vld [vmem:[#allocation3 + $0x68] sm:$0xff]
    %v2577 = vld [vmem:[#allocation3 + $0x70] sm:$0xff]
    %v2578 = vld [vmem:[#allocation3 + $0x78] sm:$0xff]
    %v2579 = vld [vmem:[#allocation3 + $0x80] sm:$0xff]
    %v2580 = vld [vmem:[#allocation3 + $0x88] sm:$0xff]
    %v2581 = vld [vmem:[#allocation3 + $0x90] sm:$0xff]
    %v2582 = vld [vmem:[#allocation3 + $0x98] sm:$0xff]
    %v2583 = vld [vmem:[#allocation3 + $0xa0] sm:$0xff]
    %v2584 = vld [vmem:[#allocation3 + $0xa8] sm:$0xff]
    %v2585 = vld [vmem:[#allocation3 + $0xb0] sm:$0xff]
    %v2586 = vld [vmem:[#allocation3 + $0xb8] sm:$0xff]
    %v2587 = vld [vmem:[#allocation3 + $0xc0] sm:$0xff]
    %v2588 = vld [vmem:[#allocation3 + $0xc8] sm:$0xff]
    %v2589 = vld [vmem:[#allocation3 + $0xd0] sm:$0xff]
    %v2590 = vld [vmem:[#allocation3 + $0xd8] sm:$0xff]
    %v2591 = vld [vmem:[#allocation3 + $0xe0] sm:$0xff]
    %v2592 = vld [vmem:[#allocation3 + $0xe8] sm:$0xff]
    %v2593 = vld [vmem:[#allocation3 + $0xf0] sm:$0xff]
    %v2594 = vld [vmem:[#allocation3 + $0xf8] sm:$0xff]
    %v2595 = vld [vmem:[#allocation3 + $0x100] sm:$0xff]
    %v2596 = vld [vmem:[#allocation3 + $0x108] sm:$0xff]
    %v2597 = vld [vmem:[#allocation3 + $0x110] sm:$0xff]
    %v2598 = vld [vmem:[#allocation3 + $0x118] sm:$0xff]
    %v2599 = vld [vmem:[#allocation3 + $0x120] sm:$0xff]
    %v2600 = vld [vmem:[#allocation3 + $0x128] sm:$0xff]
    %v2601 = vld [vmem:[#allocation3 + $0x130] sm:$0xff]
    %v2602 = vld [vmem:[#allocation3 + $0x138] sm:$0xff]
    %v2603 = vld [vmem:[#allocation3 + $0x140] sm:$0xff]
    %v2604 = vld [vmem:[#allocation3 + $0x148] sm:$0xff]
    %v2605 = vld [vmem:[#allocation3 + $0x150] sm:$0xff]
    %v2606 = vld [vmem:[#allocation3 + $0x158] sm:$0xff]
    %v2607 = vld [vmem:[#allocation3 + $0x160] sm:$0xff]
    %v2608 = vld [vmem:[#allocation3 + $0x168] sm:$0xff]
    %v2609 = vld [vmem:[#allocation3 + $0x170] sm:$0xff]
    %v2610 = vld [vmem:[#allocation3 + $0x178] sm:$0xff]
    %v2611 = vld [vmem:[#allocation3 + $0x180] sm:$0xff]
    %v2612 = vld [vmem:[#allocation3 + $0x188] sm:$0xff]
    %v2613 = vld [vmem:[#allocation3 + $0x190] sm:$0xff]
    %v2614 = vld [vmem:[#allocation3 + $0x198] sm:$0xff]
    %v2615 = vld [vmem:[#allocation3 + $0x1a0] sm:$0xff]
    %v2616 = vld [vmem:[#allocation3 + $0x1a8] sm:$0xff]
    %v2617 = vld [vmem:[#allocation3 + $0x1b0] sm:$0xff]
    %v2618 = vld [vmem:[#allocation3 + $0x1b8] sm:$0xff]
    %v2619 = vld [vmem:[#allocation3 + $0x1c0] sm:$0xff]
    %v2620 = vld [vmem:[#allocation3 + $0x1c8] sm:$0xff]
    %v2621 = vld [vmem:[#allocation3 + $0x1d0] sm:$0xff]
    %v2622 = vld [vmem:[#allocation3 + $0x1d8] sm:$0xff]
    %v2623 = vld [vmem:[#allocation3 + $0x1e0] sm:$0xff]
    %v2624 = vld [vmem:[#allocation3 + $0x1e8] sm:$0xff]
    %v2625 = vld [vmem:[#allocation3 + $0x1f0] sm:$0xff]
    %v2626 = vld [vmem:[#allocation3 + $0x1f8] sm:$0xff]
    %v2627 = vld [vmem:[%s4] sm:$0x3]
    %v2629 = vlaneseq
    %v2630 = vshrl.u32 %v2629, 7
    %v2631 = vsub.s32 0, %v2630
    %v2632 = vrot.slane %v2627, %v2631
    %v2633 = vlaneseq
    %v2634 = vshrl.u32 %v2633, 7
    %v2635 = vsub.s32 1, %v2634
    %v2636 = vrot.slane %v2627, %v2635
    %v2703 = vunpack.c.l.b16 %v2563
    %v2704 = vunpack.c.h.b16 %v2563
    %v2705 = vunpack.c.l.b16 %v2564
    %v2706 = vunpack.c.h.b16 %v2564
    %v2707 = vunpack.c.l.b16 %v2565
    %v2708 = vunpack.c.h.b16 %v2565
    %v2709 = vunpack.c.l.b16 %v2566
    %v2710 = vunpack.c.h.b16 %v2566
    %v2711 = vunpack.c.l.b16 %v2567
    %v2712 = vunpack.c.h.b16 %v2567
    %v2713 = vunpack.c.l.b16 %v2568
    %v2714 = vunpack.c.h.b16 %v2568
    %v2715 = vunpack.c.l.b16 %v2569
    %v2716 = vunpack.c.h.b16 %v2569
    %v2717 = vunpack.c.l.b16 %v2570
    %v2718 = vunpack.c.h.b16 %v2570
    %v2719 = vunpack.c.l.b16 %v2571
    %v2720 = vunpack.c.h.b16 %v2571
    %v2721 = vunpack.c.l.b16 %v2572
    %v2722 = vunpack.c.h.b16 %v2572
    %v2723 = vunpack.c.l.b16 %v2573
    %v2724 = vunpack.c.h.b16 %v2573
    %v2725 = vunpack.c.l.b16 %v2574
    %v2726 = vunpack.c.h.b16 %v2574
    %v2727 = vunpack.c.l.b16 %v2575
    %v2728 = vunpack.c.h.b16 %v2575
    %v2729 = vunpack.c.l.b16 %v2576
    %v2730 = vunpack.c.h.b16 %v2576
    %v2731 = vunpack.c.l.b16 %v2577
    %v2732 = vunpack.c.h.b16 %v2577
    %v2733 = vunpack.c.l.b16 %v2578
    %v2734 = vunpack.c.h.b16 %v2578
    %v2735 = vunpack.c.l.b16 %v2579
    %v2736 = vunpack.c.h.b16 %v2579
    %v2737 = vunpack.c.l.b16 %v2580
    %v2738 = vunpack.c.h.b16 %v2580
    %v2739 = vunpack.c.l.b16 %v2581
    %v2740 = vunpack.c.h.b16 %v2581
    %v2741 = vunpack.c.l.b16 %v2582
    %v2742 = vunpack.c.h.b16 %v2582
    %v2743 = vunpack.c.l.b16 %v2583
    %v2744 = vunpack.c.h.b16 %v2583
    %v2745 = vunpack.c.l.b16 %v2584
    %v2746 = vunpack.c.h.b16 %v2584
    %v2747 = vunpack.c.l.b16 %v2585
    %v2748 = vunpack.c.h.b16 %v2585
    %v2749 = vunpack.c.l.b16 %v2586
    %v2750 = vunpack.c.h.b16 %v2586
    %v2751 = vunpack.c.l.b16 %v2587
    %v2752 = vunpack.c.h.b16 %v2587
    %v2753 = vunpack.c.l.b16 %v2588
    %v2754 = vunpack.c.h.b16 %v2588
    %v2755 = vunpack.c.l.b16 %v2589
    %v2756 = vunpack.c.h.b16 %v2589
    %v2757 = vunpack.c.l.b16 %v2590
    %v2758 = vunpack.c.h.b16 %v2590
    %v2759 = vunpack.c.l.b16 %v2591
    %v2760 = vunpack.c.h.b16 %v2591
    %v2761 = vunpack.c.l.b16 %v2592
    %v2762 = vunpack.c.h.b16 %v2592
    %v2763 = vunpack.c.l.b16 %v2593
    %v2764 = vunpack.c.h.b16 %v2593
    %v2765 = vunpack.c.l.b16 %v2594
    %v2766 = vunpack.c.h.b16 %v2594
    %v2767 = vunpack.c.l.b16 %v2595
    %v2768 = vunpack.c.h.b16 %v2595
    %v2769 = vunpack.c.l.b16 %v2596
    %v2770 = vunpack.c.h.b16 %v2596
    %v2771 = vunpack.c.l.b16 %v2597
    %v2772 = vunpack.c.h.b16 %v2597
    %v2773 = vunpack.c.l.b16 %v2598
    %v2774 = vunpack.c.h.b16 %v2598
    %v2775 = vunpack.c.l.b16 %v2599
    %v2776 = vunpack.c.h.b16 %v2599
    %v2777 = vunpack.c.l.b16 %v2600
    %v2778 = vunpack.c.h.b16 %v2600
    %v2779 = vunpack.c.l.b16 %v2601
    %v2780 = vunpack.c.h.b16 %v2601
    %v2781 = vunpack.c.l.b16 %v2602
    %v2782 = vunpack.c.h.b16 %v2602
    %v2783 = vunpack.c.l.b16 %v2603
    %v2784 = vunpack.c.h.b16 %v2603
    %v2785 = vunpack.c.l.b16 %v2604
    %v2786 = vunpack.c.h.b16 %v2604
    %v2787 = vunpack.c.l.b16 %v2605
    %v2788 = vunpack.c.h.b16 %v2605
    %v2789 = vunpack.c.l.b16 %v2606
    %v2790 = vunpack.c.h.b16 %v2606
    %v2791 = vunpack.c.l.b16 %v2607
    %v2792 = vunpack.c.h.b16 %v2607
    %v2793 = vunpack.c.l.b16 %v2608
    %v2794 = vunpack.c.h.b16 %v2608
    %v2795 = vunpack.c.l.b16 %v2609
    %v2796 = vunpack.c.h.b16 %v2609
    %v2797 = vunpack.c.l.b16 %v2610
    %v2798 = vunpack.c.h.b16 %v2610
    %v2799 = vunpack.c.l.b16 %v2611
    %v2800 = vunpack.c.h.b16 %v2611
    %v2801 = vunpack.c.l.b16 %v2612
    %v2802 = vunpack.c.h.b16 %v2612
    %v2803 = vunpack.c.l.b16 %v2613
    %v2804 = vunpack.c.h.b16 %v2613
    %v2805 = vunpack.c.l.b16 %v2614
    %v2806 = vunpack.c.h.b16 %v2614
    %v2807 = vunpack.c.l.b16 %v2615
    %v2808 = vunpack.c.h.b16 %v2615
    %v2809 = vunpack.c.l.b16 %v2616
    %v2810 = vunpack.c.h.b16 %v2616
    %v2811 = vunpack.c.l.b16 %v2617
    %v2812 = vunpack.c.h.b16 %v2617
    %v2813 = vunpack.c.l.b16 %v2618
    %v2814 = vunpack.c.h.b16 %v2618
    %v2815 = vunpack.c.l.b16 %v2619
    %v2816 = vunpack.c.h.b16 %v2619
    %v2817 = vunpack.c.l.b16 %v2620
    %v2818 = vunpack.c.h.b16 %v2620
    %v2819 = vunpack.c.l.b16 %v2621
    %v2820 = vunpack.c.h.b16 %v2621
    %v2821 = vunpack.c.l.b16 %v2622
    %v2822 = vunpack.c.h.b16 %v2622
    %v2823 = vunpack.c.l.b16 %v2623
    %v2824 = vunpack.c.h.b16 %v2623
    %v2825 = vunpack.c.l.b16 %v2624
    %v2826 = vunpack.c.h.b16 %v2624
    %v2827 = vunpack.c.l.b16 %v2625
    %v2828 = vunpack.c.h.b16 %v2625
    %v2829 = vunpack.c.l.b16 %v2626
    %v2830 = vunpack.c.h.b16 %v2626
    %v2831 = vpack.c.b16 %v2705, %v2703
    %v2832 = vpack.c.b16 %v2706, %v2704
    %v2833 = vpack.c.b16 %v2709, %v2707
    %v2834 = vpack.c.b16 %v2710, %v2708
    %v2835 = vpack.c.b16 %v2713, %v2711
    %v2836 = vpack.c.b16 %v2714, %v2712
    %v2837 = vpack.c.b16 %v2717, %v2715
    %v2838 = vpack.c.b16 %v2718, %v2716
    %v2839 = vpack.c.b16 %v2721, %v2719
    %v2840 = vpack.c.b16 %v2722, %v2720
    %v2841 = vpack.c.b16 %v2725, %v2723
    %v2842 = vpack.c.b16 %v2726, %v2724
    %v2843 = vpack.c.b16 %v2729, %v2727
    %v2844 = vpack.c.b16 %v2730, %v2728
    %v2845 = vpack.c.b16 %v2733, %v2731
    %v2846 = vpack.c.b16 %v2734, %v2732
    %v2847 = vpack.c.b16 %v2737, %v2735
    %v2848 = vpack.c.b16 %v2738, %v2736
    %v2849 = vpack.c.b16 %v2741, %v2739
    %v2850 = vpack.c.b16 %v2742, %v2740
    %v2851 = vpack.c.b16 %v2745, %v2743
    %v2852 = vpack.c.b16 %v2746, %v2744
    %v2853 = vpack.c.b16 %v2749, %v2747
    %v2854 = vpack.c.b16 %v2750, %v2748
    %v2855 = vpack.c.b16 %v2753, %v2751
    %v2856 = vpack.c.b16 %v2754, %v2752
    %v2857 = vpack.c.b16 %v2757, %v2755
    %v2858 = vpack.c.b16 %v2758, %v2756
    %v2859 = vpack.c.b16 %v2761, %v2759
    %v2860 = vpack.c.b16 %v2762, %v2760
    %v2861 = vpack.c.b16 %v2765, %v2763
    %v2862 = vpack.c.b16 %v2766, %v2764
    %v2863 = vpack.c.b16 %v2769, %v2767
    %v2864 = vpack.c.b16 %v2770, %v2768
    %v2865 = vpack.c.b16 %v2773, %v2771
    %v2866 = vpack.c.b16 %v2774, %v2772
    %v2867 = vpack.c.b16 %v2777, %v2775
    %v2868 = vpack.c.b16 %v2778, %v2776
    %v2869 = vpack.c.b16 %v2781, %v2779
    %v2870 = vpack.c.b16 %v2782, %v2780
    %v2871 = vpack.c.b16 %v2785, %v2783
    %v2872 = vpack.c.b16 %v2786, %v2784
    %v2873 = vpack.c.b16 %v2789, %v2787
    %v2874 = vpack.c.b16 %v2790, %v2788
    %v2875 = vpack.c.b16 %v2793, %v2791
    %v2876 = vpack.c.b16 %v2794, %v2792
    %v2877 = vpack.c.b16 %v2797, %v2795
    %v2878 = vpack.c.b16 %v2798, %v2796
    %v2879 = vpack.c.b16 %v2801, %v2799
    %v2880 = vpack.c.b16 %v2802, %v2800
    %v2881 = vpack.c.b16 %v2805, %v2803
    %v2882 = vpack.c.b16 %v2806, %v2804
    %v2883 = vpack.c.b16 %v2809, %v2807
    %v2884 = vpack.c.b16 %v2810, %v2808
    %v2885 = vpack.c.b16 %v2813, %v2811
    %v2886 = vpack.c.b16 %v2814, %v2812
    %v2887 = vpack.c.b16 %v2817, %v2815
    %v2888 = vpack.c.b16 %v2818, %v2816
    %v2889 = vpack.c.b16 %v2821, %v2819
    %v2890 = vpack.c.b16 %v2822, %v2820
    %v2891 = vpack.c.b16 %v2825, %v2823
    %v2892 = vpack.c.b16 %v2826, %v2824
    %v2893 = vpack.c.b16 %v2829, %v2827
    %v2894 = vpack.c.b16 %v2830, %v2828
    %2959 = vmatprep.subr.bf16.mxu0 %v2832
    %2960 = vmatpush1.bf16.msra.mxu0 %v2831
    %2961 = vmatprep.subr.bf16.mxu0 %v2834
    %2962 = vmatpush1.bf16.msra.mxu0 %v2833
    %2963 = vmatprep.subr.bf16.mxu0 %v2836
    %2964 = vmatpush1.bf16.msra.mxu0 %v2835
    %2965 = vmatprep.subr.bf16.mxu0 %v2838
    %2966 = vmatpush1.bf16.msra.mxu0 %v2837
    %2967 = vmatprep.subr.bf16.mxu0 %v2840
    %2968 = vmatpush1.bf16.msra.mxu0 %v2839
    %2969 = vmatprep.subr.bf16.mxu0 %v2842
    %2970 = vmatpush1.bf16.msra.mxu0 %v2841
    %2971 = vmatprep.subr.bf16.mxu0 %v2844
    %2972 = vmatpush1.bf16.msra.mxu0 %v2843
    %2973 = vmatprep.subr.bf16.mxu0 %v2846
    %2974 = vmatpush1.bf16.msra.mxu0 %v2845
    %2975 = vmatprep.subr.bf16.mxu0 %v2848
    %2976 = vmatpush1.bf16.msra.mxu0 %v2847
    %2977 = vmatprep.subr.bf16.mxu0 %v2850
    %2978 = vmatpush1.bf16.msra.mxu0 %v2849
    %2979 = vmatprep.subr.bf16.mxu0 %v2852
    %2980 = vmatpush1.bf16.msra.mxu0 %v2851
    %2981 = vmatprep.subr.bf16.mxu0 %v2854
    %2982 = vmatpush1.bf16.msra.mxu0 %v2853
    %2983 = vmatprep.subr.bf16.mxu0 %v2856
    %2984 = vmatpush1.bf16.msra.mxu0 %v2855
    %2985 = vmatprep.subr.bf16.mxu0 %v2858
    %2986 = vmatpush1.bf16.msra.mxu0 %v2857
    %2987 = vmatprep.subr.bf16.mxu0 %v2860
    %2988 = vmatpush1.bf16.msra.mxu0 %v2859
    %2989 = vmatprep.subr.bf16.mxu0 %v2862
    %2990 = vmatpush1.bf16.msra.mxu0 %v2861
    %2991 = vmatprep.mubr.bf16.mxu0 %v2532
    %2992 = vmatmul.mubr.bf16.gmra.mrb[0].mxu0 %v2531
    %v2993 = vpop.f32.mrb[0].mxu0
    %v2994 = vadd.f32 %v2632, %v2993
    %v2995 = vpop.f32.mrb[0].mxu0
    %v2996 = vadd.f32 %v2636, %v2995
    %v2997 = vpop.f32.mrb[0].mxu0
    %v2998 = vadd.f32 %v2632, %v2997
    %v2999 = vpop.f32.mrb[0].mxu0
    %v3000 = vadd.f32 %v2636, %v2999
    %3001 = vmatprep.mubr.bf16.mxu0 %v2536
    %3002 = vmatmul.mubr.bf16.gmra.mrb[0].mxu0 %v2535
    %v3003 = vpop.f32.mrb[0].mxu0
    %v3004 = vadd.f32 %v2632, %v3003
    %v3005 = vpop.f32.mrb[0].mxu0
    %v3006 = vadd.f32 %v2636, %v3005
    %v3007 = vpop.f32.mrb[0].mxu0
    %v3008 = vadd.f32 %v2632, %v3007
    %v3009 = vpop.f32.mrb[0].mxu0
    %v3010 = vadd.f32 %v2636, %v3009
    %3011 = vmatprep.mubr.bf16.mxu0 %v2540
    %3012 = vmatmul.mubr.bf16.gmra.mrb[0].mxu0 %v2539
    %v3013 = vpop.f32.mrb[0].mxu0
    %v3014 = vadd.f32 %v2632, %v3013
    %v3015 = vpop.f32.mrb[0].mxu0
    %v3016 = vadd.f32 %v2636, %v3015
    %v3017 = vpop.f32.mrb[0].mxu0
    %v3018 = vadd.f32 %v2632, %v3017
    %v3019 = vpop.f32.mrb[0].mxu0
    %v3020 = vadd.f32 %v2636, %v3019
    %3021 = vmatprep.mubr.bf16.mxu0 %v2544
    %3022 = vmatmul.mubr.bf16.gmra.mrb[0].mxu0 %v2543
    %v3023 = vpop.f32.mrb[0].mxu0
    %v3024 = vadd.f32 %v2632, %v3023
    %v3025 = vpop.f32.mrb[0].mxu0
    %v3026 = vadd.f32 %v2636, %v3025
    %v3027 = vpop.f32.mrb[0].mxu0
    %v3028 = vadd.f32 %v2632, %v3027
    %v3029 = vpop.f32.mrb[0].mxu0
    %v3030 = vadd.f32 %v2636, %v3029
    %3031 = vmatprep.mubr.bf16.mxu0 %v2548
    %3032 = vmatmul.mubr.bf16.gmra.mrb[0].mxu0 %v2547
    %v3033 = vpop.f32.mrb[0].mxu0
    %v3034 = vadd.f32 %v2632, %v3033
    %v3035 = vpop.f32.mrb[0].mxu0
    %v3036 = vadd.f32 %v2636, %v3035
    %v3037 = vpop.f32.mrb[0].mxu0
    %v3038 = vadd.f32 %v2632, %v3037
    %v3039 = vpop.f32.mrb[0].mxu0
    %v3040 = vadd.f32 %v2636, %v3039
    %3041 = vmatprep.mubr.bf16.mxu0 %v2552
    %3042 = vmatmul.mubr.bf16.gmra.mrb[0].mxu0 %v2551
    %v3043 = vpop.f32.mrb[0].mxu0
    %v3044 = vadd.f32 %v2632, %v3043
    %v3045 = vpop.f32.mrb[0].mxu0
    %v3046 = vadd.f32 %v2636, %v3045
    %v3047 = vpop.f32.mrb[0].mxu0
    %v3048 = vadd.f32 %v2632, %v3047
    %v3049 = vpop.f32.mrb[0].mxu0
    %v3050 = vadd.f32 %v2636, %v3049
    %3051 = vmatprep.mubr.bf16.mxu0 %v2556
    %3052 = vmatmul.mubr.bf16.gmra.mrb[0].mxu0 %v2555
    %v3053 = vpop.f32.mrb[0].mxu0
    %v3054 = vadd.f32 %v2632, %v3053
    %v3055 = vpop.f32.mrb[0].mxu0
    %v3056 = vadd.f32 %v2636, %v3055
    %v3057 = vpop.f32.mrb[0].mxu0
    %v3058 = vadd.f32 %v2632, %v3057
    %v3059 = vpop.f32.mrb[0].mxu0
    %v3060 = vadd.f32 %v2636, %v3059
    %3061 = vmatprep.mubr.bf16.mxu0 %v2560
    %3062 = vmatmul.mubr.bf16.gmra.mrb[0].mxu0 %v2559
    %v3063 = vpop.f32.mrb[0].mxu0
    %v3064 = vadd.f32 %v2632, %v3063
    %v3065 = vpop.f32.mrb[0].mxu0
    %v3066 = vadd.f32 %v2636, %v3065
    %v3067 = vpop.f32.mrb[0].mxu0
    %v3068 = vadd.f32 %v2632, %v3067
    %v3069 = vpop.f32.mrb[0].mxu0
    %v3070 = vadd.f32 %v2636, %v3069
    %3071 = vdwg.mxu0
    %3072 = vmatprep.subr.bf16.mxu0 %v2864
    %3073 = vmatpush1.bf16.msra.mxu0 %v2863
    %3074 = vmatprep.subr.bf16.mxu0 %v2866
    %3075 = vmatpush1.bf16.msra.mxu0 %v2865
    %3076 = vmatprep.subr.bf16.mxu0 %v2868
    %3077 = vmatpush1.bf16.msra.mxu0 %v2867
    %3078 = vmatprep.subr.bf16.mxu0 %v2870
    %3079 = vmatpush1.bf16.msra.mxu0 %v2869
    %3080 = vmatprep.subr.bf16.mxu0 %v2872
    %3081 = vmatpush1.bf16.msra.mxu0 %v2871
    %3082 = vmatprep.subr.bf16.mxu0 %v2874
    %3083 = vmatpush1.bf16.msra.mxu0 %v2873
    %3084 = vmatprep.subr.bf16.mxu0 %v2876
    %3085 = vmatpush1.bf16.msra.mxu0 %v2875
    %3086 = vmatprep.subr.bf16.mxu0 %v2878
    %3087 = vmatpush1.bf16.msra.mxu0 %v2877
    %3088 = vmatprep.subr.bf16.mxu0 %v2880
    %3089 = vmatpush1.bf16.msra.mxu0 %v2879
    %3090 = vmatprep.subr.bf16.mxu0 %v2882
    %3091 = vmatpush1.bf16.msra.mxu0 %v2881
    %3092 = vmatprep.subr.bf16.mxu0 %v2884
    %3093 = vmatpush1.bf16.msra.mxu0 %v2883
    %3094 = vmatprep.subr.bf16.mxu0 %v2886
    %3095 = vmatpush1.bf16.msra.mxu0 %v2885
    %3096 = vmatprep.subr.bf16.mxu0 %v2888
    %3097 = vmatpush1.bf16.msra.mxu0 %v2887
    %3098 = vmatprep.subr.bf16.mxu0 %v2890
    %3099 = vmatpush1.bf16.msra.mxu0 %v2889
    %3100 = vmatprep.subr.bf16.mxu0 %v2892
    %3101 = vmatpush1.bf16.msra.mxu0 %v2891
    %3102 = vmatprep.subr.bf16.mxu0 %v2894
    %3103 = vmatpush1.bf16.msra.mxu0 %v2893
    %3104 = vmatprep.mubr.bf16.mxu0 %v2534
    %3105 = vmatmul.mubr.bf16.gmra.mrb[0].mxu0 %v2533
    %v3106 = vpop.f32.mrb[0].mxu0
    %v3107 = vadd.f32 %v2994, %v3106
    %v3108 = vpop.f32.mrb[0].mxu0
    %v3109 = vadd.f32 %v2996, %v3108
    %v3110 = vpop.f32.mrb[0].mxu0
    %v3111 = vadd.f32 %v2998, %v3110
    %v3112 = vpop.f32.mrb[0].mxu0
    %v3113 = vadd.f32 %v3000, %v3112
    %3114 = vmatprep.mubr.bf16.mxu0 %v2538
    %3115 = vmatmul.mubr.bf16.gmra.mrb[0].mxu0 %v2537
    %v3116 = vpop.f32.mrb[0].mxu0
    %v3117 = vadd.f32 %v3004, %v3116
    %v3118 = vpop.f32.mrb[0].mxu0
    %v3119 = vadd.f32 %v3006, %v3118
    %v3120 = vpop.f32.mrb[0].mxu0
    %v3121 = vadd.f32 %v3008, %v3120
    %v3122 = vpop.f32.mrb[0].mxu0
    %v3123 = vadd.f32 %v3010, %v3122
    %3124 = vmatprep.mubr.bf16.mxu0 %v2542
    %3125 = vmatmul.mubr.bf16.gmra.mrb[0].mxu0 %v2541
    %v3126 = vpop.f32.mrb[0].mxu0
    %v3127 = vadd.f32 %v3014, %v3126
    %v3128 = vpop.f32.mrb[0].mxu0
    %v3129 = vadd.f32 %v3016, %v3128
    %v3130 = vpop.f32.mrb[0].mxu0
    %v3131 = vadd.f32 %v3018, %v3130
    %v3132 = vpop.f32.mrb[0].mxu0
    %v3133 = vadd.f32 %v3020, %v3132
    %3134 = vmatprep.mubr.bf16.mxu0 %v2546
    %3135 = vmatmul.mubr.bf16.gmra.mrb[0].mxu0 %v2545
    %v3136 = vpop.f32.mrb[0].mxu0
    %v3137 = vadd.f32 %v3024, %v3136
    %v3138 = vpop.f32.mrb[0].mxu0
    %v3139 = vadd.f32 %v3026, %v3138
    %v3140 = vpop.f32.mrb[0].mxu0
    %v3141 = vadd.f32 %v3028, %v3140
    %v3142 = vpop.f32.mrb[0].mxu0
    %v3143 = vadd.f32 %v3030, %v3142
    %3144 = vmatprep.mubr.bf16.mxu0 %v2550
    %3145 = vmatmul.mubr.bf16.gmra.mrb[0].mxu0 %v2549
    %v3146 = vpop.f32.mrb[0].mxu0
    %v3147 = vadd.f32 %v3034, %v3146
    %v3148 = vpop.f32.mrb[0].mxu0
    %v3149 = vadd.f32 %v3036, %v3148
    %v3150 = vpop.f32.mrb[0].mxu0
    %v3151 = vadd.f32 %v3038, %v3150
    %v3152 = vpop.f32.mrb[0].mxu0
    %v3153 = vadd.f32 %v3040, %v3152
    %3154 = vmatprep.mubr.bf16.mxu0 %v2554
    %3155 = vmatmul.mubr.bf16.gmra.mrb[0].mxu0 %v2553
    %v3156 = vpop.f32.mrb[0].mxu0
    %v3157 = vadd.f32 %v3044, %v3156
    %v3158 = vpop.f32.mrb[0].mxu0
    %v3159 = vadd.f32 %v3046, %v3158
    %v3160 = vpop.f32.mrb[0].mxu0
    %v3161 = vadd.f32 %v3048, %v3160
    %v3162 = vpop.f32.mrb[0].mxu0
    %v3163 = vadd.f32 %v3050, %v3162
    %3164 = vmatprep.mubr.bf16.mxu0 %v2558
    %3165 = vmatmul.mubr.bf16.gmra.mrb[0].mxu0 %v2557
    %v3166 = vpop.f32.mrb[0].mxu0
    %v3167 = vadd.f32 %v3054, %v3166
    %v3168 = vpop.f32.mrb[0].mxu0
    %v3169 = vadd.f32 %v3056, %v3168
    %v3170 = vpop.f32.mrb[0].mxu0
    %v3171 = vadd.f32 %v3058, %v3170
    %v3172 = vpop.f32.mrb[0].mxu0
    %v3173 = vadd.f32 %v3060, %v3172
    %3174 = vmatprep.mubr.bf16.mxu0 %v2562
    %3175 = vmatmul.mubr.bf16.gmra.mrb[0].mxu0 %v2561
    %v3176 = vpop.f32.mrb[0].mxu0
    %v3177 = vadd.f32 %v3064, %v3176
    %v3178 = vpop.f32.mrb[0].mxu0
    %v3179 = vadd.f32 %v3066, %v3178
    %v3180 = vpop.f32.mrb[0].mxu0
    %v3181 = vadd.f32 %v3068, %v3180
    %v3182 = vpop.f32.mrb[0].mxu0
    %v3183 = vadd.f32 %v3070, %v3182
    %3184 = vdwg.mxu0
    %vm3185 = vcmp.gt.f32.partialorder %v3107, 0.0
    %vm3186 = vcmp.gt.f32.partialorder %v3109, 0.0
    %vm3187 = vcmp.gt.f32.partialorder %v3111, 0.0
    %vm3188 = vcmp.gt.f32.partialorder %v3113, 0.0
    %vm3189 = vcmp.gt.f32.partialorder %v3117, 0.0
    %vm3190 = vcmp.gt.f32.partialorder %v3119, 0.0
    %vm3191 = vcmp.gt.f32.partialorder %v3121, 0.0
    %vm3192 = vcmp.gt.f32.partialorder %v3123, 0.0
    %vm3193 = vcmp.gt.f32.partialorder %v3127, 0.0
    %vm3194 = vcmp.gt.f32.partialorder %v3129, 0.0
    %vm3195 = vcmp.gt.f32.partialorder %v3131, 0.0
    %vm3196 = vcmp.gt.f32.partialorder %v3133, 0.0
    %vm3197 = vcmp.gt.f32.partialorder %v3137, 0.0
    %vm3198 = vcmp.gt.f32.partialorder %v3139, 0.0
    %vm3199 = vcmp.gt.f32.partialorder %v3141, 0.0
    %vm3200 = vcmp.gt.f32.partialorder %v3143, 0.0
    %vm3201 = vcmp.gt.f32.partialorder %v3147, 0.0
    %vm3202 = vcmp.gt.f32.partialorder %v3149, 0.0
    %vm3203 = vcmp.gt.f32.partialorder %v3151, 0.0
    %vm3204 = vcmp.gt.f32.partialorder %v3153, 0.0
    %vm3205 = vcmp.gt.f32.partialorder %v3157, 0.0
    %vm3206 = vcmp.gt.f32.partialorder %v3159, 0.0
    %vm3207 = vcmp.gt.f32.partialorder %v3161, 0.0
    %vm3208 = vcmp.gt.f32.partialorder %v3163, 0.0
    %vm3209 = vcmp.gt.f32.partialorder %v3167, 0.0
    %vm3210 = vcmp.gt.f32.partialorder %v3169, 0.0
    %vm3211 = vcmp.gt.f32.partialorder %v3171, 0.0
    %vm3212 = vcmp.gt.f32.partialorder %v3173, 0.0
    %vm3213 = vcmp.gt.f32.partialorder %v3177, 0.0
    %vm3214 = vcmp.gt.f32.partialorder %v3179, 0.0
    %vm3215 = vcmp.gt.f32.partialorder %v3181, 0.0
    %vm3216 = vcmp.gt.f32.partialorder %v3183, 0.0
    %v3217 = vmul.f32 %v3107, 0.2
    %v3218 = vmul.f32 %v3109, 0.2
    %v3219 = vmul.f32 %v3111, 0.2
    %v3220 = vmul.f32 %v3113, 0.2
    %v3221 = vmul.f32 %v3117, 0.2
    %v3222 = vmul.f32 %v3119, 0.2
    %v3223 = vmul.f32 %v3121, 0.2
    %v3224 = vmul.f32 %v3123, 0.2
    %v3225 = vmul.f32 %v3127, 0.2
    %v3226 = vmul.f32 %v3129, 0.2
    %v3227 = vmul.f32 %v3131, 0.2
    %v3228 = vmul.f32 %v3133, 0.2
    %v3229 = vmul.f32 %v3137, 0.2
    %v3230 = vmul.f32 %v3139, 0.2
    %v3231 = vmul.f32 %v3141, 0.2
    %v3232 = vmul.f32 %v3143, 0.2
    %v3233 = vmul.f32 %v3147, 0.2
    %v3234 = vmul.f32 %v3149, 0.2
    %v3235 = vmul.f32 %v3151, 0.2
    %v3236 = vmul.f32 %v3153, 0.2
    %v3237 = vmul.f32 %v3157, 0.2
    %v3238 = vmul.f32 %v3159, 0.2
    %v3239 = vmul.f32 %v3161, 0.2
    %v3240 = vmul.f32 %v3163, 0.2
    %v3241 = vmul.f32 %v3167, 0.2
    %v3242 = vmul.f32 %v3169, 0.2
    %v3243 = vmul.f32 %v3171, 0.2
    %v3244 = vmul.f32 %v3173, 0.2
    %v3245 = vmul.f32 %v3177, 0.2
    %v3246 = vmul.f32 %v3179, 0.2
    %v3247 = vmul.f32 %v3181, 0.2
    %v3248 = vmul.f32 %v3183, 0.2
    %v3249 = vsel %vm3185, %v3107, %v3217
    %v3250 = vsel %vm3186, %v3109, %v3218
    %v3251 = vsel %vm3187, %v3111, %v3219
    %v3252 = vsel %vm3188, %v3113, %v3220
    %v3253 = vsel %vm3189, %v3117, %v3221
    %v3254 = vsel %vm3190, %v3119, %v3222
    %v3255 = vsel %vm3191, %v3121, %v3223
    %v3256 = vsel %vm3192, %v3123, %v3224
    %v3257 = vsel %vm3193, %v3127, %v3225
    %v3258 = vsel %vm3194, %v3129, %v3226
    %v3259 = vsel %vm3195, %v3131, %v3227
    %v3260 = vsel %vm3196, %v3133, %v3228
    %v3261 = vsel %vm3197, %v3137, %v3229
    %v3262 = vsel %vm3198, %v3139, %v3230
    %v3263 = vsel %vm3199, %v3141, %v3231
    %v3264 = vsel %vm3200, %v3143, %v3232
    %v3265 = vsel %vm3201, %v3147, %v3233
    %v3266 = vsel %vm3202, %v3149, %v3234
    %v3267 = vsel %vm3203, %v3151, %v3235
    %v3268 = vsel %vm3204, %v3153, %v3236
    %v3269 = vsel %vm3205, %v3157, %v3237
    %v3270 = vsel %vm3206, %v3159, %v3238
    %v3271 = vsel %vm3207, %v3161, %v3239
    %v3272 = vsel %vm3208, %v3163, %v3240
    %v3273 = vsel %vm3209, %v3167, %v3241
    %v3274 = vsel %vm3210, %v3169, %v3242
    %v3275 = vsel %vm3211, %v3171, %v3243
    %v3276 = vsel %vm3212, %v3173, %v3244
    %v3277 = vsel %vm3213, %v3177, %v3245
    %v3278 = vsel %vm3214, %v3179, %v3246
    %v3279 = vsel %vm3215, %v3181, %v3247
    %v3280 = vsel %vm3216, %v3183, %v3248
    %v3281 = vld [vmem:[%s5] sm:$0xff]
    %v3282 = vpack.c.bf16 %v3251, %v3249
    %v3283 = vpack.c.bf16 %v3252, %v3250
    %v3284 = vpack.c.bf16 %v3255, %v3253
    %v3285 = vpack.c.bf16 %v3256, %v3254
    %v3286 = vpack.c.bf16 %v3259, %v3257
    %v3287 = vpack.c.bf16 %v3260, %v3258
    %v3288 = vpack.c.bf16 %v3263, %v3261
    %v3289 = vpack.c.bf16 %v3264, %v3262
    %v3290 = vpack.c.bf16 %v3267, %v3265
    %v3291 = vpack.c.bf16 %v3268, %v3266
    %v3292 = vpack.c.bf16 %v3271, %v3269
    %v3293 = vpack.c.bf16 %v3272, %v3270
    %v3294 = vpack.c.bf16 %v3275, %v3273
    %v3295 = vpack.c.bf16 %v3276, %v3274
    %v3296 = vpack.c.bf16 %v3279, %v3277
    %v3297 = vpack.c.bf16 %v3280, %v3278
    %v3299 = vunpack.c.l.b16 %v3281
    %v3300 = vunpack.c.h.b16 %v3281
    %v3301 = vpack.c.b16 %v3299, %v3299
    %v3302 = vpack.c.b16 %v3300, %v3300
    %3305 = vmatprep.subr.bf16.mxu0 %v3283
    %3306 = vmatpush1.bf16.xpose.msra.mxu0 %v3282
    %3307 = vmatprep.subr.bf16.mxu0 %v3285
    %3308 = vmatpush1.bf16.xpose.msra.mxu0 %v3284
    %3309 = vmatprep.subr.bf16.mxu0 %v3287
    %3310 = vmatpush1.bf16.xpose.msra.mxu0 %v3286
    %3311 = vmatprep.subr.bf16.mxu0 %v3289
    %3312 = vmatpush1.bf16.xpose.msra.mxu0 %v3288
    %3313 = vmatprep.subr.bf16.mxu0 %v3291
    %3314 = vmatpush1.bf16.xpose.msra.mxu0 %v3290
    %3315 = vmatprep.subr.bf16.mxu0 %v3293
    %3316 = vmatpush1.bf16.xpose.msra.mxu0 %v3292
    %3317 = vmatprep.subr.bf16.mxu0 %v3295
    %3318 = vmatpush1.bf16.xpose.msra.mxu0 %v3294
    %3319 = vmatprep.subr.bf16.mxu0 %v3297
    %3320 = vmatpush1.bf16.xpose.msra.mxu0 %v3296
    %3321 = vmatprep.subr.bf16.mxu0 0
    %3322 = vmatpush1.bf16.xpose.msra.mxu0 0
    %3323 = vmatprep.subr.bf16.mxu0 0
    %3324 = vmatpush1.bf16.xpose.msra.mxu0 0
    %3325 = vmatprep.subr.bf16.mxu0 0
    %3326 = vmatpush1.bf16.xpose.msra.mxu0 0
    %3327 = vmatprep.subr.bf16.mxu0 0
    %3328 = vmatpush1.bf16.xpose.msra.mxu0 0
    %3329 = vmatprep.subr.bf16.mxu0 0
    %3330 = vmatpush1.bf16.xpose.msra.mxu0 0
    %3331 = vmatprep.subr.bf16.mxu0 0
    %3332 = vmatpush1.bf16.xpose.msra.mxu0 0
    %3333 = vmatprep.subr.bf16.mxu0 0
    %3334 = vmatpush1.bf16.xpose.msra.mxu0 0
    %3335 = vmatprep.subr.bf16.mxu0 0
    %3336 = vmatpush1.bf16.xpose.msra.mxu0 0
    %3337 = vmatprep.mubr.bf16.mxu0 %v3302
    %3338 = vmatmul.mubr.bf16.gmra.mrb[0].mxu0 %v3301
    %v3339 = vpop.f32.mrb[0].mxu0
    %v3340 = vadd.f32 0.0, %v3339
    %v3341 = vpop.f32.mrb[0].mxu0
    %v3342 = vpop.f32.mrb[0].mxu0
    %v3343 = vpop.f32.mrb[0].mxu0
    %3344 = vdwg.mxu0
    %v3345 = vld [vmem:[#allocation2] sm:$0x1]
    %3347 = vset.pattern.permute.xlu0 0
    %3348 = vperm.xlu0 %3347, %v3345
    %v3349 = vpop.permute.xlu0 %3348
    %v3351 = vlaneseq
    %v3352 = vshrl.u32 %v3351, 7
    %v3353 = vsub.s32 0, %v3352
    %v3354 = vrot.slane %v3349, %v3353
    %v3355 = vadd.f32 %v3340, %v3354
    %v3356 = vmul.f32 %v3355, 0.5
    %v3357 = vtanh.pop %v3356
    %v3358 = vmul.f32 %v3357, 0.5
    %v3359 = vadd.f32 %v3358, 0.5
    %3360 = vst [vmem:[#allocation6] sm:$0x1] %v3359
    // Predicated region
    $region34: #{discriminator_forward.1} parent=1 // pred_check
      _
    $region35: #{discriminator_forward.1} parent=1 // pred_check_branch
      %3362 = sbr.rel (0) target = $region37
    $region36: #{discriminator_forward.1} parent=1 // pred_region
      %s3364 = ssub.s32 16, 16
      %3365 = vsyncadd [#allocation5], %s3364
      %s3367 = sshll.u32 [#allocation6], 4
      %s3368 = int_to_ptr.vmem [resolvable:$true] %s3367
      %3370 = dma.vmem_to_hbm [thread:$0]  %s3368, 16, %s7, [#allocation5]
    $region37: #{discriminator_forward.1} parent=1 // pred_fallthru
      _
    // Predicated region
    $region38: #{discriminator_forward.1} parent=1 // pred_check
      _
    $region39: #{discriminator_forward.1} parent=1 // pred_check_branch
      %3372 = sbr.rel (0) target = $region41
    $region40: #{discriminator_forward.1} parent=1 // pred_region
      %3373 = dma.done [#allocation5], 16
    $region41: #{discriminator_forward.1} parent=1 // pred_fallthru
      _
    %3374 = vsyncpa [#allocation4], 1
    %3375 = vsyncpa [#allocation5], 1

</llo_original>
